<compile_context>
chip_gen: v6e
topology: v6e:2x2x1
jax: 0.10.0
libtpu: 0.0.40
codegen_flags: <defaults>
</compile_context>

<pallas_src>
import functools
import math

import jax
import jax.numpy as jnp
from jax.experimental import pallas as pl
from jax.experimental.pallas import tpu as pltpu


VMEM_LIMIT = 64 * 1024 * 1024  # <= physical VMEM on v5e/v6e/v7x


def _round_up(x, m):
    return (x + m - 1) // m * m


# ----------------------------------------------------------------------------
# Kernel 1: row-tiled matmul + bias (+ReLU) — head / tail 1x1 convs
# (a 1x1 conv is a per-pixel matmul over channels).  bf16 operands, f32 acc.
# ----------------------------------------------------------------------------
def _matmul_bias_kernel(x_ref, w_ref, b_ref, o_ref, *, relu):
    acc = jnp.dot(x_ref[...].astype(jnp.bfloat16), w_ref[...],
                  preferred_element_type=jnp.float32) + b_ref[...]
    if relu:
        acc = jnp.maximum(acc, 0.0)
    o_ref[...] = acc.astype(o_ref.dtype)


def matmul_bias(x_rows, w, b, *, relu=False, tp=512):
    """(P, Cin) @ (Cin, Cout) + b, row-tiled with padding (no whole-array fallback)."""
    P, cin = x_rows.shape
    cout = w.shape[1]
    if P <= tp:
        tp = _round_up(P, 8)
    P_pad = _round_up(P, tp)
    x_in = jnp.pad(x_rows, ((0, P_pad - P), (0, 0))) if P_pad != P else x_rows
    y = pl.pallas_call(
        functools.partial(_matmul_bias_kernel, relu=relu),
        out_shape=jax.ShapeDtypeStruct((P_pad, cout), x_rows.dtype),
        grid_spec=pltpu.PrefetchScalarGridSpec(
            num_scalar_prefetch=0,
            grid=(P_pad // tp,),
            in_specs=[
                pl.BlockSpec((tp, cin), lambda i: (i, 0)),
                pl.BlockSpec((cin, cout), lambda i: (0, 0)),
                pl.BlockSpec((1, cout), lambda i: (0, 0)),
            ],
            out_specs=pl.BlockSpec((tp, cout), lambda i: (i, 0)),
        ),
        compiler_params=pltpu.CompilerParams(
            dimension_semantics=("parallel",),
            vmem_limit_bytes=VMEM_LIMIT),
    )(x_in, w, b)
    return y[:P] if P_pad != P else y


def conv1x1_rows(x_nsc, p, *, relu=False):
    N, S, C = x_nsc.shape
    y = matmul_bias(x_nsc.reshape(N * S, C), p["w"], p["b"], relu=relu)
    return y.reshape(N, S, -1)


# ----------------------------------------------------------------------------
# Kernel 2: one fully fused MultiHeadDenseBlock (all `depth` dense layers plus
# the block-final 1x1 conv).  Per dense layer:
#   fused proj  : [a_pre | q | k | v] = cur @ Wproj + bproj      (one matmul)
#   conv branch : a = relu(a_pre); conv_out = relu(tap_slab @ W3 + b3)
#   attn branch : per-head softmax attention; concat(heads) @ Wo + bo
#   dense concat: cur = [cur | conv_out + attn_out]   (stays in VMEM)
# Block output  : cur @ Wfinal + bfinal  -> (S, mid), single lane-dense store.
# ----------------------------------------------------------------------------
def _dense_block_kernel(*refs, W, heads, depth):
    x_ref, o_ref = refs[0], refs[-1]
    wr = refs[1:-1]                      # 6*depth layer refs + 2 final refs

    S = x_ref.shape[1]

    # x-coordinate of every flattened row (horizontal border mask for 3x3 taps)
    x_coord = jax.lax.broadcasted_iota(jnp.int32, (S, 1), 0) % W

    cur = x_ref[0].astype(jnp.bfloat16)                     # growing slab, VMEM-resident

    for l in range(depth):
        wproj, bproj, w3, b3, wo, bo = wr[6 * l: 6 * l + 6]
        cin = wproj.shape[0]
        growth = wo.shape[1]
        dh = cin // heads

        # ------- fused 1x1 projections (conv pre-act + q + k + v) -------
        proj = jnp.dot(cur, wproj[...],
                       preferred_element_type=jnp.float32) + bproj[...]   # (S, 4*cin) f32
        a = jnp.maximum(proj[:, :cin], 0.0)                                # (S, cin)
        qkv = proj[:, cin:]                                                # (S, 3*cin)

        # ------- conv branch: 3x3 'same' conv as ONE (S,9cin)@(9cin,growth) -------
        # Row r = y*W + x; tap (dy,dx) reads row r + (dy-1)*W + (dx-1); zero
        # when the source pixel is outside the image (row pad + x-border mask).
        pad = jnp.zeros((W + 1, cin), jnp.float32)
        a_ext = jnp.concatenate([pad, a, pad], axis=0)                     # (S+2W+2, cin)
        taps = []
        for t in range(9):
            dy, dx = t // 3, t % 3
            start = (W + 1) + (dy - 1) * W + (dx - 1)
            tap = a_ext[start:start + S, :]
            if dx != 1:
                xo = x_coord + (dx - 1)
                tap = jnp.where((xo >= 0) & (xo < W), tap, 0.0)
            taps.append(tap)
        tap_slab = jnp.concatenate(taps, axis=-1).astype(jnp.bfloat16)     # (S, 9*cin)
        conv_out = jnp.maximum(
            jnp.dot(tap_slab, w3[...], preferred_element_type=jnp.float32)
            + b3[...], 0.0)                                                # (S, growth)

        # ------- attention branch -------
        scale = 1.0 / math.sqrt(dh)
        heads_out = []
        for hd in range(heads):
            qh = qkv[:, hd * dh:(hd + 1) * dh].astype(jnp.bfloat16)
            kh = qkv[:, cin + hd * dh:cin + (hd + 1) * dh].astype(jnp.bfloat16)
            vh = qkv[:, 2 * cin + hd * dh:2 * cin + (hd + 1) * dh].astype(jnp.bfloat16)
            s = jax.lax.dot_general(qh, kh, (((1,), (1,)), ((), ())),
                                    preferred_element_type=jnp.float32) * scale
            s = s - jnp.max(s, axis=-1, keepdims=True)
            p = jnp.exp(s)
            p = p * pl.reciprocal(jnp.sum(p, axis=-1, keepdims=True), approx=True)
            heads_out.append(jnp.dot(p.astype(jnp.bfloat16), vh,
                                     preferred_element_type=jnp.float32))
        attn_cat = jnp.concatenate(heads_out, axis=-1).astype(jnp.bfloat16)  # (S, cin)
        attn_out = jnp.dot(attn_cat, wo[...],
                           preferred_element_type=jnp.float32) + bo[...]     # (S, growth)

        # ------- dense concat stays in VMEM as a value (no HBM rewrite) -------
        new = (conv_out + attn_out).astype(jnp.bfloat16)
        cur = jnp.concatenate([cur, new], axis=-1)                           # (S, cin+growth)

    # ------- block-final 1x1 conv back to mid_channels -------
    wf, bf_ = wr[-2], wr[-1]
    out = jnp.dot(cur, wf[...], preferred_element_type=jnp.float32) + bf_[...]
    o_ref[0] = out.astype(o_ref.dtype)


def dense_block(h, blk, *, W, heads):
    """h: (N, S, mid) -> (N, S, mid); whole dense block in one pallas_call."""
    N, S, mid = h.shape
    depth = len(blk["layers"])

    inputs = [h]
    in_specs = [pl.BlockSpec((1, S, mid), lambda n: (n, 0, 0))]

    def add_w(arr):
        inputs.append(arr)
        r, c = arr.shape
        in_specs.append(pl.BlockSpec((r, c), lambda n: (0, 0)))

    for lp in blk["layers"]:
        add_w(lp["proj"]["w"]); add_w(lp["proj"]["b"])
        add_w(lp["c3"]["w"]);   add_w(lp["c3"]["b"])
        add_w(lp["o"]["w"]);    add_w(lp["o"]["b"])
    add_w(blk["final"]["w"]); add_w(blk["final"]["b"])

    return pl.pallas_call(
        functools.partial(_dense_block_kernel, W=W, heads=heads, depth=depth),
        out_shape=jax.ShapeDtypeStruct((N, S, mid), h.dtype),
        grid_spec=pltpu.PrefetchScalarGridSpec(
            num_scalar_prefetch=0,
            grid=(N,),
            in_specs=in_specs,
            out_specs=pl.BlockSpec((1, S, mid), lambda n: (n, 0, 0)),
        ),
        compiler_params=pltpu.CompilerParams(
            dimension_semantics=("parallel",),
            vmem_limit_bytes=VMEM_LIMIT),
    )(*inputs)


# ----------------------------------------------------------------------------
# Parameters (deterministic init, PyTorch-Conv2d-like uniform bounds).
# Weights stored bf16 (MXU-native), biases f32.
# ----------------------------------------------------------------------------
def _init_linear(key, fan_in, fan_out, zero=False):
    if zero:
        return {"w": jnp.zeros((fan_in, fan_out), jnp.bfloat16),
                "b": jnp.zeros((1, fan_out), jnp.float32)}
    kw, kb = jax.random.split(key)
    bound = 1.0 / math.sqrt(fan_in)
    w = jax.random.uniform(kw, (fan_in, fan_out), jnp.float32, -bound, bound)
    b = jax.random.uniform(kb, (1, fan_out), jnp.float32, -bound, bound)
    return {"w": w.astype(jnp.bfloat16), "b": b}


def init_dense_net_multihead(key, *, in_channels, out_channels, num_blocks,
                             mid_channels, depth, growth, heads, zero_init=False):
    n_keys = 2 + num_blocks * (3 * depth + 1)
    keys = iter(jax.random.split(key, n_keys))
    params = {"head": _init_linear(next(keys), in_channels, mid_channels),
              "blocks": []}
    for _ in range(num_blocks):
        layers = []
        cin = mid_channels
        for _ in range(depth):
            assert cin % heads == 0, "channels must be divisible by heads"
            layers.append({
                # fused [1x1 conv | q | k | v] projection: (cin, 4*cin)
                "proj": _init_linear(next(keys), cin, 4 * cin),
                # 3x3 conv flattened as 9 taps: (9*cin, growth)
                "c3": _init_linear(next(keys), 9 * cin, growth),
                # attention out-projection: (cin, growth)
                "o": _init_linear(next(keys), cin, growth),
            })
            cin += growth
        params["blocks"].append({
            "layers": layers,
            "final": _init_linear(next(keys), cin, mid_channels),
        })
    params["tail"] = _init_linear(next(keys), mid_channels, out_channels,
                                  zero=zero_init)
    return params


# ----------------------------------------------------------------------------
# Forward (eval mode: dropout = identity, no gradient checkpointing)
# ----------------------------------------------------------------------------
def dense_net_multihead_forward(params, x_nchw, *, heads):
    N, _, H, W = x_nchw.shape
    S = H * W
    h = jnp.transpose(x_nchw, (0, 2, 3, 1)).reshape(N, S, -1)   # NCHW -> (N, S, C)
    h = conv1x1_rows(h, params["head"])                          # in -> mid

    for blk in params["blocks"]:
        h = dense_block(h, blk, W=W, heads=heads)                # whole block fused

    y = conv1x1_rows(h, params["tail"])                          # mid -> out
    return jnp.transpose(y.reshape(N, H, W, -1), (0, 3, 1, 2))   # -> NCHW


# ----------------------------------------------------------------------------
if __name__ == "__main__":
    cfg = dict(in_channels=4, out_channels=8, num_blocks=2, mid_channels=16,
               depth=2, growth=4, heads=4, zero_init=False)
    N, H, W = 2, 8, 8

    key = jax.random.PRNGKey(0)
    kx, kp = jax.random.split(key)
    x = jax.random.normal(kx, (N, cfg["in_channels"], H, W), jnp.float32)
    params = init_dense_net_multihead(kp, **cfg)

    fwd = jax.jit(functools.partial(dense_net_multihead_forward, heads=cfg["heads"]))
    y = fwd(params, x)
    y = jax.block_until_ready(y)

    assert y.shape == (N, cfg["out_channels"], H, W), y.shape
    assert bool(jnp.isfinite(y).all())
    print("KERNEL_OK")
</pallas_src>

<mosaic_0001>
module attributes {stable_mosaic.version = 11 : i64} {
  func.func @_matmul_bias_kernel(%arg0: i32, %arg1: memref<128x4xf32, #tpu.memory_space<vmem>>, %arg2: memref<4x16xbf16, #tpu.memory_space<vmem>>, %arg3: memref<1x16xf32, #tpu.memory_space<vmem>>, %arg4: memref<128x16xf32, #tpu.memory_space<vmem>>) attributes {dimension_semantics = [#tpu.dimension_semantics<parallel>], iteration_bounds = array<i64: 1>, scalar_prefetch = 0 : i64, scratch_operands = 0 : i64, tpu.core_type = #tpu.core_type<tc>, window_params = [{transform_indices = @transform_0, window_bounds = array<i64: 128, 4>}, {pipeline_mode = #tpu.pipeline_mode<synchronous>, transform_indices = @transform_1, window_bounds = array<i64: 4, 16>}, {pipeline_mode = #tpu.pipeline_mode<synchronous>, transform_indices = @transform_2, window_bounds = array<i64: 1, 16>}, {transform_indices = @transform_3, window_bounds = array<i64: 128, 16>}]} {
    %c0 = arith.constant 0 : index
    %c0_0 = arith.constant 0 : index
    %0 = vector.load %arg1[%c0, %c0_0] : memref<128x4xf32, #tpu.memory_space<vmem>>, vector<128x4xf32>
    %1 = arith.truncf %0 : vector<128x4xf32> to vector<128x4xbf16>
    %c0_1 = arith.constant 0 : index
    %c0_2 = arith.constant 0 : index
    %2 = vector.load %arg2[%c0_1, %c0_2] : memref<4x16xbf16, #tpu.memory_space<vmem>>, vector<4x16xbf16>
    %cst = arith.constant dense<0.000000e+00> : vector<128x16xf32>
    %3 = tpu.matmul %1, %2, %cst {dimension_numbers = #tpu.dot_dimension_numbers<[1], [0], [0], [1], [0, 0, 1, 1], [], []>} : vector<128x4xbf16>, vector<4x16xbf16>, vector<128x16xf32> -> vector<128x16xf32>
    %c0_3 = arith.constant 0 : index
    %c0_4 = arith.constant 0 : index
    %4 = vector.load %arg3[%c0_3, %c0_4] : memref<1x16xf32, #tpu.memory_space<vmem>>, vector<1x16xf32>
    %5 = vector.broadcast %4 : vector<1x16xf32> to vector<128x16xf32>
    %6 = arith.addf %3, %5 : vector<128x16xf32>
    %c0_5 = arith.constant 0 : index
    %c0_6 = arith.constant 0 : index
    %7 = vector.load %arg4[%c0_5, %c0_6] : memref<128x16xf32, #tpu.memory_space<vmem>>, vector<128x16xf32>
    tpu.vector_store %arg4[%c0_5, %c0_6], %6 {strides = array<i32>} : memref<128x16xf32, #tpu.memory_space<vmem>>, vector<128x16xf32>,
    return
  }
  func.func @transform_0(%arg0: i32) -> (i32, i32) {
    %c0_i32 = arith.constant 0 : i32
    %c0_i32_0 = arith.constant 0 : i32
    return %arg0, %c0_i32 : i32, i32
  }
  func.func @transform_1(%arg0: i32) -> (i32, i32) {
    %c0_i32 = arith.constant 0 : i32
    %c0_i32_0 = arith.constant 0 : i32
    %c0_i32_1 = arith.constant 0 : i32
    return %c0_i32, %c0_i32_0 : i32, i32
  }
  func.func @transform_2(%arg0: i32) -> (i32, i32) {
    %c0_i32 = arith.constant 0 : i32
    %c0_i32_0 = arith.constant 0 : i32
    %c0_i32_1 = arith.constant 0 : i32
    return %c0_i32, %c0_i32_0 : i32, i32
  }
  func.func @transform_3(%arg0: i32) -> (i32, i32) {
    %c0_i32 = arith.constant 0 : i32
    %c0_i32_0 = arith.constant 0 : i32
    return %arg0, %c0_i32 : i32, i32
  }
}

module attributes {stable_mosaic.version = 11 : i64} {
  func.func @_matmul_bias_kernel(%arg0: i32, %arg1: memref<128x16xf32, #tpu.memory_space<vmem>>, %arg2: memref<16x8xbf16, #tpu.memory_space<vmem>>, %arg3: memref<1x8xf32, #tpu.memory_space<vmem>>, %arg4: memref<128x8xf32, #tpu.memory_space<vmem>>) attributes {dimension_semantics = [#tpu.dimension_semantics<parallel>], iteration_bounds = array<i64: 1>, scalar_prefetch = 0 : i64, scratch_operands = 0 : i64, tpu.core_type = #tpu.core_type<tc>, window_params = [{transform_indices = @transform_0, window_bounds = array<i64: 128, 16>}, {pipeline_mode = #tpu.pipeline_mode<synchronous>, transform_indices = @transform_1, window_bounds = array<i64: 16, 8>}, {pipeline_mode = #tpu.pipeline_mode<synchronous>, transform_indices = @transform_2, window_bounds = array<i64: 1, 8>}, {transform_indices = @transform_3, window_bounds = array<i64: 128, 8>}]} {
    %c0 = arith.constant 0 : index
    %c0_0 = arith.constant 0 : index
    %0 = vector.load %arg1[%c0, %c0_0] : memref<128x16xf32, #tpu.memory_space<vmem>>, vector<128x16xf32>
    %1 = arith.truncf %0 : vector<128x16xf32> to vector<128x16xbf16>
    %c0_1 = arith.constant 0 : index
    %c0_2 = arith.constant 0 : index
    %2 = vector.load %arg2[%c0_1, %c0_2] : memref<16x8xbf16, #tpu.memory_space<vmem>>, vector<16x8xbf16>
    %cst = arith.constant dense<0.000000e+00> : vector<128x8xf32>
    %3 = tpu.matmul %1, %2, %cst {dimension_numbers = #tpu.dot_dimension_numbers<[1], [0], [0], [1], [0, 0, 1, 1], [], []>} : vector<128x16xbf16>, vector<16x8xbf16>, vector<128x8xf32> -> vector<128x8xf32>
    %c0_3 = arith.constant 0 : index
    %c0_4 = arith.constant 0 : index
    %4 = vector.load %arg3[%c0_3, %c0_4] : memref<1x8xf32, #tpu.memory_space<vmem>>, vector<1x8xf32>
    %5 = vector.broadcast %4 : vector<1x8xf32> to vector<128x8xf32>
    %6 = arith.addf %3, %5 : vector<128x8xf32>
    %c0_5 = arith.constant 0 : index
    %c0_6 = arith.constant 0 : index
    %7 = vector.load %arg4[%c0_5, %c0_6] : memref<128x8xf32, #tpu.memory_space<vmem>>, vector<128x8xf32>
    tpu.vector_store %arg4[%c0_5, %c0_6], %6 {strides = array<i32>} : memref<128x8xf32, #tpu.memory_space<vmem>>, vector<128x8xf32>,
    return
  }
  func.func @transform_0(%arg0: i32) -> (i32, i32) {
    %c0_i32 = arith.constant 0 : i32
    %c0_i32_0 = arith.constant 0 : i32
    return %arg0, %c0_i32 : i32, i32
  }
  func.func @transform_1(%arg0: i32) -> (i32, i32) {
    %c0_i32 = arith.constant 0 : i32
    %c0_i32_0 = arith.constant 0 : i32
    %c0_i32_1 = arith.constant 0 : i32
    return %c0_i32, %c0_i32_0 : i32, i32
  }
  func.func @transform_2(%arg0: i32) -> (i32, i32) {
    %c0_i32 = arith.constant 0 : i32
    %c0_i32_0 = arith.constant 0 : i32
    %c0_i32_1 = arith.constant 0 : i32
    return %c0_i32, %c0_i32_0 : i32, i32
  }
  func.func @transform_3(%arg0: i32) -> (i32, i32) {
    %c0_i32 = arith.constant 0 : i32
    %c0_i32_0 = arith.constant 0 : i32
    return %arg0, %c0_i32 : i32, i32
  }
}

module attributes {stable_mosaic.version = 11 : i64} {
  func.func @_dense_block_kernel(%arg0: i32, %arg1: memref<1x64x16xf32, #tpu.memory_space<vmem>>, %arg2: memref<16x64xbf16, #tpu.memory_space<vmem>>, %arg3: memref<1x64xf32, #tpu.memory_space<vmem>>, %arg4: memref<144x4xbf16, #tpu.memory_space<vmem>>, %arg5: memref<1x4xf32, #tpu.memory_space<vmem>>, %arg6: memref<16x4xbf16, #tpu.memory_space<vmem>>, %arg7: memref<1x4xf32, #tpu.memory_space<vmem>>, %arg8: memref<20x80xbf16, #tpu.memory_space<vmem>>, %arg9: memref<1x80xf32, #tpu.memory_space<vmem>>, %arg10: memref<180x4xbf16, #tpu.memory_space<vmem>>, %arg11: memref<1x4xf32, #tpu.memory_space<vmem>>, %arg12: memref<20x4xbf16, #tpu.memory_space<vmem>>, %arg13: memref<1x4xf32, #tpu.memory_space<vmem>>, %arg14: memref<24x16xbf16, #tpu.memory_space<vmem>>, %arg15: memref<1x16xf32, #tpu.memory_space<vmem>>, %arg16: memref<1x64x16xf32, #tpu.memory_space<vmem>>) attributes {dimension_semantics = [#tpu.dimension_semantics<parallel>], iteration_bounds = array<i64: 2>, scalar_prefetch = 0 : i64, scratch_operands = 0 : i64, tpu.core_type = #tpu.core_type<tc>, window_params = [{transform_indices = @transform_0, window_bounds = array<i64: 1, 64, 16>}, {pipeline_mode = #tpu.pipeline_mode<synchronous>, transform_indices = @transform_1, window_bounds = array<i64: 16, 64>}, {pipeline_mode = #tpu.pipeline_mode<synchronous>, transform_indices = @transform_2, window_bounds = array<i64: 1, 64>}, {pipeline_mode = #tpu.pipeline_mode<synchronous>, transform_indices = @transform_3, window_bounds = array<i64: 144, 4>}, {pipeline_mode = #tpu.pipeline_mode<synchronous>, transform_indices = @transform_4, window_bounds = array<i64: 1, 4>}, {pipeline_mode = #tpu.pipeline_mode<synchronous>, transform_indices = @transform_5, window_bounds = array<i64: 16, 4>}, {pipeline_mode = #tpu.pipeline_mode<synchronous>, transform_indices = @transform_6, window_bounds = array<i64: 1, 4>}, {pipeline_mode = #tpu.pipeline_mode<synchronous>, transform_indices = @transform_7, window_bounds = array<i64: 20, 80>}, {pipeline_mode = #tpu.pipeline_mode<synchronous>, transform_indices = @transform_8, window_bounds = array<i64: 1, 80>}, {pipeline_mode = #tpu.pipeline_mode<synchronous>, transform_indices = @transform_9, window_bounds = array<i64: 180, 4>}, {pipeline_mode = #tpu.pipeline_mode<synchronous>, transform_indices = @transform_10, window_bounds = array<i64: 1, 4>}, {pipeline_mode = #tpu.pipeline_mode<synchronous>, transform_indices = @transform_11, window_bounds = array<i64: 20, 4>}, {pipeline_mode = #tpu.pipeline_mode<synchronous>, transform_indices = @transform_12, window_bounds = array<i64: 1, 4>}, {pipeline_mode = #tpu.pipeline_mode<synchronous>, transform_indices = @transform_13, window_bounds = array<i64: 24, 16>}, {pipeline_mode = #tpu.pipeline_mode<synchronous>, transform_indices = @transform_14, window_bounds = array<i64: 1, 16>}, {transform_indices = @transform_15, window_bounds = array<i64: 1, 64, 16>}]} {
    %0 = tpu.iota {dimensions = array<i32: 0>} : vector<64x1xi32>
    %c8_i32 = arith.constant 8 : i32
    %c0_i32 = arith.constant 0 : i32
    %1 = arith.cmpi eq, %c8_i32, %c0_i32 : i32
    %c1_i32 = arith.constant 1 : i32
    %2 = arith.select %1, %c1_i32, %c8_i32 : i32
    %3 = vector.broadcast %2 : i32 to vector<64x1xi32>
    %4 = arith.remsi %0, %3 : vector<64x1xi32>
    %c0_i32_0 = arith.constant 0 : i32
    %5 = vector.broadcast %c0_i32_0 : i32 to vector<64x1xi32>
    %6 = arith.cmpi ne, %4, %5 : vector<64x1xi32>
    %c0_i32_1 = arith.constant 0 : i32
    %7 = vector.broadcast %c0_i32_1 : i32 to vector<64x1xi32>
    %8 = arith.cmpi slt, %4, %7 : vector<64x1xi32>
    %c0_i32_2 = arith.constant 0 : i32
    %9 = arith.cmpi slt, %2, %c0_i32_2 : i32
    %10 = vector.broadcast %9 : i1 to vector<64x1xi1>
    %11 = vector.broadcast %10 : vector<64x1xi1> to vector<64x1xi1>
    %12 = arith.xori %8, %11 : vector<64x1xi1>
    %13 = arith.andi %12, %6 : vector<64x1xi1>
    %14 = vector.broadcast %2 : i32 to vector<64x1xi32>
    %15 = arith.addi %4, %14 : vector<64x1xi32>
    %16 = arith.select %13, %15, %4 : vector<64x1xi1>, vector<64x1xi32>
    %c0 = arith.constant 0 : index
    %c0_3 = arith.constant 0 : index
    %c0_4 = arith.constant 0 : index
    %17 = vector.load %arg1[%c0, %c0_3, %c0_4] : memref<1x64x16xf32, #tpu.memory_space<vmem>>, vector<1x64x16xf32>
    %18 = vector.shape_cast %17 : vector<1x64x16xf32> to vector<64x16xf32>
    %19 = arith.truncf %18 : vector<64x16xf32> to vector<64x16xbf16>
    %c0_5 = arith.constant 0 : index
    %c0_6 = arith.constant 0 : index
    %20 = vector.load %arg2[%c0_5, %c0_6] : memref<16x64xbf16, #tpu.memory_space<vmem>>, vector<16x64xbf16>
    %cst = arith.constant dense<0.000000e+00> : vector<64x64xf32>
    %21 = tpu.matmul %19, %20, %cst {dimension_numbers = #tpu.dot_dimension_numbers<[1], [0], [0], [1], [0, 0, 1, 1], [], []>} : vector<64x16xbf16>, vector<16x64xbf16>, vector<64x64xf32> -> vector<64x64xf32>
    %c0_7 = arith.constant 0 : index
    %c0_8 = arith.constant 0 : index
    %22 = vector.load %arg3[%c0_7, %c0_8] : memref<1x64xf32, #tpu.memory_space<vmem>>, vector<1x64xf32>
    %23 = vector.broadcast %22 : vector<1x64xf32> to vector<64x64xf32>
    %24 = arith.addf %21, %23 : vector<64x64xf32>
    %25 = vector.extract_strided_slice %24 {offsets = [0, 0], sizes = [64, 16], strides = [1, 1]} : vector<64x64xf32> to vector<64x16xf32>
    %cst_9 = arith.constant 0.000000e+00 : f32
    %26 = vector.broadcast %cst_9 : f32 to vector<64x16xf32>
    %27 = arith.maximumf %25, %26 : vector<64x16xf32>
    %28 = vector.extract_strided_slice %24 {offsets = [0, 16], sizes = [64, 48], strides = [1, 1]} : vector<64x64xf32> to vector<64x48xf32>
    %cst_10 = arith.constant 0.000000e+00 : f32
    %29 = vector.broadcast %cst_10 : f32 to vector<9x16xf32>
    %30 = tpu.concatenate %29, %27, %29 in 0 : vector<9x16xf32>, vector<64x16xf32>, vector<9x16xf32> -> vector<82x16xf32>
    %31 = vector.extract_strided_slice %30 {offsets = [0, 0], sizes = [64, 16], strides = [1, 1]} : vector<82x16xf32> to vector<64x16xf32>
    %c-1_i32 = arith.constant -1 : i32
    %32 = vector.broadcast %c-1_i32 : i32 to vector<64x1xi32>
    %33 = arith.addi %16, %32 : vector<64x1xi32>
    %c0_i32_11 = arith.constant 0 : i32
    %34 = vector.broadcast %c0_i32_11 : i32 to vector<64x1xi32>
    %35 = arith.cmpi sge, %33, %34 : vector<64x1xi32>
    %c8_i32_12 = arith.constant 8 : i32
    %36 = vector.broadcast %c8_i32_12 : i32 to vector<64x1xi32>
    %37 = arith.cmpi slt, %33, %36 : vector<64x1xi32>
    %38 = arith.andi %35, %37 : vector<64x1xi1>
    %cst_13 = arith.constant 0.000000e+00 : f32
    %39 = vector.shape_cast %38 : vector<64x1xi1> to vector<64x1xi1>
    %40 = vector.broadcast %39 : vector<64x1xi1> to vector<64x16xi1>
    %41 = vector.broadcast %cst_13 : f32 to vector<64x16xf32>
    %42 = arith.select %40, %31, %41 : vector<64x16xi1>, vector<64x16xf32>
    %43 = vector.extract_strided_slice %30 {offsets = [1, 0], sizes = [64, 16], strides = [1, 1]} : vector<82x16xf32> to vector<64x16xf32>
    %44 = vector.extract_strided_slice %30 {offsets = [2, 0], sizes = [64, 16], strides = [1, 1]} : vector<82x16xf32> to vector<64x16xf32>
    %c1_i32_14 = arith.constant 1 : i32
    %45 = vector.broadcast %c1_i32_14 : i32 to vector<64x1xi32>
    %46 = arith.addi %16, %45 : vector<64x1xi32>
    %c0_i32_15 = arith.constant 0 : i32
    %47 = vector.broadcast %c0_i32_15 : i32 to vector<64x1xi32>
    %48 = arith.cmpi sge, %46, %47 : vector<64x1xi32>
    %c8_i32_16 = arith.constant 8 : i32
    %49 = vector.broadcast %c8_i32_16 : i32 to vector<64x1xi32>
    %50 = arith.cmpi slt, %46, %49 : vector<64x1xi32>
    %51 = arith.andi %48, %50 : vector<64x1xi1>
    %cst_17 = arith.constant 0.000000e+00 : f32
    %52 = vector.shape_cast %51 : vector<64x1xi1> to vector<64x1xi1>
    %53 = vector.broadcast %52 : vector<64x1xi1> to vector<64x16xi1>
    %54 = vector.broadcast %cst_17 : f32 to vector<64x16xf32>
    %55 = arith.select %53, %44, %54 : vector<64x16xi1>, vector<64x16xf32>
    %56 = vector.extract_strided_slice %30 {offsets = [8, 0], sizes = [64, 16], strides = [1, 1]} : vector<82x16xf32> to vector<64x16xf32>
    %c-1_i32_18 = arith.constant -1 : i32
    %57 = vector.broadcast %c-1_i32_18 : i32 to vector<64x1xi32>
    %58 = arith.addi %16, %57 : vector<64x1xi32>
    %c0_i32_19 = arith.constant 0 : i32
    %59 = vector.broadcast %c0_i32_19 : i32 to vector<64x1xi32>
    %60 = arith.cmpi sge, %58, %59 : vector<64x1xi32>
    %c8_i32_20 = arith.constant 8 : i32
    %61 = vector.broadcast %c8_i32_20 : i32 to vector<64x1xi32>
    %62 = arith.cmpi slt, %58, %61 : vector<64x1xi32>
    %63 = arith.andi %60, %62 : vector<64x1xi1>
    %cst_21 = arith.constant 0.000000e+00 : f32
    %64 = vector.shape_cast %63 : vector<64x1xi1> to vector<64x1xi1>
    %65 = vector.broadcast %64 : vector<64x1xi1> to vector<64x16xi1>
    %66 = vector.broadcast %cst_21 : f32 to vector<64x16xf32>
    %67 = arith.select %65, %56, %66 : vector<64x16xi1>, vector<64x16xf32>
    %68 = vector.extract_strided_slice %30 {offsets = [9, 0], sizes = [64, 16], strides = [1, 1]} : vector<82x16xf32> to vector<64x16xf32>
    %69 = vector.extract_strided_slice %30 {offsets = [10, 0], sizes = [64, 16], strides = [1, 1]} : vector<82x16xf32> to vector<64x16xf32>
    %c1_i32_22 = arith.constant 1 : i32
    %70 = vector.broadcast %c1_i32_22 : i32 to vector<64x1xi32>
    %71 = arith.addi %16, %70 : vector<64x1xi32>
    %c0_i32_23 = arith.constant 0 : i32
    %72 = vector.broadcast %c0_i32_23 : i32 to vector<64x1xi32>
    %73 = arith.cmpi sge, %71, %72 : vector<64x1xi32>
    %c8_i32_24 = arith.constant 8 : i32
    %74 = vector.broadcast %c8_i32_24 : i32 to vector<64x1xi32>
    %75 = arith.cmpi slt, %71, %74 : vector<64x1xi32>
    %76 = arith.andi %73, %75 : vector<64x1xi1>
    %cst_25 = arith.constant 0.000000e+00 : f32
    %77 = vector.shape_cast %76 : vector<64x1xi1> to vector<64x1xi1>
    %78 = vector.broadcast %77 : vector<64x1xi1> to vector<64x16xi1>
    %79 = vector.broadcast %cst_25 : f32 to vector<64x16xf32>
    %80 = arith.select %78, %69, %79 : vector<64x16xi1>, vector<64x16xf32>
    %81 = vector.extract_strided_slice %30 {offsets = [16, 0], sizes = [64, 16], strides = [1, 1]} : vector<82x16xf32> to vector<64x16xf32>
    %c-1_i32_26 = arith.constant -1 : i32
    %82 = vector.broadcast %c-1_i32_26 : i32 to vector<64x1xi32>
    %83 = arith.addi %16, %82 : vector<64x1xi32>
    %c0_i32_27 = arith.constant 0 : i32
    %84 = vector.broadcast %c0_i32_27 : i32 to vector<64x1xi32>
    %85 = arith.cmpi sge, %83, %84 : vector<64x1xi32>
    %c8_i32_28 = arith.constant 8 : i32
    %86 = vector.broadcast %c8_i32_28 : i32 to vector<64x1xi32>
    %87 = arith.cmpi slt, %83, %86 : vector<64x1xi32>
    %88 = arith.andi %85, %87 : vector<64x1xi1>
    %cst_29 = arith.constant 0.000000e+00 : f32
    %89 = vector.shape_cast %88 : vector<64x1xi1> to vector<64x1xi1>
    %90 = vector.broadcast %89 : vector<64x1xi1> to vector<64x16xi1>
    %91 = vector.broadcast %cst_29 : f32 to vector<64x16xf32>
    %92 = arith.select %90, %81, %91 : vector<64x16xi1>, vector<64x16xf32>
    %93 = vector.extract_strided_slice %30 {offsets = [17, 0], sizes = [64, 16], strides = [1, 1]} : vector<82x16xf32> to vector<64x16xf32>
    %94 = vector.extract_strided_slice %30 {offsets = [18, 0], sizes = [64, 16], strides = [1, 1]} : vector<82x16xf32> to vector<64x16xf32>
    %c1_i32_30 = arith.constant 1 : i32
    %95 = vector.broadcast %c1_i32_30 : i32 to vector<64x1xi32>
    %96 = arith.addi %16, %95 : vector<64x1xi32>
    %c0_i32_31 = arith.constant 0 : i32
    %97 = vector.broadcast %c0_i32_31 : i32 to vector<64x1xi32>
    %98 = arith.cmpi sge, %96, %97 : vector<64x1xi32>
    %c8_i32_32 = arith.constant 8 : i32
    %99 = vector.broadcast %c8_i32_32 : i32 to vector<64x1xi32>
    %100 = arith.cmpi slt, %96, %99 : vector<64x1xi32>
    %101 = arith.andi %98, %100 : vector<64x1xi1>
    %cst_33 = arith.constant 0.000000e+00 : f32
    %102 = vector.shape_cast %101 : vector<64x1xi1> to vector<64x1xi1>
    %103 = vector.broadcast %102 : vector<64x1xi1> to vector<64x16xi1>
    %104 = vector.broadcast %cst_33 : f32 to vector<64x16xf32>
    %105 = arith.select %103, %94, %104 : vector<64x16xi1>, vector<64x16xf32>
    %106 = tpu.concatenate %42, %43, %55, %67, %68, %80, %92, %93, %105 in 1 : vector<64x16xf32>, vector<64x16xf32>, vector<64x16xf32>, vector<64x16xf32>, vector<64x16xf32>, vector<64x16xf32>, vector<64x16xf32>, vector<64x16xf32>, vector<64x16xf32> -> vector<64x144xf32>
    %107 = arith.truncf %106 : vector<64x144xf32> to vector<64x144xbf16>
    %c0_34 = arith.constant 0 : index
    %c0_35 = arith.constant 0 : index
    %108 = vector.load %arg4[%c0_34, %c0_35] : memref<144x4xbf16, #tpu.memory_space<vmem>>, vector<144x4xbf16>
    %cst_36 = arith.constant dense<0.000000e+00> : vector<64x4xf32>
    %109 = tpu.matmul %107, %108, %cst_36 {dimension_numbers = #tpu.dot_dimension_numbers<[1], [0], [0], [1], [0, 0, 1, 1], [], []>} : vector<64x144xbf16>, vector<144x4xbf16>, vector<64x4xf32> -> vector<64x4xf32>
    %c0_37 = arith.constant 0 : index
    %c0_38 = arith.constant 0 : index
    %110 = vector.load %arg5[%c0_37, %c0_38] : memref<1x4xf32, #tpu.memory_space<vmem>>, vector<1x4xf32>
    %111 = vector.broadcast %110 : vector<1x4xf32> to vector<64x4xf32>
    %112 = arith.addf %109, %111 : vector<64x4xf32>
    %cst_39 = arith.constant 0.000000e+00 : f32
    %113 = vector.broadcast %cst_39 : f32 to vector<64x4xf32>
    %114 = arith.maximumf %112, %113 : vector<64x4xf32>
    %115 = vector.extract_strided_slice %28 {offsets = [0, 0], sizes = [64, 4], strides = [1, 1]} : vector<64x48xf32> to vector<64x4xf32>
    %116 = arith.truncf %115 : vector<64x4xf32> to vector<64x4xbf16>
    %117 = vector.extract_strided_slice %28 {offsets = [0, 16], sizes = [64, 4], strides = [1, 1]} : vector<64x48xf32> to vector<64x4xf32>
    %118 = arith.truncf %117 : vector<64x4xf32> to vector<64x4xbf16>
    %119 = vector.extract_strided_slice %28 {offsets = [0, 32], sizes = [64, 4], strides = [1, 1]} : vector<64x48xf32> to vector<64x4xf32>
    %120 = arith.truncf %119 : vector<64x4xf32> to vector<64x4xbf16>
    %cst_40 = arith.constant dense<0.000000e+00> : vector<64x64xf32>
    %121 = tpu.matmul %116, %118, %cst_40 {dimension_numbers = #tpu.dot_dimension_numbers<[1], [1], [0], [0], [0, 0, 1, 0], [], []>} : vector<64x4xbf16>, vector<64x4xbf16>, vector<64x64xf32> -> vector<64x64xf32>
    %cst_41 = arith.constant 5.000000e-01 : f32
    %122 = vector.broadcast %cst_41 : f32 to vector<64x64xf32>
    %123 = arith.mulf %121, %122 : vector<64x64xf32>
    %cst_42 = arith.constant dense<0xFF800000> : vector<64xf32>
    %124 = vector.multi_reduction <maximumf>, %123, %cst_42 [1] : vector<64x64xf32> to vector<64xf32>
    %125 = vector.shape_cast %124 : vector<64xf32> to vector<64x1xf32>
    %126 = vector.broadcast %125 : vector<64x1xf32> to vector<64x64xf32>
    %127 = arith.subf %123, %126 : vector<64x64xf32>
    %128 = math.exp %127 : vector<64x64xf32>
    %cst_43 = arith.constant dense<0.000000e+00> : vector<64xf32>
    %129 = vector.multi_reduction <add>, %128, %cst_43 [1] : vector<64x64xf32> to vector<64xf32>
    %130 = vector.shape_cast %129 : vector<64xf32> to vector<64x1xf32>
    %131 = tpu.reciprocal %130 {approx = true} : vector<64x1xf32> -> vector<64x1xf32>
    %132 = vector.broadcast %131 : vector<64x1xf32> to vector<64x64xf32>
    %133 = arith.mulf %128, %132 : vector<64x64xf32>
    %134 = arith.truncf %133 : vector<64x64xf32> to vector<64x64xbf16>
    %cst_44 = arith.constant dense<0.000000e+00> : vector<64x4xf32>
    %135 = tpu.matmul %134, %120, %cst_44 {dimension_numbers = #tpu.dot_dimension_numbers<[1], [0], [0], [1], [0, 0, 1, 1], [], []>} : vector<64x64xbf16>, vector<64x4xbf16>, vector<64x4xf32> -> vector<64x4xf32>
    %136 = vector.extract_strided_slice %28 {offsets = [0, 4], sizes = [64, 4], strides = [1, 1]} : vector<64x48xf32> to vector<64x4xf32>
    %137 = arith.truncf %136 : vector<64x4xf32> to vector<64x4xbf16>
    %138 = vector.extract_strided_slice %28 {offsets = [0, 20], sizes = [64, 4], strides = [1, 1]} : vector<64x48xf32> to vector<64x4xf32>
    %139 = arith.truncf %138 : vector<64x4xf32> to vector<64x4xbf16>
    %140 = vector.extract_strided_slice %28 {offsets = [0, 36], sizes = [64, 4], strides = [1, 1]} : vector<64x48xf32> to vector<64x4xf32>
    %141 = arith.truncf %140 : vector<64x4xf32> to vector<64x4xbf16>
    %cst_45 = arith.constant dense<0.000000e+00> : vector<64x64xf32>
    %142 = tpu.matmul %137, %139, %cst_45 {dimension_numbers = #tpu.dot_dimension_numbers<[1], [1], [0], [0], [0, 0, 1, 0], [], []>} : vector<64x4xbf16>, vector<64x4xbf16>, vector<64x64xf32> -> vector<64x64xf32>
    %cst_46 = arith.constant 5.000000e-01 : f32
    %143 = vector.broadcast %cst_46 : f32 to vector<64x64xf32>
    %144 = arith.mulf %142, %143 : vector<64x64xf32>
    %cst_47 = arith.constant dense<0xFF800000> : vector<64xf32>
    %145 = vector.multi_reduction <maximumf>, %144, %cst_47 [1] : vector<64x64xf32> to vector<64xf32>
    %146 = vector.shape_cast %145 : vector<64xf32> to vector<64x1xf32>
    %147 = vector.broadcast %146 : vector<64x1xf32> to vector<64x64xf32>
    %148 = arith.subf %144, %147 : vector<64x64xf32>
    %149 = math.exp %148 : vector<64x64xf32>
    %cst_48 = arith.constant dense<0.000000e+00> : vector<64xf32>
    %150 = vector.multi_reduction <add>, %149, %cst_48 [1] : vector<64x64xf32> to vector<64xf32>
    %151 = vector.shape_cast %150 : vector<64xf32> to vector<64x1xf32>
    %152 = tpu.reciprocal %151 {approx = true} : vector<64x1xf32> -> vector<64x1xf32>
    %153 = vector.broadcast %152 : vector<64x1xf32> to vector<64x64xf32>
    %154 = arith.mulf %149, %153 : vector<64x64xf32>
    %155 = arith.truncf %154 : vector<64x64xf32> to vector<64x64xbf16>
    %cst_49 = arith.constant dense<0.000000e+00> : vector<64x4xf32>
    %156 = tpu.matmul %155, %141, %cst_49 {dimension_numbers = #tpu.dot_dimension_numbers<[1], [0], [0], [1], [0, 0, 1, 1], [], []>} : vector<64x64xbf16>, vector<64x4xbf16>, vector<64x4xf32> -> vector<64x4xf32>
    %157 = vector.extract_strided_slice %28 {offsets = [0, 8], sizes = [64, 4], strides = [1, 1]} : vector<64x48xf32> to vector<64x4xf32>
    %158 = arith.truncf %157 : vector<64x4xf32> to vector<64x4xbf16>
    %159 = vector.extract_strided_slice %28 {offsets = [0, 24], sizes = [64, 4], strides = [1, 1]} : vector<64x48xf32> to vector<64x4xf32>
    %160 = arith.truncf %159 : vector<64x4xf32> to vector<64x4xbf16>
    %161 = vector.extract_strided_slice %28 {offsets = [0, 40], sizes = [64, 4], strides = [1, 1]} : vector<64x48xf32> to vector<64x4xf32>
    %162 = arith.truncf %161 : vector<64x4xf32> to vector<64x4xbf16>
    %cst_50 = arith.constant dense<0.000000e+00> : vector<64x64xf32>
    %163 = tpu.matmul %158, %160, %cst_50 {dimension_numbers = #tpu.dot_dimension_numbers<[1], [1], [0], [0], [0, 0, 1, 0], [], []>} : vector<64x4xbf16>, vector<64x4xbf16>, vector<64x64xf32> -> vector<64x64xf32>
    %cst_51 = arith.constant 5.000000e-01 : f32
    %164 = vector.broadcast %cst_51 : f32 to vector<64x64xf32>
    %165 = arith.mulf %163, %164 : vector<64x64xf32>
    %cst_52 = arith.constant dense<0xFF800000> : vector<64xf32>
    %166 = vector.multi_reduction <maximumf>, %165, %cst_52 [1] : vector<64x64xf32> to vector<64xf32>
    %167 = vector.shape_cast %166 : vector<64xf32> to vector<64x1xf32>
    %168 = vector.broadcast %167 : vector<64x1xf32> to vector<64x64xf32>
    %169 = arith.subf %165, %168 : vector<64x64xf32>
    %170 = math.exp %169 : vector<64x64xf32>
    %cst_53 = arith.constant dense<0.000000e+00> : vector<64xf32>
    %171 = vector.multi_reduction <add>, %170, %cst_53 [1] : vector<64x64xf32> to vector<64xf32>
    %172 = vector.shape_cast %171 : vector<64xf32> to vector<64x1xf32>
    %173 = tpu.reciprocal %172 {approx = true} : vector<64x1xf32> -> vector<64x1xf32>
    %174 = vector.broadcast %173 : vector<64x1xf32> to vector<64x64xf32>
    %175 = arith.mulf %170, %174 : vector<64x64xf32>
    %176 = arith.truncf %175 : vector<64x64xf32> to vector<64x64xbf16>
    %cst_54 = arith.constant dense<0.000000e+00> : vector<64x4xf32>
    %177 = tpu.matmul %176, %162, %cst_54 {dimension_numbers = #tpu.dot_dimension_numbers<[1], [0], [0], [1], [0, 0, 1, 1], [], []>} : vector<64x64xbf16>, vector<64x4xbf16>, vector<64x4xf32> -> vector<64x4xf32>
    %178 = vector.extract_strided_slice %28 {offsets = [0, 12], sizes = [64, 4], strides = [1, 1]} : vector<64x48xf32> to vector<64x4xf32>
    %179 = arith.truncf %178 : vector<64x4xf32> to vector<64x4xbf16>
    %180 = vector.extract_strided_slice %28 {offsets = [0, 28], sizes = [64, 4], strides = [1, 1]} : vector<64x48xf32> to vector<64x4xf32>
    %181 = arith.truncf %180 : vector<64x4xf32> to vector<64x4xbf16>
    %182 = vector.extract_strided_slice %28 {offsets = [0, 44], sizes = [64, 4], strides = [1, 1]} : vector<64x48xf32> to vector<64x4xf32>
    %183 = arith.truncf %182 : vector<64x4xf32> to vector<64x4xbf16>
    %cst_55 = arith.constant dense<0.000000e+00> : vector<64x64xf32>
    %184 = tpu.matmul %179, %181, %cst_55 {dimension_numbers = #tpu.dot_dimension_numbers<[1], [1], [0], [0], [0, 0, 1, 0], [], []>} : vector<64x4xbf16>, vector<64x4xbf16>, vector<64x64xf32> -> vector<64x64xf32>
    %cst_56 = arith.constant 5.000000e-01 : f32
    %185 = vector.broadcast %cst_56 : f32 to vector<64x64xf32>
    %186 = arith.mulf %184, %185 : vector<64x64xf32>
    %cst_57 = arith.constant dense<0xFF800000> : vector<64xf32>
    %187 = vector.multi_reduction <maximumf>, %186, %cst_57 [1] : vector<64x64xf32> to vector<64xf32>
    %188 = vector.shape_cast %187 : vector<64xf32> to vector<64x1xf32>
    %189 = vector.broadcast %188 : vector<64x1xf32> to vector<64x64xf32>
    %190 = arith.subf %186, %189 : vector<64x64xf32>
    %191 = math.exp %190 : vector<64x64xf32>
    %cst_58 = arith.constant dense<0.000000e+00> : vector<64xf32>
    %192 = vector.multi_reduction <add>, %191, %cst_58 [1] : vector<64x64xf32> to vector<64xf32>
    %193 = vector.shape_cast %192 : vector<64xf32> to vector<64x1xf32>
    %194 = tpu.reciprocal %193 {approx = true} : vector<64x1xf32> -> vector<64x1xf32>
    %195 = vector.broadcast %194 : vector<64x1xf32> to vector<64x64xf32>
    %196 = arith.mulf %191, %195 : vector<64x64xf32>
    %197 = arith.truncf %196 : vector<64x64xf32> to vector<64x64xbf16>
    %cst_59 = arith.constant dense<0.000000e+00> : vector<64x4xf32>
    %198 = tpu.matmul %197, %183, %cst_59 {dimension_numbers = #tpu.dot_dimension_numbers<[1], [0], [0], [1], [0, 0, 1, 1], [], []>} : vector<64x64xbf16>, vector<64x4xbf16>, vector<64x4xf32> -> vector<64x4xf32>
    %199 = tpu.concatenate %135, %156, %177, %198 in 1 : vector<64x4xf32>, vector<64x4xf32>, vector<64x4xf32>, vector<64x4xf32> -> vector<64x16xf32>
    %200 = arith.truncf %199 : vector<64x16xf32> to vector<64x16xbf16>
    %c0_60 = arith.constant 0 : index
    %c0_61 = arith.constant 0 : index
    %201 = vector.load %arg6[%c0_60, %c0_61] : memref<16x4xbf16, #tpu.memory_space<vmem>>, vector<16x4xbf16>
    %cst_62 = arith.constant dense<0.000000e+00> : vector<64x4xf32>
    %202 = tpu.matmul %200, %201, %cst_62 {dimension_numbers = #tpu.dot_dimension_numbers<[1], [0], [0], [1], [0, 0, 1, 1], [], []>} : vector<64x16xbf16>, vector<16x4xbf16>, vector<64x4xf32> -> vector<64x4xf32>
    %c0_63 = arith.constant 0 : index
    %c0_64 = arith.constant 0 : index
    %203 = vector.load %arg7[%c0_63, %c0_64] : memref<1x4xf32, #tpu.memory_space<vmem>>, vector<1x4xf32>
    %204 = vector.broadcast %203 : vector<1x4xf32> to vector<64x4xf32>
    %205 = arith.addf %202, %204 : vector<64x4xf32>
    %206 = arith.addf %114, %205 : vector<64x4xf32>
    %207 = arith.truncf %206 : vector<64x4xf32> to vector<64x4xbf16>
    %208 = tpu.concatenate %19, %207 in 1 : vector<64x16xbf16>, vector<64x4xbf16> -> vector<64x20xbf16>
    %c0_65 = arith.constant 0 : index
    %c0_66 = arith.constant 0 : index
    %209 = vector.load %arg8[%c0_65, %c0_66] : memref<20x80xbf16, #tpu.memory_space<vmem>>, vector<20x80xbf16>
    %cst_67 = arith.constant dense<0.000000e+00> : vector<64x80xf32>
    %210 = tpu.matmul %208, %209, %cst_67 {dimension_numbers = #tpu.dot_dimension_numbers<[1], [0], [0], [1], [0, 0, 1, 1], [], []>} : vector<64x20xbf16>, vector<20x80xbf16>, vector<64x80xf32> -> vector<64x80xf32>
    %c0_68 = arith.constant 0 : index
    %c0_69 = arith.constant 0 : index
    %211 = vector.load %arg9[%c0_68, %c0_69] : memref<1x80xf32, #tpu.memory_space<vmem>>, vector<1x80xf32>
    %212 = vector.broadcast %211 : vector<1x80xf32> to vector<64x80xf32>
    %213 = arith.addf %210, %212 : vector<64x80xf32>
    %214 = vector.extract_strided_slice %213 {offsets = [0, 0], sizes = [64, 20], strides = [1, 1]} : vector<64x80xf32> to vector<64x20xf32>
    %cst_70 = arith.constant 0.000000e+00 : f32
    %215 = vector.broadcast %cst_70 : f32 to vector<64x20xf32>
    %216 = arith.maximumf %214, %215 : vector<64x20xf32>
    %217 = vector.extract_strided_slice %213 {offsets = [0, 20], sizes = [64, 60], strides = [1, 1]} : vector<64x80xf32> to vector<64x60xf32>
    %cst_71 = arith.constant 0.000000e+00 : f32
    %218 = vector.broadcast %cst_71 : f32 to vector<9x20xf32>
    %219 = tpu.concatenate %218, %216, %218 in 0 : vector<9x20xf32>, vector<64x20xf32>, vector<9x20xf32> -> vector<82x20xf32>
    %220 = vector.extract_strided_slice %219 {offsets = [0, 0], sizes = [64, 20], strides = [1, 1]} : vector<82x20xf32> to vector<64x20xf32>
    %c-1_i32_72 = arith.constant -1 : i32
    %221 = vector.broadcast %c-1_i32_72 : i32 to vector<64x1xi32>
    %222 = arith.addi %16, %221 : vector<64x1xi32>
    %c0_i32_73 = arith.constant 0 : i32
    %223 = vector.broadcast %c0_i32_73 : i32 to vector<64x1xi32>
    %224 = arith.cmpi sge, %222, %223 : vector<64x1xi32>
    %c8_i32_74 = arith.constant 8 : i32
    %225 = vector.broadcast %c8_i32_74 : i32 to vector<64x1xi32>
    %226 = arith.cmpi slt, %222, %225 : vector<64x1xi32>
    %227 = arith.andi %224, %226 : vector<64x1xi1>
    %cst_75 = arith.constant 0.000000e+00 : f32
    %228 = vector.shape_cast %227 : vector<64x1xi1> to vector<64x1xi1>
    %229 = vector.broadcast %228 : vector<64x1xi1> to vector<64x20xi1>
    %230 = vector.broadcast %cst_75 : f32 to vector<64x20xf32>
    %231 = arith.select %229, %220, %230 : vector<64x20xi1>, vector<64x20xf32>
    %232 = vector.extract_strided_slice %219 {offsets = [1, 0], sizes = [64, 20], strides = [1, 1]} : vector<82x20xf32> to vector<64x20xf32>
    %233 = vector.extract_strided_slice %219 {offsets = [2, 0], sizes = [64, 20], strides = [1, 1]} : vector<82x20xf32> to vector<64x20xf32>
    %c1_i32_76 = arith.constant 1 : i32
    %234 = vector.broadcast %c1_i32_76 : i32 to vector<64x1xi32>
    %235 = arith.addi %16, %234 : vector<64x1xi32>
    %c0_i32_77 = arith.constant 0 : i32
    %236 = vector.broadcast %c0_i32_77 : i32 to vector<64x1xi32>
    %237 = arith.cmpi sge, %235, %236 : vector<64x1xi32>
    %c8_i32_78 = arith.constant 8 : i32
    %238 = vector.broadcast %c8_i32_78 : i32 to vector<64x1xi32>
    %239 = arith.cmpi slt, %235, %238 : vector<64x1xi32>
    %240 = arith.andi %237, %239 : vector<64x1xi1>
    %cst_79 = arith.constant 0.000000e+00 : f32
    %241 = vector.shape_cast %240 : vector<64x1xi1> to vector<64x1xi1>
    %242 = vector.broadcast %241 : vector<64x1xi1> to vector<64x20xi1>
    %243 = vector.broadcast %cst_79 : f32 to vector<64x20xf32>
    %244 = arith.select %242, %233, %243 : vector<64x20xi1>, vector<64x20xf32>
    %245 = vector.extract_strided_slice %219 {offsets = [8, 0], sizes = [64, 20], strides = [1, 1]} : vector<82x20xf32> to vector<64x20xf32>
    %c-1_i32_80 = arith.constant -1 : i32
    %246 = vector.broadcast %c-1_i32_80 : i32 to vector<64x1xi32>
    %247 = arith.addi %16, %246 : vector<64x1xi32>
    %c0_i32_81 = arith.constant 0 : i32
    %248 = vector.broadcast %c0_i32_81 : i32 to vector<64x1xi32>
    %249 = arith.cmpi sge, %247, %248 : vector<64x1xi32>
    %c8_i32_82 = arith.constant 8 : i32
    %250 = vector.broadcast %c8_i32_82 : i32 to vector<64x1xi32>
    %251 = arith.cmpi slt, %247, %250 : vector<64x1xi32>
    %252 = arith.andi %249, %251 : vector<64x1xi1>
    %cst_83 = arith.constant 0.000000e+00 : f32
    %253 = vector.shape_cast %252 : vector<64x1xi1> to vector<64x1xi1>
    %254 = vector.broadcast %253 : vector<64x1xi1> to vector<64x20xi1>
    %255 = vector.broadcast %cst_83 : f32 to vector<64x20xf32>
    %256 = arith.select %254, %245, %255 : vector<64x20xi1>, vector<64x20xf32>
    %257 = vector.extract_strided_slice %219 {offsets = [9, 0], sizes = [64, 20], strides = [1, 1]} : vector<82x20xf32> to vector<64x20xf32>
    %258 = vector.extract_strided_slice %219 {offsets = [10, 0], sizes = [64, 20], strides = [1, 1]} : vector<82x20xf32> to vector<64x20xf32>
    %c1_i32_84 = arith.constant 1 : i32
    %259 = vector.broadcast %c1_i32_84 : i32 to vector<64x1xi32>
    %260 = arith.addi %16, %259 : vector<64x1xi32>
    %c0_i32_85 = arith.constant 0 : i32
    %261 = vector.broadcast %c0_i32_85 : i32 to vector<64x1xi32>
    %262 = arith.cmpi sge, %260, %261 : vector<64x1xi32>
    %c8_i32_86 = arith.constant 8 : i32
    %263 = vector.broadcast %c8_i32_86 : i32 to vector<64x1xi32>
    %264 = arith.cmpi slt, %260, %263 : vector<64x1xi32>
    %265 = arith.andi %262, %264 : vector<64x1xi1>
    %cst_87 = arith.constant 0.000000e+00 : f32
    %266 = vector.shape_cast %265 : vector<64x1xi1> to vector<64x1xi1>
    %267 = vector.broadcast %266 : vector<64x1xi1> to vector<64x20xi1>
    %268 = vector.broadcast %cst_87 : f32 to vector<64x20xf32>
    %269 = arith.select %267, %258, %268 : vector<64x20xi1>, vector<64x20xf32>
    %270 = vector.extract_strided_slice %219 {offsets = [16, 0], sizes = [64, 20], strides = [1, 1]} : vector<82x20xf32> to vector<64x20xf32>
    %c-1_i32_88 = arith.constant -1 : i32
    %271 = vector.broadcast %c-1_i32_88 : i32 to vector<64x1xi32>
    %272 = arith.addi %16, %271 : vector<64x1xi32>
    %c0_i32_89 = arith.constant 0 : i32
    %273 = vector.broadcast %c0_i32_89 : i32 to vector<64x1xi32>
    %274 = arith.cmpi sge, %272, %273 : vector<64x1xi32>
    %c8_i32_90 = arith.constant 8 : i32
    %275 = vector.broadcast %c8_i32_90 : i32 to vector<64x1xi32>
    %276 = arith.cmpi slt, %272, %275 : vector<64x1xi32>
    %277 = arith.andi %274, %276 : vector<64x1xi1>
    %cst_91 = arith.constant 0.000000e+00 : f32
    %278 = vector.shape_cast %277 : vector<64x1xi1> to vector<64x1xi1>
    %279 = vector.broadcast %278 : vector<64x1xi1> to vector<64x20xi1>
    %280 = vector.broadcast %cst_91 : f32 to vector<64x20xf32>
    %281 = arith.select %279, %270, %280 : vector<64x20xi1>, vector<64x20xf32>
    %282 = vector.extract_strided_slice %219 {offsets = [17, 0], sizes = [64, 20], strides = [1, 1]} : vector<82x20xf32> to vector<64x20xf32>
    %283 = vector.extract_strided_slice %219 {offsets = [18, 0], sizes = [64, 20], strides = [1, 1]} : vector<82x20xf32> to vector<64x20xf32>
    %c1_i32_92 = arith.constant 1 : i32
    %284 = vector.broadcast %c1_i32_92 : i32 to vector<64x1xi32>
    %285 = arith.addi %16, %284 : vector<64x1xi32>
    %c0_i32_93 = arith.constant 0 : i32
    %286 = vector.broadcast %c0_i32_93 : i32 to vector<64x1xi32>
    %287 = arith.cmpi sge, %285, %286 : vector<64x1xi32>
    %c8_i32_94 = arith.constant 8 : i32
    %288 = vector.broadcast %c8_i32_94 : i32 to vector<64x1xi32>
    %289 = arith.cmpi slt, %285, %288 : vector<64x1xi32>
    %290 = arith.andi %287, %289 : vector<64x1xi1>
    %cst_95 = arith.constant 0.000000e+00 : f32
    %291 = vector.shape_cast %290 : vector<64x1xi1> to vector<64x1xi1>
    %292 = vector.broadcast %291 : vector<64x1xi1> to vector<64x20xi1>
    %293 = vector.broadcast %cst_95 : f32 to vector<64x20xf32>
    %294 = arith.select %292, %283, %293 : vector<64x20xi1>, vector<64x20xf32>
    %295 = tpu.concatenate %231, %232, %244, %256, %257, %269, %281, %282, %294 in 1 : vector<64x20xf32>, vector<64x20xf32>, vector<64x20xf32>, vector<64x20xf32>, vector<64x20xf32>, vector<64x20xf32>, vector<64x20xf32>, vector<64x20xf32>, vector<64x20xf32> -> vector<64x180xf32>
    %296 = arith.truncf %295 : vector<64x180xf32> to vector<64x180xbf16>
    %c0_96 = arith.constant 0 : index
    %c0_97 = arith.constant 0 : index
    %297 = vector.load %arg10[%c0_96, %c0_97] : memref<180x4xbf16, #tpu.memory_space<vmem>>, vector<180x4xbf16>
    %cst_98 = arith.constant dense<0.000000e+00> : vector<64x4xf32>
    %298 = tpu.matmul %296, %297, %cst_98 {dimension_numbers = #tpu.dot_dimension_numbers<[1], [0], [0], [1], [0, 0, 1, 1], [], []>} : vector<64x180xbf16>, vector<180x4xbf16>, vector<64x4xf32> -> vector<64x4xf32>
    %c0_99 = arith.constant 0 : index
    %c0_100 = arith.constant 0 : index
    %299 = vector.load %arg11[%c0_99, %c0_100] : memref<1x4xf32, #tpu.memory_space<vmem>>, vector<1x4xf32>
    %300 = vector.broadcast %299 : vector<1x4xf32> to vector<64x4xf32>
    %301 = arith.addf %298, %300 : vector<64x4xf32>
    %cst_101 = arith.constant 0.000000e+00 : f32
    %302 = vector.broadcast %cst_101 : f32 to vector<64x4xf32>
    %303 = arith.maximumf %301, %302 : vector<64x4xf32>
    %304 = vector.extract_strided_slice %217 {offsets = [0, 0], sizes = [64, 5], strides = [1, 1]} : vector<64x60xf32> to vector<64x5xf32>
    %305 = arith.truncf %304 : vector<64x5xf32> to vector<64x5xbf16>
    %306 = vector.extract_strided_slice %217 {offsets = [0, 20], sizes = [64, 5], strides = [1, 1]} : vector<64x60xf32> to vector<64x5xf32>
    %307 = arith.truncf %306 : vector<64x5xf32> to vector<64x5xbf16>
    %308 = vector.extract_strided_slice %217 {offsets = [0, 40], sizes = [64, 5], strides = [1, 1]} : vector<64x60xf32> to vector<64x5xf32>
    %309 = arith.truncf %308 : vector<64x5xf32> to vector<64x5xbf16>
    %cst_102 = arith.constant dense<0.000000e+00> : vector<64x64xf32>
    %310 = tpu.matmul %305, %307, %cst_102 {dimension_numbers = #tpu.dot_dimension_numbers<[1], [1], [0], [0], [0, 0, 1, 0], [], []>} : vector<64x5xbf16>, vector<64x5xbf16>, vector<64x64xf32> -> vector<64x64xf32>
    %cst_103 = arith.constant 0.44721359 : f32
    %311 = vector.broadcast %cst_103 : f32 to vector<64x64xf32>
    %312 = arith.mulf %310, %311 : vector<64x64xf32>
    %cst_104 = arith.constant dense<0xFF800000> : vector<64xf32>
    %313 = vector.multi_reduction <maximumf>, %312, %cst_104 [1] : vector<64x64xf32> to vector<64xf32>
    %314 = vector.shape_cast %313 : vector<64xf32> to vector<64x1xf32>
    %315 = vector.broadcast %314 : vector<64x1xf32> to vector<64x64xf32>
    %316 = arith.subf %312, %315 : vector<64x64xf32>
    %317 = math.exp %316 : vector<64x64xf32>
    %cst_105 = arith.constant dense<0.000000e+00> : vector<64xf32>
    %318 = vector.multi_reduction <add>, %317, %cst_105 [1] : vector<64x64xf32> to vector<64xf32>
    %319 = vector.shape_cast %318 : vector<64xf32> to vector<64x1xf32>
    %320 = tpu.reciprocal %319 {approx = true} : vector<64x1xf32> -> vector<64x1xf32>
    %321 = vector.broadcast %320 : vector<64x1xf32> to vector<64x64xf32>
    %322 = arith.mulf %317, %321 : vector<64x64xf32>
    %323 = arith.truncf %322 : vector<64x64xf32> to vector<64x64xbf16>
    %cst_106 = arith.constant dense<0.000000e+00> : vector<64x5xf32>
    %324 = tpu.matmul %323, %309, %cst_106 {dimension_numbers = #tpu.dot_dimension_numbers<[1], [0], [0], [1], [0, 0, 1, 1], [], []>} : vector<64x64xbf16>, vector<64x5xbf16>, vector<64x5xf32> -> vector<64x5xf32>
    %325 = vector.extract_strided_slice %217 {offsets = [0, 5], sizes = [64, 5], strides = [1, 1]} : vector<64x60xf32> to vector<64x5xf32>
    %326 = arith.truncf %325 : vector<64x5xf32> to vector<64x5xbf16>
    %327 = vector.extract_strided_slice %217 {offsets = [0, 25], sizes = [64, 5], strides = [1, 1]} : vector<64x60xf32> to vector<64x5xf32>
    %328 = arith.truncf %327 : vector<64x5xf32> to vector<64x5xbf16>
    %329 = vector.extract_strided_slice %217 {offsets = [0, 45], sizes = [64, 5], strides = [1, 1]} : vector<64x60xf32> to vector<64x5xf32>
    %330 = arith.truncf %329 : vector<64x5xf32> to vector<64x5xbf16>
    %cst_107 = arith.constant dense<0.000000e+00> : vector<64x64xf32>
    %331 = tpu.matmul %326, %328, %cst_107 {dimension_numbers = #tpu.dot_dimension_numbers<[1], [1], [0], [0], [0, 0, 1, 0], [], []>} : vector<64x5xbf16>, vector<64x5xbf16>, vector<64x64xf32> -> vector<64x64xf32>
    %cst_108 = arith.constant 0.44721359 : f32
    %332 = vector.broadcast %cst_108 : f32 to vector<64x64xf32>
    %333 = arith.mulf %331, %332 : vector<64x64xf32>
    %cst_109 = arith.constant dense<0xFF800000> : vector<64xf32>
    %334 = vector.multi_reduction <maximumf>, %333, %cst_109 [1] : vector<64x64xf32> to vector<64xf32>
    %335 = vector.shape_cast %334 : vector<64xf32> to vector<64x1xf32>
    %336 = vector.broadcast %335 : vector<64x1xf32> to vector<64x64xf32>
    %337 = arith.subf %333, %336 : vector<64x64xf32>
    %338 = math.exp %337 : vector<64x64xf32>
    %cst_110 = arith.constant dense<0.000000e+00> : vector<64xf32>
    %339 = vector.multi_reduction <add>, %338, %cst_110 [1] : vector<64x64xf32> to vector<64xf32>
    %340 = vector.shape_cast %339 : vector<64xf32> to vector<64x1xf32>
    %341 = tpu.reciprocal %340 {approx = true} : vector<64x1xf32> -> vector<64x1xf32>
    %342 = vector.broadcast %341 : vector<64x1xf32> to vector<64x64xf32>
    %343 = arith.mulf %338, %342 : vector<64x64xf32>
    %344 = arith.truncf %343 : vector<64x64xf32> to vector<64x64xbf16>
    %cst_111 = arith.constant dense<0.000000e+00> : vector<64x5xf32>
    %345 = tpu.matmul %344, %330, %cst_111 {dimension_numbers = #tpu.dot_dimension_numbers<[1], [0], [0], [1], [0, 0, 1, 1], [], []>} : vector<64x64xbf16>, vector<64x5xbf16>, vector<64x5xf32> -> vector<64x5xf32>
    %346 = vector.extract_strided_slice %217 {offsets = [0, 10], sizes = [64, 5], strides = [1, 1]} : vector<64x60xf32> to vector<64x5xf32>
    %347 = arith.truncf %346 : vector<64x5xf32> to vector<64x5xbf16>
    %348 = vector.extract_strided_slice %217 {offsets = [0, 30], sizes = [64, 5], strides = [1, 1]} : vector<64x60xf32> to vector<64x5xf32>
    %349 = arith.truncf %348 : vector<64x5xf32> to vector<64x5xbf16>
    %350 = vector.extract_strided_slice %217 {offsets = [0, 50], sizes = [64, 5], strides = [1, 1]} : vector<64x60xf32> to vector<64x5xf32>
    %351 = arith.truncf %350 : vector<64x5xf32> to vector<64x5xbf16>
    %cst_112 = arith.constant dense<0.000000e+00> : vector<64x64xf32>
    %352 = tpu.matmul %347, %349, %cst_112 {dimension_numbers = #tpu.dot_dimension_numbers<[1], [1], [0], [0], [0, 0, 1, 0], [], []>} : vector<64x5xbf16>, vector<64x5xbf16>, vector<64x64xf32> -> vector<64x64xf32>
    %cst_113 = arith.constant 0.44721359 : f32
    %353 = vector.broadcast %cst_113 : f32 to vector<64x64xf32>
    %354 = arith.mulf %352, %353 : vector<64x64xf32>
    %cst_114 = arith.constant dense<0xFF800000> : vector<64xf32>
    %355 = vector.multi_reduction <maximumf>, %354, %cst_114 [1] : vector<64x64xf32> to vector<64xf32>
    %356 = vector.shape_cast %355 : vector<64xf32> to vector<64x1xf32>
    %357 = vector.broadcast %356 : vector<64x1xf32> to vector<64x64xf32>
    %358 = arith.subf %354, %357 : vector<64x64xf32>
    %359 = math.exp %358 : vector<64x64xf32>
    %cst_115 = arith.constant dense<0.000000e+00> : vector<64xf32>
    %360 = vector.multi_reduction <add>, %359, %cst_115 [1] : vector<64x64xf32> to vector<64xf32>
    %361 = vector.shape_cast %360 : vector<64xf32> to vector<64x1xf32>
    %362 = tpu.reciprocal %361 {approx = true} : vector<64x1xf32> -> vector<64x1xf32>
    %363 = vector.broadcast %362 : vector<64x1xf32> to vector<64x64xf32>
    %364 = arith.mulf %359, %363 : vector<64x64xf32>
    %365 = arith.truncf %364 : vector<64x64xf32> to vector<64x64xbf16>
    %cst_116 = arith.constant dense<0.000000e+00> : vector<64x5xf32>
    %366 = tpu.matmul %365, %351, %cst_116 {dimension_numbers = #tpu.dot_dimension_numbers<[1], [0], [0], [1], [0, 0, 1, 1], [], []>} : vector<64x64xbf16>, vector<64x5xbf16>, vector<64x5xf32> -> vector<64x5xf32>
    %367 = vector.extract_strided_slice %217 {offsets = [0, 15], sizes = [64, 5], strides = [1, 1]} : vector<64x60xf32> to vector<64x5xf32>
    %368 = arith.truncf %367 : vector<64x5xf32> to vector<64x5xbf16>
    %369 = vector.extract_strided_slice %217 {offsets = [0, 35], sizes = [64, 5], strides = [1, 1]} : vector<64x60xf32> to vector<64x5xf32>
    %370 = arith.truncf %369 : vector<64x5xf32> to vector<64x5xbf16>
    %371 = vector.extract_strided_slice %217 {offsets = [0, 55], sizes = [64, 5], strides = [1, 1]} : vector<64x60xf32> to vector<64x5xf32>
    %372 = arith.truncf %371 : vector<64x5xf32> to vector<64x5xbf16>
    %cst_117 = arith.constant dense<0.000000e+00> : vector<64x64xf32>
    %373 = tpu.matmul %368, %370, %cst_117 {dimension_numbers = #tpu.dot_dimension_numbers<[1], [1], [0], [0], [0, 0, 1, 0], [], []>} : vector<64x5xbf16>, vector<64x5xbf16>, vector<64x64xf32> -> vector<64x64xf32>
    %cst_118 = arith.constant 0.44721359 : f32
    %374 = vector.broadcast %cst_118 : f32 to vector<64x64xf32>
    %375 = arith.mulf %373, %374 : vector<64x64xf32>
    %cst_119 = arith.constant dense<0xFF800000> : vector<64xf32>
    %376 = vector.multi_reduction <maximumf>, %375, %cst_119 [1] : vector<64x64xf32> to vector<64xf32>
    %377 = vector.shape_cast %376 : vector<64xf32> to vector<64x1xf32>
    %378 = vector.broadcast %377 : vector<64x1xf32> to vector<64x64xf32>
    %379 = arith.subf %375, %378 : vector<64x64xf32>
    %380 = math.exp %379 : vector<64x64xf32>
    %cst_120 = arith.constant dense<0.000000e+00> : vector<64xf32>
    %381 = vector.multi_reduction <add>, %380, %cst_120 [1] : vector<64x64xf32> to vector<64xf32>
    %382 = vector.shape_cast %381 : vector<64xf32> to vector<64x1xf32>
    %383 = tpu.reciprocal %382 {approx = true} : vector<64x1xf32> -> vector<64x1xf32>
    %384 = vector.broadcast %383 : vector<64x1xf32> to vector<64x64xf32>
    %385 = arith.mulf %380, %384 : vector<64x64xf32>
    %386 = arith.truncf %385 : vector<64x64xf32> to vector<64x64xbf16>
    %cst_121 = arith.constant dense<0.000000e+00> : vector<64x5xf32>
    %387 = tpu.matmul %386, %372, %cst_121 {dimension_numbers = #tpu.dot_dimension_numbers<[1], [0], [0], [1], [0, 0, 1, 1], [], []>} : vector<64x64xbf16>, vector<64x5xbf16>, vector<64x5xf32> -> vector<64x5xf32>
    %388 = tpu.concatenate %324, %345, %366, %387 in 1 : vector<64x5xf32>, vector<64x5xf32>, vector<64x5xf32>, vector<64x5xf32> -> vector<64x20xf32>
    %389 = arith.truncf %388 : vector<64x20xf32> to vector<64x20xbf16>
    %c0_122 = arith.constant 0 : index
    %c0_123 = arith.constant 0 : index
    %390 = vector.load %arg12[%c0_122, %c0_123] : memref<20x4xbf16, #tpu.memory_space<vmem>>, vector<20x4xbf16>
    %cst_124 = arith.constant dense<0.000000e+00> : vector<64x4xf32>
    %391 = tpu.matmul %389, %390, %cst_124 {dimension_numbers = #tpu.dot_dimension_numbers<[1], [0], [0], [1], [0, 0, 1, 1], [], []>} : vector<64x20xbf16>, vector<20x4xbf16>, vector<64x4xf32> -> vector<64x4xf32>
    %c0_125 = arith.constant 0 : index
    %c0_126 = arith.constant 0 : index
    %392 = vector.load %arg13[%c0_125, %c0_126] : memref<1x4xf32, #tpu.memory_space<vmem>>, vector<1x4xf32>
    %393 = vector.broadcast %392 : vector<1x4xf32> to vector<64x4xf32>
    %394 = arith.addf %391, %393 : vector<64x4xf32>
    %395 = arith.addf %303, %394 : vector<64x4xf32>
    %396 = arith.truncf %395 : vector<64x4xf32> to vector<64x4xbf16>
    %397 = tpu.concatenate %208, %396 in 1 : vector<64x20xbf16>, vector<64x4xbf16> -> vector<64x24xbf16>
    %c0_127 = arith.constant 0 : index
    %c0_128 = arith.constant 0 : index
    %398 = vector.load %arg14[%c0_127, %c0_128] : memref<24x16xbf16, #tpu.memory_space<vmem>>, vector<24x16xbf16>
    %cst_129 = arith.constant dense<0.000000e+00> : vector<64x16xf32>
    %399 = tpu.matmul %397, %398, %cst_129 {dimension_numbers = #tpu.dot_dimension_numbers<[1], [0], [0], [1], [0, 0, 1, 1], [], []>} : vector<64x24xbf16>, vector<24x16xbf16>, vector<64x16xf32> -> vector<64x16xf32>
    %c0_130 = arith.constant 0 : index
    %c0_131 = arith.constant 0 : index
    %400 = vector.load %arg15[%c0_130, %c0_131] : memref<1x16xf32, #tpu.memory_space<vmem>>, vector<1x16xf32>
    %401 = vector.broadcast %400 : vector<1x16xf32> to vector<64x16xf32>
    %402 = arith.addf %399, %401 : vector<64x16xf32>
    %c0_132 = arith.constant 0 : index
    %c0_133 = arith.constant 0 : index
    %c0_134 = arith.constant 0 : index
    %403 = vector.load %arg16[%c0_132, %c0_133, %c0_134] : memref<1x64x16xf32, #tpu.memory_space<vmem>>, vector<1x64x16xf32>
    %404 = vector.shape_cast %403 : vector<1x64x16xf32> to vector<64x16xf32>
    %405 = vector.shape_cast %402 : vector<64x16xf32> to vector<1x64x16xf32>
    tpu.vector_store %arg16[%c0_132, %c0_133, %c0_134], %405 {strides = array<i32>} : memref<1x64x16xf32, #tpu.memory_space<vmem>>, vector<1x64x16xf32>,
    return
  }
  func.func @transform_0(%arg0: i32) -> (i32, i32, i32) {
    %c0_i32 = arith.constant 0 : i32
    %c0_i32_0 = arith.constant 0 : i32
    %c0_i32_1 = arith.constant 0 : i32
    return %arg0, %c0_i32, %c0_i32_0 : i32, i32, i32
  }
  func.func @transform_1(%arg0: i32) -> (i32, i32) {
    %c0_i32 = arith.constant 0 : i32
    %c0_i32_0 = arith.constant 0 : i32
    %c0_i32_1 = arith.constant 0 : i32
    return %c0_i32, %c0_i32_0 : i32, i32
  }
  func.func @transform_2(%arg0: i32) -> (i32, i32) {
    %c0_i32 = arith.constant 0 : i32
    %c0_i32_0 = arith.constant 0 : i32
    %c0_i32_1 = arith.constant 0 : i32
    return %c0_i32, %c0_i32_0 : i32, i32
  }
  func.func @transform_3(%arg0: i32) -> (i32, i32) {
    %c0_i32 = arith.constant 0 : i32
    %c0_i32_0 = arith.constant 0 : i32
    %c0_i32_1 = arith.constant 0 : i32
    return %c0_i32, %c0_i32_0 : i32, i32
  }
  func.func @transform_4(%arg0: i32) -> (i32, i32) {
    %c0_i32 = arith.constant 0 : i32
    %c0_i32_0 = arith.constant 0 : i32
    %c0_i32_1 = arith.constant 0 : i32
    return %c0_i32, %c0_i32_0 : i32, i32
  }
  func.func @transform_5(%arg0: i32) -> (i32, i32) {
    %c0_i32 = arith.constant 0 : i32
    %c0_i32_0 = arith.constant 0 : i32
    %c0_i32_1 = arith.constant 0 : i32
    return %c0_i32, %c0_i32_0 : i32, i32
  }
  func.func @transform_6(%arg0: i32) -> (i32, i32) {
    %c0_i32 = arith.constant 0 : i32
    %c0_i32_0 = arith.constant 0 : i32
    %c0_i32_1 = arith.constant 0 : i32
    return %c0_i32, %c0_i32_0 : i32, i32
  }
  func.func @transform_7(%arg0: i32) -> (i32, i32) {
    %c0_i32 = arith.constant 0 : i32
    %c0_i32_0 = arith.constant 0 : i32
    %c0_i32_1 = arith.constant 0 : i32
    return %c0_i32, %c0_i32_0 : i32, i32
  }
  func.func @transform_8(%arg0: i32) -> (i32, i32) {
    %c0_i32 = arith.constant 0 : i32
    %c0_i32_0 = arith.constant 0 : i32
    %c0_i32_1 = arith.constant 0 : i32
    return %c0_i32, %c0_i32_0 : i32, i32
  }
  func.func @transform_9(%arg0: i32) -> (i32, i32) {
    %c0_i32 = arith.constant 0 : i32
    %c0_i32_0 = arith.constant 0 : i32
    %c0_i32_1 = arith.constant 0 : i32
    return %c0_i32, %c0_i32_0 : i32, i32
  }
  func.func @transform_10(%arg0: i32) -> (i32, i32) {
    %c0_i32 = arith.constant 0 : i32
    %c0_i32_0 = arith.constant 0 : i32
    %c0_i32_1 = arith.constant 0 : i32
    return %c0_i32, %c0_i32_0 : i32, i32
  }
  func.func @transform_11(%arg0: i32) -> (i32, i32) {
    %c0_i32 = arith.constant 0 : i32
    %c0_i32_0 = arith.constant 0 : i32
    %c0_i32_1 = arith.constant 0 : i32
    return %c0_i32, %c0_i32_0 : i32, i32
  }
  func.func @transform_12(%arg0: i32) -> (i32, i32) {
    %c0_i32 = arith.constant 0 : i32
    %c0_i32_0 = arith.constant 0 : i32
    %c0_i32_1 = arith.constant 0 : i32
    return %c0_i32, %c0_i32_0 : i32, i32
  }
  func.func @transform_13(%arg0: i32) -> (i32, i32) {
    %c0_i32 = arith.constant 0 : i32
    %c0_i32_0 = arith.constant 0 : i32
    %c0_i32_1 = arith.constant 0 : i32
    return %c0_i32, %c0_i32_0 : i32, i32
  }
  func.func @transform_14(%arg0: i32) -> (i32, i32) {
    %c0_i32 = arith.constant 0 : i32
    %c0_i32_0 = arith.constant 0 : i32
    %c0_i32_1 = arith.constant 0 : i32
    return %c0_i32, %c0_i32_0 : i32, i32
  }
  func.func @transform_15(%arg0: i32) -> (i32, i32, i32) {
    %c0_i32 = arith.constant 0 : i32
    %c0_i32_0 = arith.constant 0 : i32
    %c0_i32_1 = arith.constant 0 : i32
    return %arg0, %c0_i32, %c0_i32_0 : i32, i32, i32
  }
}

</mosaic_0001>

<llo_original>
// kernel: dense_net_multihead_forward.4
$region0: #{dense_net_multihead_forward.4}
  #allocation0 [shape = 'u32[]', space=smem, size = 0x4, offset = 0x4, fixed_abs, tag = 'smem constant byte address 0x4 - core index']
  #allocation1 [shape = 'u32[144,128]{1,0:T(1,128)}', space=vmem, size = 0x12000, scoped, tag = 'internal scratch']
  %s0 = inlined_call_operand.vmem [shape: f32[128,4], index: 0, kind: input, shape index: {}]
  %s1 = inlined_call_operand.vmem [shape: bf16[4,16], index: 1, kind: input, shape index: {}]
  %s2 = inlined_call_operand.vmem [shape: f32[1,16], index: 2, kind: input, shape index: {}]
  %s3 = inlined_call_operand.vmem [shape: f32[128,16], index: 3, kind: output, shape index: {}]
  %s4 = sld [smem:[#allocation0]]
  $region22: #{dense_net_multihead_forward.4} parent=0
    _
  %s6 = ssub.s32 1, %s4
  %s7 = scalar_select 0, %s6, %s4
  // Predicated region
  $region2: #{dense_net_multihead_forward.4} parent=0 // pred_check
    _
  $region3: #{dense_net_multihead_forward.4} parent=0 // pred_check_branch
    %9 = sbr.rel (0) target = $region5
  $region4: #{dense_net_multihead_forward.4} parent=0 // pred_region
    _
  $region5: #{dense_net_multihead_forward.4} parent=0 // pred_fallthru
    _
  // Predicated region
  $region6: #{dense_net_multihead_forward.4} parent=0 // pred_check
    _
  $region7: #{dense_net_multihead_forward.4} parent=0 // pred_check_branch
    %11 = sbr.rel (0) target = $region9
  $region8: #{dense_net_multihead_forward.4} parent=0 // pred_region
    _
  $region9: #{dense_net_multihead_forward.4} parent=0 // pred_fallthru
    _
  // Predicated region
  $region10: #{dense_net_multihead_forward.4} parent=0 // pred_check
    _
  $region11: #{dense_net_multihead_forward.4} parent=0 // pred_check_branch
    %13 = sbr.rel (0) target = $region13
  $region12: #{dense_net_multihead_forward.4} parent=0 // pred_region
    _
  $region13: #{dense_net_multihead_forward.4} parent=0 // pred_fallthru
    _
  %v15 = vld [vmem:[%s0] sm:$0xff]
  %v16 = vld [vmem:[%s0 + $0x8] sm:$0xff]
  %v17 = vld [vmem:[%s0 + $0x10] sm:$0xff]
  %v18 = vld [vmem:[%s0 + $0x18] sm:$0xff]
  %v19 = vld [vmem:[%s0 + $0x20] sm:$0xff]
  %v20 = vld [vmem:[%s0 + $0x28] sm:$0xff]
  %v21 = vld [vmem:[%s0 + $0x30] sm:$0xff]
  %v22 = vld [vmem:[%s0 + $0x38] sm:$0xff]
  %v23 = vld [vmem:[%s0 + $0x40] sm:$0xff]
  %v24 = vld [vmem:[%s0 + $0x48] sm:$0xff]
  %v25 = vld [vmem:[%s0 + $0x50] sm:$0xff]
  %v26 = vld [vmem:[%s0 + $0x58] sm:$0xff]
  %v27 = vld [vmem:[%s0 + $0x60] sm:$0xff]
  %v28 = vld [vmem:[%s0 + $0x68] sm:$0xff]
  %v29 = vld [vmem:[%s0 + $0x70] sm:$0xff]
  %v30 = vld [vmem:[%s0 + $0x78] sm:$0xff]
  %v31 = vpack.c.bf16 %v16, %v15
  %v32 = vpack.c.bf16 %v18, %v17
  %v33 = vpack.c.bf16 %v20, %v19
  %v34 = vpack.c.bf16 %v22, %v21
  %v35 = vpack.c.bf16 %v24, %v23
  %v36 = vpack.c.bf16 %v26, %v25
  %v37 = vpack.c.bf16 %v28, %v27
  %v38 = vpack.c.bf16 %v30, %v29
  %v39 = vld [vmem:[%s1] sm:$0x3]
  %v40 = vld [vmem:[%s2] sm:$0x1]
  %v42 = vlaneseq
  %v43 = vshrl.u32 %v42, 7
  %v44 = vsub.s32 0, %v43
  %v45 = vrot.slane %v40, %v44
  %vm47 = vcmask 31744
  %v49 = vsel %vm47, %v31, 0
  %v52 = vsel %vm47, %v32, 0
  %v55 = vsel %vm47, %v33, 0
  %v58 = vsel %vm47, %v34, 0
  %v61 = vsel %vm47, %v35, 0
  %v64 = vsel %vm47, %v36, 0
  %v67 = vsel %vm47, %v37, 0
  %v70 = vsel %vm47, %v38, 0
  %vm72 = vcmask 1041408
  %v74 = vsel %vm72, %v39, 0
  %76 = vmatprep.subr.bf16.mxu0 0
  %77 = vmatpush1.bf16.msra.mxu0 0
  %78 = vmatprep.subr.bf16.mxu0 0
  %79 = vmatpush1.bf16.msra.mxu0 0
  %80 = vmatprep.subr.bf16.mxu0 0
  %81 = vmatpush1.bf16.msra.mxu0 0
  %82 = vmatprep.subr.bf16.mxu0 0
  %83 = vmatpush1.bf16.msra.mxu0 0
  %84 = vmatprep.subr.bf16.mxu0 0
  %85 = vmatpush1.bf16.msra.mxu0 0
  %86 = vmatprep.subr.bf16.mxu0 0
  %87 = vmatpush1.bf16.msra.mxu0 0
  %88 = vmatprep.subr.bf16.mxu0 0
  %89 = vmatpush1.bf16.msra.mxu0 0
  %90 = vmatprep.subr.bf16.mxu0 0
  %91 = vmatpush1.bf16.msra.mxu0 %v74
  %92 = vmatprep.subr.bf16.mxu0 0
  %93 = vmatpush2.bf16.msra.mxu0 0
  %94 = vmatprep.subr.bf16.mxu0 0
  %95 = vmatpush2.bf16.msra.mxu0 0
  %96 = vmatprep.subr.bf16.mxu0 0
  %97 = vmatpush2.bf16.msra.mxu0 0
  %98 = vmatprep.subr.bf16.mxu0 0
  %99 = vmatpush2.bf16.msra.mxu0 0
  %100 = vmatprep.subr.bf16.mxu0 0
  %101 = vmatpush2.bf16.msra.mxu0 0
  %102 = vmatprep.subr.bf16.mxu0 0
  %103 = vmatpush2.bf16.msra.mxu0 0
  %104 = vmatprep.subr.bf16.mxu0 0
  %105 = vmatpush2.bf16.msra.mxu0 0
  %106 = vmatprep.subr.bf16.mxu0 0
  %107 = vmatpush2.bf16.msra.mxu0 0
  %108 = vmatprep.mubr.bf16.mxu0 0
  %109 = vmatmul.mubr.bf16.gmra.mxu0 %v49
  %v110 = vpop.f32.mrf.mxu0
  %v111 = vadd.f32 %v45, %v110
  %v112 = vpop.f32.mrf.mxu0
  %v113 = vpop.f32.mrf.mxu0
  %v114 = vadd.f32 %v45, %v113
  %v115 = vpop.f32.mrf.mxu0
  %116 = vmatprep.mubr.bf16.mxu0 0
  %117 = vmatmul.mubr.bf16.gmra.mxu0 %v52
  %v118 = vpop.f32.mrf.mxu0
  %v119 = vadd.f32 %v45, %v118
  %v120 = vpop.f32.mrf.mxu0
  %v121 = vpop.f32.mrf.mxu0
  %v122 = vadd.f32 %v45, %v121
  %v123 = vpop.f32.mrf.mxu0
  %124 = vmatprep.mubr.bf16.mxu0 0
  %125 = vmatmul.mubr.bf16.gmra.mxu0 %v55
  %v126 = vpop.f32.mrf.mxu0
  %v127 = vadd.f32 %v45, %v126
  %v128 = vpop.f32.mrf.mxu0
  %v129 = vpop.f32.mrf.mxu0
  %v130 = vadd.f32 %v45, %v129
  %v131 = vpop.f32.mrf.mxu0
  %132 = vmatprep.mubr.bf16.mxu0 0
  %133 = vmatmul.mubr.bf16.gmra.mxu0 %v58
  %v134 = vpop.f32.mrf.mxu0
  %v135 = vadd.f32 %v45, %v134
  %v136 = vpop.f32.mrf.mxu0
  %v137 = vpop.f32.mrf.mxu0
  %v138 = vadd.f32 %v45, %v137
  %v139 = vpop.f32.mrf.mxu0
  %140 = vmatprep.mubr.bf16.mxu0 0
  %141 = vmatmul.mubr.bf16.gmra.mxu0 %v61
  %v142 = vpop.f32.mrf.mxu0
  %v143 = vadd.f32 %v45, %v142
  %v144 = vpop.f32.mrf.mxu0
  %v145 = vpop.f32.mrf.mxu0
  %v146 = vadd.f32 %v45, %v145
  %v147 = vpop.f32.mrf.mxu0
  %148 = vmatprep.mubr.bf16.mxu0 0
  %149 = vmatmul.mubr.bf16.gmra.mxu0 %v64
  %v150 = vpop.f32.mrf.mxu0
  %v151 = vadd.f32 %v45, %v150
  %v152 = vpop.f32.mrf.mxu0
  %v153 = vpop.f32.mrf.mxu0
  %v154 = vadd.f32 %v45, %v153
  %v155 = vpop.f32.mrf.mxu0
  %156 = vmatprep.mubr.bf16.mxu0 0
  %157 = vmatmul.mubr.bf16.gmra.mxu0 %v67
  %v158 = vpop.f32.mrf.mxu0
  %v159 = vadd.f32 %v45, %v158
  %v160 = vpop.f32.mrf.mxu0
  %v161 = vpop.f32.mrf.mxu0
  %v162 = vadd.f32 %v45, %v161
  %v163 = vpop.f32.mrf.mxu0
  %164 = vmatprep.mubr.bf16.mxu0 0
  %165 = vmatmul.mubr.bf16.gmra.mxu0 %v70
  %v166 = vpop.f32.mrf.mxu0
  %v167 = vadd.f32 %v45, %v166
  %v168 = vpop.f32.mrf.mxu0
  %v169 = vpop.f32.mrf.mxu0
  %v170 = vadd.f32 %v45, %v169
  %v171 = vpop.f32.mrf.mxu0
  %172 = vdwg.mxu0
  %vm173 = vcmask 130048
  %174 = vst.msk [vmem:[%s3] sm:$0xff] %vm173, %v111
  %175 = vst.msk [vmem:[%s3 + $0x8] sm:$0xff] %vm173, %v114
  %176 = vst.msk [vmem:[%s3 + $0x10] sm:$0xff] %vm173, %v119
  %177 = vst.msk [vmem:[%s3 + $0x18] sm:$0xff] %vm173, %v122
  %178 = vst.msk [vmem:[%s3 + $0x20] sm:$0xff] %vm173, %v127
  %179 = vst.msk [vmem:[%s3 + $0x28] sm:$0xff] %vm173, %v130
  %180 = vst.msk [vmem:[%s3 + $0x30] sm:$0xff] %vm173, %v135
  %181 = vst.msk [vmem:[%s3 + $0x38] sm:$0xff] %vm173, %v138
  %182 = vst.msk [vmem:[%s3 + $0x40] sm:$0xff] %vm173, %v143
  %183 = vst.msk [vmem:[%s3 + $0x48] sm:$0xff] %vm173, %v146
  %184 = vst.msk [vmem:[%s3 + $0x50] sm:$0xff] %vm173, %v151
  %185 = vst.msk [vmem:[%s3 + $0x58] sm:$0xff] %vm173, %v154
  %186 = vst.msk [vmem:[%s3 + $0x60] sm:$0xff] %vm173, %v159
  %187 = vst.msk [vmem:[%s3 + $0x68] sm:$0xff] %vm173, %v162
  %188 = vst.msk [vmem:[%s3 + $0x70] sm:$0xff] %vm173, %v167
  %189 = vst.msk [vmem:[%s3 + $0x78] sm:$0xff] %vm173, %v170
  // Predicated region
  $region14: #{dense_net_multihead_forward.4} parent=0 // pred_check
    _
  $region15: #{dense_net_multihead_forward.4} parent=0 // pred_check_branch
    %191 = sbr.rel (0) target = $region17
  $region16: #{dense_net_multihead_forward.4} parent=0 // pred_region
    _
  $region17: #{dense_net_multihead_forward.4} parent=0 // pred_fallthru
    _
  // Predicated region
  $region18: #{dense_net_multihead_forward.4} parent=0 // pred_check
    _
  $region19: #{dense_net_multihead_forward.4} parent=0 // pred_check_branch
    %193 = sbr.rel (0) target = $region21
  $region20: #{dense_net_multihead_forward.4} parent=0 // pred_region
    _
  $region21: #{dense_net_multihead_forward.4} parent=0 // pred_fallthru
    _

// kernel: dense_net_multihead_forward.7
$region0: #{dense_net_multihead_forward.7}
  #allocation0 [shape = 'u32[]', space=smem, size = 0x4, offset = 0x4, fixed_abs, tag = 'smem constant byte address 0x4 - core index']
  #allocation1 [shape = 'u32[144,128]{1,0:T(1,128)}', space=vmem, size = 0x12000, scoped, tag = 'internal scratch']
  %s0 = inlined_call_operand.vmem [shape: f32[128,16], index: 0, kind: input, shape index: {}]
  %s1 = inlined_call_operand.vmem [shape: bf16[16,8], index: 1, kind: input, shape index: {}]
  %s2 = inlined_call_operand.vmem [shape: f32[1,8], index: 2, kind: input, shape index: {}]
  %s3 = inlined_call_operand.vmem [shape: f32[128,8], index: 3, kind: output, shape index: {}]
  %s4 = sld [smem:[#allocation0]]
  $region22: #{dense_net_multihead_forward.7} parent=0
    _
  %s6 = ssub.s32 1, %s4
  %s7 = scalar_select 0, %s6, %s4
  // Predicated region
  $region2: #{dense_net_multihead_forward.7} parent=0 // pred_check
    _
  $region3: #{dense_net_multihead_forward.7} parent=0 // pred_check_branch
    %9 = sbr.rel (0) target = $region5
  $region4: #{dense_net_multihead_forward.7} parent=0 // pred_region
    _
  $region5: #{dense_net_multihead_forward.7} parent=0 // pred_fallthru
    _
  // Predicated region
  $region6: #{dense_net_multihead_forward.7} parent=0 // pred_check
    _
  $region7: #{dense_net_multihead_forward.7} parent=0 // pred_check_branch
    %11 = sbr.rel (0) target = $region9
  $region8: #{dense_net_multihead_forward.7} parent=0 // pred_region
    _
  $region9: #{dense_net_multihead_forward.7} parent=0 // pred_fallthru
    _
  // Predicated region
  $region10: #{dense_net_multihead_forward.7} parent=0 // pred_check
    _
  $region11: #{dense_net_multihead_forward.7} parent=0 // pred_check_branch
    %13 = sbr.rel (0) target = $region13
  $region12: #{dense_net_multihead_forward.7} parent=0 // pred_region
    _
  $region13: #{dense_net_multihead_forward.7} parent=0 // pred_fallthru
    _
  %v15 = vld [vmem:[%s0] sm:$0xff]
  %v16 = vld [vmem:[%s0 + $0x8] sm:$0xff]
  %v17 = vld [vmem:[%s0 + $0x10] sm:$0xff]
  %v18 = vld [vmem:[%s0 + $0x18] sm:$0xff]
  %v19 = vld [vmem:[%s0 + $0x20] sm:$0xff]
  %v20 = vld [vmem:[%s0 + $0x28] sm:$0xff]
  %v21 = vld [vmem:[%s0 + $0x30] sm:$0xff]
  %v22 = vld [vmem:[%s0 + $0x38] sm:$0xff]
  %v23 = vld [vmem:[%s0 + $0x40] sm:$0xff]
  %v24 = vld [vmem:[%s0 + $0x48] sm:$0xff]
  %v25 = vld [vmem:[%s0 + $0x50] sm:$0xff]
  %v26 = vld [vmem:[%s0 + $0x58] sm:$0xff]
  %v27 = vld [vmem:[%s0 + $0x60] sm:$0xff]
  %v28 = vld [vmem:[%s0 + $0x68] sm:$0xff]
  %v29 = vld [vmem:[%s0 + $0x70] sm:$0xff]
  %v30 = vld [vmem:[%s0 + $0x78] sm:$0xff]
  %v31 = vpack.c.bf16 %v16, %v15
  %v32 = vpack.c.bf16 %v18, %v17
  %v33 = vpack.c.bf16 %v20, %v19
  %v34 = vpack.c.bf16 %v22, %v21
  %v35 = vpack.c.bf16 %v24, %v23
  %v36 = vpack.c.bf16 %v26, %v25
  %v37 = vpack.c.bf16 %v28, %v27
  %v38 = vpack.c.bf16 %v30, %v29
  %v39 = vld [vmem:[%s1] sm:$0xf]
  %v40 = vld [vmem:[%s1 + $0x4] sm:$0xf]
  %v41 = vld [vmem:[%s2] sm:$0x1]
  %v43 = vlaneseq
  %v44 = vshrl.u32 %v43, 7
  %v45 = vsub.s32 0, %v44
  %v46 = vrot.slane %v41, %v45
  %v50 = vunpack.c.l.b16 %v39
  %v51 = vunpack.c.l.b16 %v40
  %v52 = vpack.c.b16 %v51, %v50
  %vm54 = vcmask 130048
  %v56 = vsel %vm54, %v31, 0
  %v59 = vsel %vm54, %v32, 0
  %v62 = vsel %vm54, %v33, 0
  %v65 = vsel %vm54, %v34, 0
  %v68 = vsel %vm54, %v35, 0
  %v71 = vsel %vm54, %v36, 0
  %v74 = vsel %vm54, %v37, 0
  %v77 = vsel %vm54, %v38, 0
  %79 = vmatprep.subr.bf16.mxu0 0
  %80 = vmatpush1.bf16.msra.mxu0 0
  %81 = vmatprep.subr.bf16.mxu0 0
  %82 = vmatpush1.bf16.msra.mxu0 0
  %83 = vmatprep.subr.bf16.mxu0 0
  %84 = vmatpush1.bf16.msra.mxu0 0
  %85 = vmatprep.subr.bf16.mxu0 0
  %86 = vmatpush1.bf16.msra.mxu0 0
  %87 = vmatprep.subr.bf16.mxu0 0
  %88 = vmatpush1.bf16.msra.mxu0 0
  %89 = vmatprep.subr.bf16.mxu0 0
  %90 = vmatpush1.bf16.msra.mxu0 0
  %91 = vmatprep.subr.bf16.mxu0 0
  %92 = vmatpush1.bf16.msra.mxu0 0
  %93 = vmatprep.subr.bf16.mxu0 0
  %94 = vmatpush1.bf16.msra.mxu0 %v52
  %95 = vmatprep.subr.bf16.mxu0 0
  %96 = vmatpush2.bf16.msra.mxu0 0
  %97 = vmatprep.subr.bf16.mxu0 0
  %98 = vmatpush2.bf16.msra.mxu0 0
  %99 = vmatprep.subr.bf16.mxu0 0
  %100 = vmatpush2.bf16.msra.mxu0 0
  %101 = vmatprep.subr.bf16.mxu0 0
  %102 = vmatpush2.bf16.msra.mxu0 0
  %103 = vmatprep.subr.bf16.mxu0 0
  %104 = vmatpush2.bf16.msra.mxu0 0
  %105 = vmatprep.subr.bf16.mxu0 0
  %106 = vmatpush2.bf16.msra.mxu0 0
  %107 = vmatprep.subr.bf16.mxu0 0
  %108 = vmatpush2.bf16.msra.mxu0 0
  %109 = vmatprep.subr.bf16.mxu0 0
  %110 = vmatpush2.bf16.msra.mxu0 0
  %111 = vmatprep.mubr.bf16.mxu0 0
  %112 = vmatmul.mubr.bf16.gmra.mxu0 %v56
  %v113 = vpop.f32.mrf.mxu0
  %v114 = vadd.f32 %v46, %v113
  %v115 = vpop.f32.mrf.mxu0
  %v116 = vpop.f32.mrf.mxu0
  %v117 = vadd.f32 %v46, %v116
  %v118 = vpop.f32.mrf.mxu0
  %119 = vmatprep.mubr.bf16.mxu0 0
  %120 = vmatmul.mubr.bf16.gmra.mxu0 %v59
  %v121 = vpop.f32.mrf.mxu0
  %v122 = vadd.f32 %v46, %v121
  %v123 = vpop.f32.mrf.mxu0
  %v124 = vpop.f32.mrf.mxu0
  %v125 = vadd.f32 %v46, %v124
  %v126 = vpop.f32.mrf.mxu0
  %127 = vmatprep.mubr.bf16.mxu0 0
  %128 = vmatmul.mubr.bf16.gmra.mxu0 %v62
  %v129 = vpop.f32.mrf.mxu0
  %v130 = vadd.f32 %v46, %v129
  %v131 = vpop.f32.mrf.mxu0
  %v132 = vpop.f32.mrf.mxu0
  %v133 = vadd.f32 %v46, %v132
  %v134 = vpop.f32.mrf.mxu0
  %135 = vmatprep.mubr.bf16.mxu0 0
  %136 = vmatmul.mubr.bf16.gmra.mxu0 %v65
  %v137 = vpop.f32.mrf.mxu0
  %v138 = vadd.f32 %v46, %v137
  %v139 = vpop.f32.mrf.mxu0
  %v140 = vpop.f32.mrf.mxu0
  %v141 = vadd.f32 %v46, %v140
  %v142 = vpop.f32.mrf.mxu0
  %143 = vmatprep.mubr.bf16.mxu0 0
  %144 = vmatmul.mubr.bf16.gmra.mxu0 %v68
  %v145 = vpop.f32.mrf.mxu0
  %v146 = vadd.f32 %v46, %v145
  %v147 = vpop.f32.mrf.mxu0
  %v148 = vpop.f32.mrf.mxu0
  %v149 = vadd.f32 %v46, %v148
  %v150 = vpop.f32.mrf.mxu0
  %151 = vmatprep.mubr.bf16.mxu0 0
  %152 = vmatmul.mubr.bf16.gmra.mxu0 %v71
  %v153 = vpop.f32.mrf.mxu0
  %v154 = vadd.f32 %v46, %v153
  %v155 = vpop.f32.mrf.mxu0
  %v156 = vpop.f32.mrf.mxu0
  %v157 = vadd.f32 %v46, %v156
  %v158 = vpop.f32.mrf.mxu0
  %159 = vmatprep.mubr.bf16.mxu0 0
  %160 = vmatmul.mubr.bf16.gmra.mxu0 %v74
  %v161 = vpop.f32.mrf.mxu0
  %v162 = vadd.f32 %v46, %v161
  %v163 = vpop.f32.mrf.mxu0
  %v164 = vpop.f32.mrf.mxu0
  %v165 = vadd.f32 %v46, %v164
  %v166 = vpop.f32.mrf.mxu0
  %167 = vmatprep.mubr.bf16.mxu0 0
  %168 = vmatmul.mubr.bf16.gmra.mxu0 %v77
  %v169 = vpop.f32.mrf.mxu0
  %v170 = vadd.f32 %v46, %v169
  %v171 = vpop.f32.mrf.mxu0
  %v172 = vpop.f32.mrf.mxu0
  %v173 = vadd.f32 %v46, %v172
  %v174 = vpop.f32.mrf.mxu0
  %175 = vdwg.mxu0
  %vm176 = vcmask 64512
  %177 = vst.msk [vmem:[%s3] sm:$0xff] %vm176, %v114
  %178 = vst.msk [vmem:[%s3 + $0x8] sm:$0xff] %vm176, %v117
  %179 = vst.msk [vmem:[%s3 + $0x10] sm:$0xff] %vm176, %v122
  %180 = vst.msk [vmem:[%s3 + $0x18] sm:$0xff] %vm176, %v125
  %181 = vst.msk [vmem:[%s3 + $0x20] sm:$0xff] %vm176, %v130
  %182 = vst.msk [vmem:[%s3 + $0x28] sm:$0xff] %vm176, %v133
  %183 = vst.msk [vmem:[%s3 + $0x30] sm:$0xff] %vm176, %v138
  %184 = vst.msk [vmem:[%s3 + $0x38] sm:$0xff] %vm176, %v141
  %185 = vst.msk [vmem:[%s3 + $0x40] sm:$0xff] %vm176, %v146
  %186 = vst.msk [vmem:[%s3 + $0x48] sm:$0xff] %vm176, %v149
  %187 = vst.msk [vmem:[%s3 + $0x50] sm:$0xff] %vm176, %v154
  %188 = vst.msk [vmem:[%s3 + $0x58] sm:$0xff] %vm176, %v157
  %189 = vst.msk [vmem:[%s3 + $0x60] sm:$0xff] %vm176, %v162
  %190 = vst.msk [vmem:[%s3 + $0x68] sm:$0xff] %vm176, %v165
  %191 = vst.msk [vmem:[%s3 + $0x70] sm:$0xff] %vm176, %v170
  %192 = vst.msk [vmem:[%s3 + $0x78] sm:$0xff] %vm176, %v173
  // Predicated region
  $region14: #{dense_net_multihead_forward.7} parent=0 // pred_check
    _
  $region15: #{dense_net_multihead_forward.7} parent=0 // pred_check_branch
    %194 = sbr.rel (0) target = $region17
  $region16: #{dense_net_multihead_forward.7} parent=0 // pred_region
    _
  $region17: #{dense_net_multihead_forward.7} parent=0 // pred_fallthru
    _
  // Predicated region
  $region18: #{dense_net_multihead_forward.7} parent=0 // pred_check
    _
  $region19: #{dense_net_multihead_forward.7} parent=0 // pred_check_branch
    %196 = sbr.rel (0) target = $region21
  $region20: #{dense_net_multihead_forward.7} parent=0 // pred_region
    _
  $region21: #{dense_net_multihead_forward.7} parent=0 // pred_fallthru
    _

// kernel: dense_net_multihead_forward.5
$region0: #{dense_net_multihead_forward.5}
  #allocation0 [shape = 'u32[]', space=smem, size = 0x4, offset = 0x4, fixed_abs, tag = 'smem constant byte address 0x4 - core index']
  #allocation1 [shape = 'u32[144,128]{1,0:T(1,128)}', space=vmem, size = 0x12000, scoped, tag = 'internal scratch']
  %s0 = inlined_call_operand.vmem [shape: f32[2,64,16], index: 0, kind: input, shape index: {}]
  %s1 = inlined_call_operand.vmem [shape: bf16[16,64], index: 1, kind: input, shape index: {}]
  %s2 = inlined_call_operand.vmem [shape: f32[1,64], index: 2, kind: input, shape index: {}]
  %s3 = inlined_call_operand.vmem [shape: bf16[144,4], index: 3, kind: input, shape index: {}]
  %s4 = inlined_call_operand.vmem [shape: f32[1,4], index: 4, kind: input, shape index: {}]
  %s5 = inlined_call_operand.vmem [shape: bf16[16,4], index: 5, kind: input, shape index: {}]
  %s6 = inlined_call_operand.vmem [shape: f32[1,4], index: 6, kind: input, shape index: {}]
  %s7 = inlined_call_operand.vmem [shape: bf16[20,80], index: 7, kind: input, shape index: {}]
  %s8 = inlined_call_operand.vmem [shape: f32[1,80], index: 8, kind: input, shape index: {}]
  %s9 = inlined_call_operand.vmem [shape: bf16[180,4], index: 9, kind: input, shape index: {}]
  %s10 = inlined_call_operand.vmem [shape: f32[1,4], index: 10, kind: input, shape index: {}]
  %s11 = inlined_call_operand.vmem [shape: bf16[20,4], index: 11, kind: input, shape index: {}]
  %s12 = inlined_call_operand.vmem [shape: f32[1,4], index: 12, kind: input, shape index: {}]
  %s13 = inlined_call_operand.vmem [shape: bf16[24,16], index: 13, kind: input, shape index: {}]
  %s14 = inlined_call_operand.vmem [shape: f32[1,16], index: 14, kind: input, shape index: {}]
  %s15 = inlined_call_operand.vmem [shape: f32[2,64,16], index: 15, kind: output, shape index: {}]
  %s16 = sld [smem:[#allocation0]]
  $region93: #{dense_net_multihead_forward.5} parent=0
    _
  %s18 = ssub.s32 1, %s16
  %s19 = scalar_select 0, %s18, %s16
  loop: start=0, step=1, limit=4
  $region2: #{dense_net_multihead_forward.5} parent=0 // loop_pre_header
    _
  $region3: #{dense_net_multihead_forward.5} parent=0 // loop_header
    %s21 = sphi 0, %s25
    %p22 = scmp.ge.s32.totalorder %s21, 4
    %s31 = sphi 0, %s33
    %s34 = sphi 0, %s31
    %s35 = sphi 0, %s34
    %s51 = sphi 0, %s35
    %s55 = sphi 0, %s55
    %s57 = sphi 0, %s55
    %s58 = sphi 0, %s57
    %s72 = sphi 0, %s58
    %s76 = sphi 0, %s76
    %s78 = sphi 0, %s76
    %s79 = sphi 0, %s78
    %s93 = sphi 0, %s79
    %s97 = sphi 0, %s97
    %s99 = sphi 0, %s97
    %s100 = sphi 0, %s99
    %s114 = sphi 0, %s100
    %s118 = sphi 0, %s118
    %s120 = sphi 0, %s118
    %s121 = sphi 0, %s120
    %s135 = sphi 0, %s121
    %s139 = sphi 0, %s139
    %s141 = sphi 0, %s139
    %s142 = sphi 0, %s141
    %s156 = sphi 0, %s142
    %s160 = sphi 0, %s160
    %s162 = sphi 0, %s160
    %s163 = sphi 0, %s162
    %s177 = sphi 0, %s163
    %s181 = sphi 0, %s181
    %s183 = sphi 0, %s181
    %s184 = sphi 0, %s183
    %s198 = sphi 0, %s184
    %s202 = sphi 0, %s202
    %s204 = sphi 0, %s202
    %s205 = sphi 0, %s204
    %s219 = sphi 0, %s205
    %s223 = sphi 0, %s223
    %s225 = sphi 0, %s223
    %s226 = sphi 0, %s225
    %s240 = sphi 0, %s226
    %s244 = sphi 0, %s244
    %s246 = sphi 0, %s244
    %s247 = sphi 0, %s246
    %s261 = sphi 0, %s247
    %s265 = sphi 0, %s265
    %s267 = sphi 0, %s265
    %s268 = sphi 0, %s267
    %s282 = sphi 0, %s268
    %s286 = sphi 0, %s286
    %s288 = sphi 0, %s286
    %s289 = sphi 0, %s288
    %s303 = sphi 0, %s289
    %s307 = sphi 0, %s307
    %s309 = sphi 0, %s307
    %s310 = sphi 0, %s309
    %s324 = sphi 0, %s310
    %s328 = sphi 0, %s328
    %s330 = sphi 0, %s328
    %s331 = sphi 0, %s330
    %s345 = sphi 0, %s331
    %s351 = sphi 0, %s353
    %s354 = sphi 0, %s351
    %s355 = sphi 0, %s354
    %s371 = sphi 0, %s355
  $region4: #{dense_net_multihead_forward.5} parent=0 // loop_header_branch
    %24 = sbr.rel (%p22) target = $region8
  $region5: #{dense_net_multihead_forward.5} parent=0 // loop_body
    %s26 = ssub.s32 %s21, 1
    %s27 = ssub.s32 %s21, 2
    %s28 = sadd.s32 %s21, 1
    %s29 = ssub.s32 %s21, %s28
    %p30 = scmp.eq.s32.totalorder %s29, 0
    %s32 = sadd.s32 %s31, 1
    %s33 = scalar_select %p30, %s31, %s32
    %p36 = pneg %p30
    %p37 = scmp.eq.s32.totalorder %s21, 1
    %p38 = por %p36, %p37
    %p39 = scmp.ne.s32.totalorder %s31, %s34
    %p40 = scmp.eq.s32.totalorder %s21, 0
    %p41 = por %p39, %p40
    %p42 = scmp.ne.s32.totalorder %s31, %s34
    %p43 = scmp.eq.s32.totalorder %s26, 1
    %p44 = por %p42, %p43
    %p45 = scmp.ne.s32.totalorder %s34, %s35
    %p46 = scmp.eq.s32.totalorder %s26, 0
    %p47 = por %p45, %p46
    %p48 = scmp.ne.s32.totalorder %s34, %s35
    %p49 = scmp.eq.s32.totalorder %s27, 1
    %p50 = por %p48, %p49
    %p52 = scmp.ne.s32.totalorder %s35, %s51
    %p53 = scmp.eq.s32.totalorder %s27, 0
    %p54 = por %p52, %p53
    %s56 = sadd.s32 %s55, 1
    %p59 = scmp.eq.s32.totalorder %s21, 1
    %p60 = scmp.ne.s32.totalorder %s55, %s57
    %p61 = scmp.eq.s32.totalorder %s21, 0
    %p62 = por %p60, %p61
    %p63 = scmp.ne.s32.totalorder %s55, %s57
    %p64 = scmp.eq.s32.totalorder %s26, 1
    %p65 = por %p63, %p64
    %p66 = scmp.ne.s32.totalorder %s57, %s58
    %p67 = scmp.eq.s32.totalorder %s26, 0
    %p68 = por %p66, %p67
    %p69 = scmp.ne.s32.totalorder %s57, %s58
    %p70 = scmp.eq.s32.totalorder %s27, 1
    %p71 = por %p69, %p70
    %p73 = scmp.ne.s32.totalorder %s58, %s72
    %p74 = scmp.eq.s32.totalorder %s27, 0
    %p75 = por %p73, %p74
    %s77 = sadd.s32 %s76, 1
    %p80 = scmp.eq.s32.totalorder %s21, 1
    %p81 = scmp.ne.s32.totalorder %s76, %s78
    %p82 = scmp.eq.s32.totalorder %s21, 0
    %p83 = por %p81, %p82
    %p84 = scmp.ne.s32.totalorder %s76, %s78
    %p85 = scmp.eq.s32.totalorder %s26, 1
    %p86 = por %p84, %p85
    %p87 = scmp.ne.s32.totalorder %s78, %s79
    %p88 = scmp.eq.s32.totalorder %s26, 0
    %p89 = por %p87, %p88
    %p90 = scmp.ne.s32.totalorder %s78, %s79
    %p91 = scmp.eq.s32.totalorder %s27, 1
    %p92 = por %p90, %p91
    %p94 = scmp.ne.s32.totalorder %s79, %s93
    %p95 = scmp.eq.s32.totalorder %s27, 0
    %p96 = por %p94, %p95
    %s98 = sadd.s32 %s97, 1
    %p101 = scmp.eq.s32.totalorder %s21, 1
    %p102 = scmp.ne.s32.totalorder %s97, %s99
    %p103 = scmp.eq.s32.totalorder %s21, 0
    %p104 = por %p102, %p103
    %p105 = scmp.ne.s32.totalorder %s97, %s99
    %p106 = scmp.eq.s32.totalorder %s26, 1
    %p107 = por %p105, %p106
    %p108 = scmp.ne.s32.totalorder %s99, %s100
    %p109 = scmp.eq.s32.totalorder %s26, 0
    %p110 = por %p108, %p109
    %p111 = scmp.ne.s32.totalorder %s99, %s100
    %p112 = scmp.eq.s32.totalorder %s27, 1
    %p113 = por %p111, %p112
    %p115 = scmp.ne.s32.totalorder %s100, %s114
    %p116 = scmp.eq.s32.totalorder %s27, 0
    %p117 = por %p115, %p116
    %s119 = sadd.s32 %s118, 1
    %p122 = scmp.eq.s32.totalorder %s21, 1
    %p123 = scmp.ne.s32.totalorder %s118, %s120
    %p124 = scmp.eq.s32.totalorder %s21, 0
    %p125 = por %p123, %p124
    %p126 = scmp.ne.s32.totalorder %s118, %s120
    %p127 = scmp.eq.s32.totalorder %s26, 1
    %p128 = por %p126, %p127
    %p129 = scmp.ne.s32.totalorder %s120, %s121
    %p130 = scmp.eq.s32.totalorder %s26, 0
    %p131 = por %p129, %p130
    %p132 = scmp.ne.s32.totalorder %s120, %s121
    %p133 = scmp.eq.s32.totalorder %s27, 1
    %p134 = por %p132, %p133
    %p136 = scmp.ne.s32.totalorder %s121, %s135
    %p137 = scmp.eq.s32.totalorder %s27, 0
    %p138 = por %p136, %p137
    %s140 = sadd.s32 %s139, 1
    %p143 = scmp.eq.s32.totalorder %s21, 1
    %p144 = scmp.ne.s32.totalorder %s139, %s141
    %p145 = scmp.eq.s32.totalorder %s21, 0
    %p146 = por %p144, %p145
    %p147 = scmp.ne.s32.totalorder %s139, %s141
    %p148 = scmp.eq.s32.totalorder %s26, 1
    %p149 = por %p147, %p148
    %p150 = scmp.ne.s32.totalorder %s141, %s142
    %p151 = scmp.eq.s32.totalorder %s26, 0
    %p152 = por %p150, %p151
    %p153 = scmp.ne.s32.totalorder %s141, %s142
    %p154 = scmp.eq.s32.totalorder %s27, 1
    %p155 = por %p153, %p154
    %p157 = scmp.ne.s32.totalorder %s142, %s156
    %p158 = scmp.eq.s32.totalorder %s27, 0
    %p159 = por %p157, %p158
    %s161 = sadd.s32 %s160, 1
    %p164 = scmp.eq.s32.totalorder %s21, 1
    %p165 = scmp.ne.s32.totalorder %s160, %s162
    %p166 = scmp.eq.s32.totalorder %s21, 0
    %p167 = por %p165, %p166
    %p168 = scmp.ne.s32.totalorder %s160, %s162
    %p169 = scmp.eq.s32.totalorder %s26, 1
    %p170 = por %p168, %p169
    %p171 = scmp.ne.s32.totalorder %s162, %s163
    %p172 = scmp.eq.s32.totalorder %s26, 0
    %p173 = por %p171, %p172
    %p174 = scmp.ne.s32.totalorder %s162, %s163
    %p175 = scmp.eq.s32.totalorder %s27, 1
    %p176 = por %p174, %p175
    %p178 = scmp.ne.s32.totalorder %s163, %s177
    %p179 = scmp.eq.s32.totalorder %s27, 0
    %p180 = por %p178, %p179
    %s182 = sadd.s32 %s181, 1
    %p185 = scmp.eq.s32.totalorder %s21, 1
    %p186 = scmp.ne.s32.totalorder %s181, %s183
    %p187 = scmp.eq.s32.totalorder %s21, 0
    %p188 = por %p186, %p187
    %p189 = scmp.ne.s32.totalorder %s181, %s183
    %p190 = scmp.eq.s32.totalorder %s26, 1
    %p191 = por %p189, %p190
    %p192 = scmp.ne.s32.totalorder %s183, %s184
    %p193 = scmp.eq.s32.totalorder %s26, 0
    %p194 = por %p192, %p193
    %p195 = scmp.ne.s32.totalorder %s183, %s184
    %p196 = scmp.eq.s32.totalorder %s27, 1
    %p197 = por %p195, %p196
    %p199 = scmp.ne.s32.totalorder %s184, %s198
    %p200 = scmp.eq.s32.totalorder %s27, 0
    %p201 = por %p199, %p200
    %s203 = sadd.s32 %s202, 1
    %p206 = scmp.eq.s32.totalorder %s21, 1
    %p207 = scmp.ne.s32.totalorder %s202, %s204
    %p208 = scmp.eq.s32.totalorder %s21, 0
    %p209 = por %p207, %p208
    %p210 = scmp.ne.s32.totalorder %s202, %s204
    %p211 = scmp.eq.s32.totalorder %s26, 1
    %p212 = por %p210, %p211
    %p213 = scmp.ne.s32.totalorder %s204, %s205
    %p214 = scmp.eq.s32.totalorder %s26, 0
    %p215 = por %p213, %p214
    %p216 = scmp.ne.s32.totalorder %s204, %s205
    %p217 = scmp.eq.s32.totalorder %s27, 1
    %p218 = por %p216, %p217
    %p220 = scmp.ne.s32.totalorder %s205, %s219
    %p221 = scmp.eq.s32.totalorder %s27, 0
    %p222 = por %p220, %p221
    %s224 = sadd.s32 %s223, 1
    %p227 = scmp.eq.s32.totalorder %s21, 1
    %p228 = scmp.ne.s32.totalorder %s223, %s225
    %p229 = scmp.eq.s32.totalorder %s21, 0
    %p230 = por %p228, %p229
    %p231 = scmp.ne.s32.totalorder %s223, %s225
    %p232 = scmp.eq.s32.totalorder %s26, 1
    %p233 = por %p231, %p232
    %p234 = scmp.ne.s32.totalorder %s225, %s226
    %p235 = scmp.eq.s32.totalorder %s26, 0
    %p236 = por %p234, %p235
    %p237 = scmp.ne.s32.totalorder %s225, %s226
    %p238 = scmp.eq.s32.totalorder %s27, 1
    %p239 = por %p237, %p238
    %p241 = scmp.ne.s32.totalorder %s226, %s240
    %p242 = scmp.eq.s32.totalorder %s27, 0
    %p243 = por %p241, %p242
    %s245 = sadd.s32 %s244, 1
    %p248 = scmp.eq.s32.totalorder %s21, 1
    %p249 = scmp.ne.s32.totalorder %s244, %s246
    %p250 = scmp.eq.s32.totalorder %s21, 0
    %p251 = por %p249, %p250
    %p252 = scmp.ne.s32.totalorder %s244, %s246
    %p253 = scmp.eq.s32.totalorder %s26, 1
    %p254 = por %p252, %p253
    %p255 = scmp.ne.s32.totalorder %s246, %s247
    %p256 = scmp.eq.s32.totalorder %s26, 0
    %p257 = por %p255, %p256
    %p258 = scmp.ne.s32.totalorder %s246, %s247
    %p259 = scmp.eq.s32.totalorder %s27, 1
    %p260 = por %p258, %p259
    %p262 = scmp.ne.s32.totalorder %s247, %s261
    %p263 = scmp.eq.s32.totalorder %s27, 0
    %p264 = por %p262, %p263
    %s266 = sadd.s32 %s265, 1
    %p269 = scmp.eq.s32.totalorder %s21, 1
    %p270 = scmp.ne.s32.totalorder %s265, %s267
    %p271 = scmp.eq.s32.totalorder %s21, 0
    %p272 = por %p270, %p271
    %p273 = scmp.ne.s32.totalorder %s265, %s267
    %p274 = scmp.eq.s32.totalorder %s26, 1
    %p275 = por %p273, %p274
    %p276 = scmp.ne.s32.totalorder %s267, %s268
    %p277 = scmp.eq.s32.totalorder %s26, 0
    %p278 = por %p276, %p277
    %p279 = scmp.ne.s32.totalorder %s267, %s268
    %p280 = scmp.eq.s32.totalorder %s27, 1
    %p281 = por %p279, %p280
    %p283 = scmp.ne.s32.totalorder %s268, %s282
    %p284 = scmp.eq.s32.totalorder %s27, 0
    %p285 = por %p283, %p284
    %s287 = sadd.s32 %s286, 1
    %p290 = scmp.eq.s32.totalorder %s21, 1
    %p291 = scmp.ne.s32.totalorder %s286, %s288
    %p292 = scmp.eq.s32.totalorder %s21, 0
    %p293 = por %p291, %p292
    %p294 = scmp.ne.s32.totalorder %s286, %s288
    %p295 = scmp.eq.s32.totalorder %s26, 1
    %p296 = por %p294, %p295
    %p297 = scmp.ne.s32.totalorder %s288, %s289
    %p298 = scmp.eq.s32.totalorder %s26, 0
    %p299 = por %p297, %p298
    %p300 = scmp.ne.s32.totalorder %s288, %s289
    %p301 = scmp.eq.s32.totalorder %s27, 1
    %p302 = por %p300, %p301
    %p304 = scmp.ne.s32.totalorder %s289, %s303
    %p305 = scmp.eq.s32.totalorder %s27, 0
    %p306 = por %p304, %p305
    %s308 = sadd.s32 %s307, 1
    %p311 = scmp.eq.s32.totalorder %s21, 1
    %p312 = scmp.ne.s32.totalorder %s307, %s309
    %p313 = scmp.eq.s32.totalorder %s21, 0
    %p314 = por %p312, %p313
    %p315 = scmp.ne.s32.totalorder %s307, %s309
    %p316 = scmp.eq.s32.totalorder %s26, 1
    %p317 = por %p315, %p316
    %p318 = scmp.ne.s32.totalorder %s309, %s310
    %p319 = scmp.eq.s32.totalorder %s26, 0
    %p320 = por %p318, %p319
    %p321 = scmp.ne.s32.totalorder %s309, %s310
    %p322 = scmp.eq.s32.totalorder %s27, 1
    %p323 = por %p321, %p322
    %p325 = scmp.ne.s32.totalorder %s310, %s324
    %p326 = scmp.eq.s32.totalorder %s27, 0
    %p327 = por %p325, %p326
    %s329 = sadd.s32 %s328, 1
    %p332 = scmp.eq.s32.totalorder %s21, 1
    %p333 = scmp.ne.s32.totalorder %s328, %s330
    %p334 = scmp.eq.s32.totalorder %s21, 0
    %p335 = por %p333, %p334
    %p336 = scmp.ne.s32.totalorder %s328, %s330
    %p337 = scmp.eq.s32.totalorder %s26, 1
    %p338 = por %p336, %p337
    %p339 = scmp.ne.s32.totalorder %s330, %s331
    %p340 = scmp.eq.s32.totalorder %s26, 0
    %p341 = por %p339, %p340
    %p342 = scmp.ne.s32.totalorder %s330, %s331
    %p343 = scmp.eq.s32.totalorder %s27, 1
    %p344 = por %p342, %p343
    %p346 = scmp.ne.s32.totalorder %s331, %s345
    %p347 = scmp.eq.s32.totalorder %s27, 0
    %p348 = por %p346, %p347
    %s349 = ssub.s32 %s21, %s28
    %p350 = scmp.eq.s32.totalorder %s349, 0
    %s352 = sadd.s32 %s351, 1
    %s353 = scalar_select %p350, %s351, %s352
    %p356 = pneg %p350
    %p357 = scmp.eq.s32.totalorder %s21, 1
    %p358 = por %p356, %p357
    %p359 = scmp.ne.s32.totalorder %s351, %s354
    %p360 = scmp.eq.s32.totalorder %s21, 0
    %p361 = por %p359, %p360
    %p362 = scmp.ne.s32.totalorder %s351, %s354
    %p363 = scmp.eq.s32.totalorder %s26, 1
    %p364 = por %p362, %p363
    %p365 = scmp.ne.s32.totalorder %s354, %s355
    %p366 = scmp.eq.s32.totalorder %s26, 0
    %p367 = por %p365, %p366
    %p368 = scmp.ne.s32.totalorder %s354, %s355
    %p369 = scmp.eq.s32.totalorder %s27, 1
    %p370 = por %p368, %p369
    %p372 = scmp.ne.s32.totalorder %s355, %s371
    %p373 = scmp.eq.s32.totalorder %s27, 0
    %p374 = por %p372, %p373
    %p375 = scmp.le.s32.totalorder 1, %s21
    %p376 = scmp.lt.s32.totalorder %s21, 3
    %p377 = pnand %p375, %p376
    %p378 = pneg %p377
    // Predicated region
    $region9: #{dense_net_multihead_forward.5} parent=5 // pred_check
      _
    $region10: #{dense_net_multihead_forward.5} parent=5 // pred_check_branch
      %380 = sbr.rel (%p377) target = $region12
    $region11: #{dense_net_multihead_forward.5} parent=5 // pred_region
      %s381 = ssub.s32 %s21, 1
      // Predicated region
      $region13: #{dense_net_multihead_forward.5} parent=11 // pred_check
        %p382 = pneg %p68
      $region14: #{dense_net_multihead_forward.5} parent=11 // pred_check_branch
        %384 = sbr.rel (%p382) target = $region16
      $region15: #{dense_net_multihead_forward.5} parent=11 // pred_region
        _
      $region16: #{dense_net_multihead_forward.5} parent=11 // pred_fallthru
        _
      // Predicated region
      $region17: #{dense_net_multihead_forward.5} parent=11 // pred_check
        %p385 = pneg %p89
      $region18: #{dense_net_multihead_forward.5} parent=11 // pred_check_branch
        %387 = sbr.rel (%p385) target = $region20
      $region19: #{dense_net_multihead_forward.5} parent=11 // pred_region
        _
      $region20: #{dense_net_multihead_forward.5} parent=11 // pred_fallthru
        _
      // Predicated region
      $region21: #{dense_net_multihead_forward.5} parent=11 // pred_check
        %p388 = pneg %p110
      $region22: #{dense_net_multihead_forward.5} parent=11 // pred_check_branch
        %390 = sbr.rel (%p388) target = $region24
      $region23: #{dense_net_multihead_forward.5} parent=11 // pred_region
        _
      $region24: #{dense_net_multihead_forward.5} parent=11 // pred_fallthru
        _
      // Predicated region
      $region25: #{dense_net_multihead_forward.5} parent=11 // pred_check
        %p391 = pneg %p131
      $region26: #{dense_net_multihead_forward.5} parent=11 // pred_check_branch
        %393 = sbr.rel (%p391) target = $region28
      $region27: #{dense_net_multihead_forward.5} parent=11 // pred_region
        _
      $region28: #{dense_net_multihead_forward.5} parent=11 // pred_fallthru
        _
      // Predicated region
      $region29: #{dense_net_multihead_forward.5} parent=11 // pred_check
        %p394 = pneg %p152
      $region30: #{dense_net_multihead_forward.5} parent=11 // pred_check_branch
        %396 = sbr.rel (%p394) target = $region32
      $region31: #{dense_net_multihead_forward.5} parent=11 // pred_region
        _
      $region32: #{dense_net_multihead_forward.5} parent=11 // pred_fallthru
        _
      // Predicated region
      $region33: #{dense_net_multihead_forward.5} parent=11 // pred_check
        %p397 = pneg %p173
      $region34: #{dense_net_multihead_forward.5} parent=11 // pred_check_branch
        %399 = sbr.rel (%p397) target = $region36
      $region35: #{dense_net_multihead_forward.5} parent=11 // pred_region
        _
      $region36: #{dense_net_multihead_forward.5} parent=11 // pred_fallthru
        _
      // Predicated region
      $region37: #{dense_net_multihead_forward.5} parent=11 // pred_check
        %p400 = pneg %p194
      $region38: #{dense_net_multihead_forward.5} parent=11 // pred_check_branch
        %402 = sbr.rel (%p400) target = $region40
      $region39: #{dense_net_multihead_forward.5} parent=11 // pred_region
        _
      $region40: #{dense_net_multihead_forward.5} parent=11 // pred_fallthru
        _
      // Predicated region
      $region41: #{dense_net_multihead_forward.5} parent=11 // pred_check
        %p403 = pneg %p215
      $region42: #{dense_net_multihead_forward.5} parent=11 // pred_check_branch
        %405 = sbr.rel (%p403) target = $region44
      $region43: #{dense_net_multihead_forward.5} parent=11 // pred_region
        _
      $region44: #{dense_net_multihead_forward.5} parent=11 // pred_fallthru
        _
      // Predicated region
      $region45: #{dense_net_multihead_forward.5} parent=11 // pred_check
        %p406 = pneg %p236
      $region46: #{dense_net_multihead_forward.5} parent=11 // pred_check_branch
        %408 = sbr.rel (%p406) target = $region48
      $region47: #{dense_net_multihead_forward.5} parent=11 // pred_region
        _
      $region48: #{dense_net_multihead_forward.5} parent=11 // pred_fallthru
        _
      // Predicated region
      $region49: #{dense_net_multihead_forward.5} parent=11 // pred_check
        %p409 = pneg %p257
      $region50: #{dense_net_multihead_forward.5} parent=11 // pred_check_branch
        %411 = sbr.rel (%p409) target = $region52
      $region51: #{dense_net_multihead_forward.5} parent=11 // pred_region
        _
      $region52: #{dense_net_multihead_forward.5} parent=11 // pred_fallthru
        _
      // Predicated region
      $region53: #{dense_net_multihead_forward.5} parent=11 // pred_check
        %p412 = pneg %p278
      $region54: #{dense_net_multihead_forward.5} parent=11 // pred_check_branch
        %414 = sbr.rel (%p412) target = $region56
      $region55: #{dense_net_multihead_forward.5} parent=11 // pred_region
        _
      $region56: #{dense_net_multihead_forward.5} parent=11 // pred_fallthru
        _
      // Predicated region
      $region57: #{dense_net_multihead_forward.5} parent=11 // pred_check
        %p415 = pneg %p299
      $region58: #{dense_net_multihead_forward.5} parent=11 // pred_check_branch
        %417 = sbr.rel (%p415) target = $region60
      $region59: #{dense_net_multihead_forward.5} parent=11 // pred_region
        _
      $region60: #{dense_net_multihead_forward.5} parent=11 // pred_fallthru
        _
      // Predicated region
      $region61: #{dense_net_multihead_forward.5} parent=11 // pred_check
        %p418 = pneg %p320
      $region62: #{dense_net_multihead_forward.5} parent=11 // pred_check_branch
        %420 = sbr.rel (%p418) target = $region64
      $region63: #{dense_net_multihead_forward.5} parent=11 // pred_region
        _
      $region64: #{dense_net_multihead_forward.5} parent=11 // pred_fallthru
        _
      // Predicated region
      $region65: #{dense_net_multihead_forward.5} parent=11 // pred_check
        %p421 = pneg %p341
      $region66: #{dense_net_multihead_forward.5} parent=11 // pred_check_branch
        %423 = sbr.rel (%p421) target = $region68
      $region67: #{dense_net_multihead_forward.5} parent=11 // pred_region
        _
      $region68: #{dense_net_multihead_forward.5} parent=11 // pred_fallthru
        _
    $region12: #{dense_net_multihead_forward.5} parent=5 // pred_fallthru
      _
    %p424 = scmp.lt.s32.totalorder %s21, 2
    // Predicated region
    $region69: #{dense_net_multihead_forward.5} parent=5 // pred_check
      %p425 = pneg %p424
    $region70: #{dense_net_multihead_forward.5} parent=5 // pred_check_branch
      %427 = sbr.rel (%p425) target = $region72
    $region71: #{dense_net_multihead_forward.5} parent=5 // pred_region
      // Predicated region
      $region73: #{dense_net_multihead_forward.5} parent=71 // pred_check
        %p428 = pneg %p41
      $region74: #{dense_net_multihead_forward.5} parent=71 // pred_check_branch
        %430 = sbr.rel (%p428) target = $region76
      $region75: #{dense_net_multihead_forward.5} parent=71 // pred_region
        %p431 = scmp.lt.s32.totalorder %s21, 1
        %s432 = scalar_select %p431, %s21, 1
        %s433 = smul.addr %s432, 8
        %s434 = smul.addr %s433, 8
        %s435 = scalar_lea.vmem %s0, %s434
      $region76: #{dense_net_multihead_forward.5} parent=71 // pred_fallthru
        _
    $region72: #{dense_net_multihead_forward.5} parent=5 // pred_fallthru
      _
    %p436 = scmp.le.s32.totalorder 1, %s21
    %p437 = scmp.lt.s32.totalorder %s21, 3
    %p438 = pnand %p436, %p437
    %p439 = pneg %p438
    // Predicated region
    $region77: #{dense_net_multihead_forward.5} parent=5 // pred_check
      _
    $region78: #{dense_net_multihead_forward.5} parent=5 // pred_check_branch
      %441 = sbr.rel (%p438) target = $region80
    $region79: #{dense_net_multihead_forward.5} parent=5 // pred_region
      %s442 = ssub.s32 %s21, 1
      %p443 = scmp.lt.s32.totalorder %s26, 1
      %s444 = scalar_select %p443, %s26, 1
      %s445 = smul.addr %s444, 8
      %s446 = smul.addr %s445, 8
      %s447 = scalar_lea.vmem %s0, %s446
      %p448 = pneg %p47
      %p449 = pneg %p44
      %p450 = pneg %p68
      %p451 = pneg %p65
      %p452 = pneg %p89
      %p453 = pneg %p86
      %p454 = pneg %p110
      %p455 = pneg %p107
      %p456 = pneg %p131
      %p457 = pneg %p128
      %p458 = pneg %p152
      %p459 = pneg %p149
      %p460 = pneg %p173
      %p461 = pneg %p170
      %p462 = pneg %p194
      %p463 = pneg %p191
      %p464 = pneg %p215
      %p465 = pneg %p212
      %p466 = pneg %p236
      %p467 = pneg %p233
      %p468 = pneg %p257
      %p469 = pneg %p254
      %p470 = pneg %p278
      %p471 = pneg %p275
      %p472 = pneg %p299
      %p473 = pneg %p296
      %p474 = pneg %p320
      %p475 = pneg %p317
      %p476 = pneg %p341
      %p477 = pneg %p338
      %p478 = pneg %p367
      %p479 = pneg %p364
      %p480 = scmp.lt.s32.totalorder %s26, 1
      %s481 = scalar_select %p480, %s26, 1
      %s482 = smul.addr %s481, 8
      %s483 = smul.addr %s482, 8
      %s484 = scalar_lea.vmem %s15, %s483
      %p485 = scmp.lt.s32.totalorder %s26, 1
      %s486 = scalar_select %p485, %s26, 1
      %s487 = smul.addr %s486, 8
      %s488 = smul.addr %s487, 8
      %s489 = scalar_lea.vmem %s0, %s488
      %p490 = scmp.lt.s32.totalorder %s26, 1
      %s491 = scalar_select %p490, %s26, 1
      %s492 = smul.addr %s491, 8
      %s493 = smul.addr %s492, 8
      %s494 = scalar_lea.vmem %s15, %s493
      %v496 = vlaneseq
      %v497 = vshrl.u32 %v496, 7
      %v498 = vadd.s32 %v497, 8
      %v499 = vadd.s32 %v497, 16
      %v500 = vadd.s32 %v497, 24
      %v501 = vadd.s32 %v497, 32
      %v502 = vadd.s32 %v497, 40
      %v503 = vadd.s32 %v497, 48
      %v504 = vadd.s32 %v497, 56
      %vm505 = vcmp.lt.s32.totalorder %v497, 0
      %v506 = vsub.s32 0, %v497
      %v507 = vsel %vm505, %v506, %v497
      %v508 = vshrl.u32 %v507, 3
      %v509 = vand.u32 %v507, 7
      %v510 = vsub.s32 0, %v509
      %v511 = vsel %vm505, %v510, %v509
      %vm512 = vcmp.lt.s32.totalorder %v498, 0
      %v513 = vsub.s32 0, %v498
      %v514 = vsel %vm512, %v513, %v498
      %v515 = vshrl.u32 %v514, 3
      %v516 = vand.u32 %v514, 7
      %v517 = vsub.s32 0, %v516
      %v518 = vsel %vm512, %v517, %v516
      %vm519 = vcmp.lt.s32.totalorder %v499, 0
      %v520 = vsub.s32 0, %v499
      %v521 = vsel %vm519, %v520, %v499
      %v522 = vshrl.u32 %v521, 3
      %v523 = vand.u32 %v521, 7
      %v524 = vsub.s32 0, %v523
      %v525 = vsel %vm519, %v524, %v523
      %vm526 = vcmp.lt.s32.totalorder %v500, 0
      %v527 = vsub.s32 0, %v500
      %v528 = vsel %vm526, %v527, %v500
      %v529 = vshrl.u32 %v528, 3
      %v530 = vand.u32 %v528, 7
      %v531 = vsub.s32 0, %v530
      %v532 = vsel %vm526, %v531, %v530
      %vm533 = vcmp.lt.s32.totalorder %v501, 0
      %v534 = vsub.s32 0, %v501
      %v535 = vsel %vm533, %v534, %v501
      %v536 = vshrl.u32 %v535, 3
      %v537 = vand.u32 %v535, 7
      %v538 = vsub.s32 0, %v537
      %v539 = vsel %vm533, %v538, %v537
      %vm540 = vcmp.lt.s32.totalorder %v502, 0
      %v541 = vsub.s32 0, %v502
      %v542 = vsel %vm540, %v541, %v502
      %v543 = vshrl.u32 %v542, 3
      %v544 = vand.u32 %v542, 7
      %v545 = vsub.s32 0, %v544
      %v546 = vsel %vm540, %v545, %v544
      %vm547 = vcmp.lt.s32.totalorder %v503, 0
      %v548 = vsub.s32 0, %v503
      %v549 = vsel %vm547, %v548, %v503
      %v550 = vshrl.u32 %v549, 3
      %v551 = vand.u32 %v549, 7
      %v552 = vsub.s32 0, %v551
      %v553 = vsel %vm547, %v552, %v551
      %vm554 = vcmp.lt.s32.totalorder %v504, 0
      %v555 = vsub.s32 0, %v504
      %v556 = vsel %vm554, %v555, %v504
      %v557 = vshrl.u32 %v556, 3
      %v558 = vand.u32 %v556, 7
      %v559 = vsub.s32 0, %v558
      %v560 = vsel %vm554, %v559, %v558
      %vm561 = vcmp.ne.s32.totalorder %v511, 0
      %vm562 = vcmp.ne.s32.totalorder %v518, 0
      %vm563 = vcmp.ne.s32.totalorder %v525, 0
      %vm564 = vcmp.ne.s32.totalorder %v532, 0
      %vm565 = vcmp.ne.s32.totalorder %v539, 0
      %vm566 = vcmp.ne.s32.totalorder %v546, 0
      %vm567 = vcmp.ne.s32.totalorder %v553, 0
      %vm568 = vcmp.ne.s32.totalorder %v560, 0
      %vm569 = vcmp.lt.s32.totalorder %v511, 0
      %vm570 = vcmp.lt.s32.totalorder %v518, 0
      %vm571 = vcmp.lt.s32.totalorder %v525, 0
      %vm572 = vcmp.lt.s32.totalorder %v532, 0
      %vm573 = vcmp.lt.s32.totalorder %v539, 0
      %vm574 = vcmp.lt.s32.totalorder %v546, 0
      %vm575 = vcmp.lt.s32.totalorder %v553, 0
      %vm576 = vcmp.lt.s32.totalorder %v560, 0
      %vm577 = vmand %vm569, %vm561
      %vm578 = vmand %vm570, %vm562
      %vm579 = vmand %vm571, %vm563
      %vm580 = vmand %vm572, %vm564
      %vm581 = vmand %vm573, %vm565
      %vm582 = vmand %vm574, %vm566
      %vm583 = vmand %vm575, %vm567
      %vm584 = vmand %vm576, %vm568
      %v585 = vadd.s32 %v511, 8
      %v586 = vadd.s32 %v518, 8
      %v587 = vadd.s32 %v525, 8
      %v588 = vadd.s32 %v532, 8
      %v589 = vadd.s32 %v539, 8
      %v590 = vadd.s32 %v546, 8
      %v591 = vadd.s32 %v553, 8
      %v592 = vadd.s32 %v560, 8
      %v593 = vsel %vm577, %v585, %v511
      %v594 = vsel %vm578, %v586, %v518
      %v595 = vsel %vm579, %v587, %v525
      %v596 = vsel %vm580, %v588, %v532
      %v597 = vsel %vm581, %v589, %v539
      %v598 = vsel %vm582, %v590, %v546
      %v599 = vsel %vm583, %v591, %v553
      %v600 = vsel %vm584, %v592, %v560
      %v601 = vld [vmem:[%s489] sm:$0xff]
      %v602 = vld [vmem:[%s489 + $0x8] sm:$0xff]
      %v603 = vld [vmem:[%s489 + $0x10] sm:$0xff]
      %v604 = vld [vmem:[%s489 + $0x18] sm:$0xff]
      %v605 = vld [vmem:[%s489 + $0x20] sm:$0xff]
      %v606 = vld [vmem:[%s489 + $0x28] sm:$0xff]
      %v607 = vld [vmem:[%s489 + $0x30] sm:$0xff]
      %v608 = vld [vmem:[%s489 + $0x38] sm:$0xff]
      %v609 = vpack.c.bf16 %v602, %v601
      %v610 = vpack.c.bf16 %v604, %v603
      %v611 = vpack.c.bf16 %v606, %v605
      %v612 = vpack.c.bf16 %v608, %v607
      %v613 = vld [vmem:[%s1] sm:$0xf]
      %v614 = vld [vmem:[%s1 + $0x4] sm:$0xf]
      %v615 = vld [vmem:[%s2] sm:$0x1]
      %v617 = vlaneseq
      %v618 = vshrl.u32 %v617, 7
      %v619 = vsub.s32 0, %v618
      %v620 = vrot.slane %v615, %v619
      %v624 = vunpack.c.l.b16 %v613
      %v625 = vunpack.c.l.b16 %v614
      %v626 = vpack.c.b16 %v625, %v624
      %vm628 = vcmask 130048
      %v630 = vsel %vm628, %v609, 0
      %v633 = vsel %vm628, %v610, 0
      %v636 = vsel %vm628, %v611, 0
      %v639 = vsel %vm628, %v612, 0
      %641 = vmatprep.subr.bf16.mxu0 0
      %642 = vmatpush1.bf16.msra.mxu0 0
      %643 = vmatprep.subr.bf16.mxu0 0
      %644 = vmatpush1.bf16.msra.mxu0 0
      %645 = vmatprep.subr.bf16.mxu0 0
      %646 = vmatpush1.bf16.msra.mxu0 0
      %647 = vmatprep.subr.bf16.mxu0 0
      %648 = vmatpush1.bf16.msra.mxu0 0
      %649 = vmatprep.subr.bf16.mxu0 0
      %650 = vmatpush1.bf16.msra.mxu0 0
      %651 = vmatprep.subr.bf16.mxu0 0
      %652 = vmatpush1.bf16.msra.mxu0 0
      %653 = vmatprep.subr.bf16.mxu0 0
      %654 = vmatpush1.bf16.msra.mxu0 0
      %655 = vmatprep.subr.bf16.mxu0 0
      %656 = vmatpush1.bf16.msra.mxu0 %v626
      %657 = vmatprep.subr.bf16.mxu0 0
      %658 = vmatpush2.bf16.msra.mxu0 0
      %659 = vmatprep.subr.bf16.mxu0 0
      %660 = vmatpush2.bf16.msra.mxu0 0
      %661 = vmatprep.subr.bf16.mxu0 0
      %662 = vmatpush2.bf16.msra.mxu0 0
      %663 = vmatprep.subr.bf16.mxu0 0
      %664 = vmatpush2.bf16.msra.mxu0 0
      %665 = vmatprep.subr.bf16.mxu0 0
      %666 = vmatpush2.bf16.msra.mxu0 0
      %667 = vmatprep.subr.bf16.mxu0 0
      %668 = vmatpush2.bf16.msra.mxu0 0
      %669 = vmatprep.subr.bf16.mxu0 0
      %670 = vmatpush2.bf16.msra.mxu0 0
      %671 = vmatprep.subr.bf16.mxu0 0
      %672 = vmatpush2.bf16.msra.mxu0 0
      %673 = vmatprep.mubr.bf16.mxu0 0
      %674 = vmatmul.mubr.bf16.gmra.mxu0 %v630
      %v675 = vpop.f32.mrf.mxu0
      %v676 = vadd.f32 %v620, %v675
      %v677 = vpop.f32.mrf.mxu0
      %v678 = vpop.f32.mrf.mxu0
      %v679 = vadd.f32 %v620, %v678
      %v680 = vpop.f32.mrf.mxu0
      %681 = vmatprep.mubr.bf16.mxu0 0
      %682 = vmatmul.mubr.bf16.gmra.mxu0 %v633
      %v683 = vpop.f32.mrf.mxu0
      %v684 = vadd.f32 %v620, %v683
      %v685 = vpop.f32.mrf.mxu0
      %v686 = vpop.f32.mrf.mxu0
      %v687 = vadd.f32 %v620, %v686
      %v688 = vpop.f32.mrf.mxu0
      %689 = vmatprep.mubr.bf16.mxu0 0
      %690 = vmatmul.mubr.bf16.gmra.mxu0 %v636
      %v691 = vpop.f32.mrf.mxu0
      %v692 = vadd.f32 %v620, %v691
      %v693 = vpop.f32.mrf.mxu0
      %v694 = vpop.f32.mrf.mxu0
      %v695 = vadd.f32 %v620, %v694
      %v696 = vpop.f32.mrf.mxu0
      %697 = vmatprep.mubr.bf16.mxu0 0
      %698 = vmatmul.mubr.bf16.gmra.mxu0 %v639
      %v699 = vpop.f32.mrf.mxu0
      %v700 = vadd.f32 %v620, %v699
      %v701 = vpop.f32.mrf.mxu0
      %v702 = vpop.f32.mrf.mxu0
      %v703 = vadd.f32 %v620, %v702
      %v704 = vpop.f32.mrf.mxu0
      %705 = vdwg.mxu0
      %v706 = vmax.f32 %v676, 0.0
      %v707 = vmax.f32 %v679, 0.0
      %v708 = vmax.f32 %v684, 0.0
      %v709 = vmax.f32 %v687, 0.0
      %v710 = vmax.f32 %v692, 0.0
      %v711 = vmax.f32 %v695, 0.0
      %v712 = vmax.f32 %v700, 0.0
      %v713 = vmax.f32 %v703, 0.0
      %vm722 = vcmask 1040384
      %v723 = vrot.slane %v706, 7
      %v724 = vrot.slane %v707, 7
      %v725 = vsel %vm722, %v723, %v724
      %v726 = vrot.slane %v708, 7
      %v727 = vsel %vm722, %v724, %v726
      %v728 = vrot.slane %v709, 7
      %v729 = vsel %vm722, %v726, %v728
      %v730 = vrot.slane %v710, 7
      %v731 = vsel %vm722, %v728, %v730
      %v732 = vrot.slane %v711, 7
      %v733 = vsel %vm722, %v730, %v732
      %v734 = vrot.slane %v712, 7
      %v735 = vsel %vm722, %v732, %v734
      %v736 = vrot.slane %v713, 7
      %v737 = vsel %vm722, %v734, %v736
      %v747 = vsel %vm722, 0.0, %v723
      %v748 = vsel %vm722, %v736, 0.0
      %v749 = vadd.s32 %v593, 4294967295
      %v750 = vadd.s32 %v594, 4294967295
      %v751 = vadd.s32 %v595, 4294967295
      %v752 = vadd.s32 %v596, 4294967295
      %v753 = vadd.s32 %v597, 4294967295
      %v754 = vadd.s32 %v598, 4294967295
      %v755 = vadd.s32 %v599, 4294967295
      %v756 = vadd.s32 %v600, 4294967295
      %vm757 = vcmp.ge.s32.totalorder %v749, 0
      %vm758 = vcmp.ge.s32.totalorder %v750, 0
      %vm759 = vcmp.ge.s32.totalorder %v751, 0
      %vm760 = vcmp.ge.s32.totalorder %v752, 0
      %vm761 = vcmp.ge.s32.totalorder %v753, 0
      %vm762 = vcmp.ge.s32.totalorder %v754, 0
      %vm763 = vcmp.ge.s32.totalorder %v755, 0
      %vm764 = vcmp.ge.s32.totalorder %v756, 0
      %vm765 = vcmp.lt.s32.totalorder %v749, 8
      %vm766 = vcmp.lt.s32.totalorder %v750, 8
      %vm767 = vcmp.lt.s32.totalorder %v751, 8
      %vm768 = vcmp.lt.s32.totalorder %v752, 8
      %vm769 = vcmp.lt.s32.totalorder %v753, 8
      %vm770 = vcmp.lt.s32.totalorder %v754, 8
      %vm771 = vcmp.lt.s32.totalorder %v755, 8
      %vm772 = vcmp.lt.s32.totalorder %v756, 8
      %vm773 = vmand %vm757, %vm765
      %vm774 = vmand %vm758, %vm766
      %vm775 = vmand %vm759, %vm767
      %vm776 = vmand %vm760, %vm768
      %vm777 = vmand %vm761, %vm769
      %vm778 = vmand %vm762, %vm770
      %vm779 = vmand %vm763, %vm771
      %vm780 = vmand %vm764, %vm772
      %v781 = vsel %vm773, 1, 0
      %v782 = vsel %vm774, 1, 0
      %v783 = vsel %vm775, 1, 0
      %v784 = vsel %vm776, 1, 0
      %v785 = vsel %vm777, 1, 0
      %v786 = vsel %vm778, 1, 0
      %v787 = vsel %vm779, 1, 0
      %v788 = vsel %vm780, 1, 0
      %vm789 = vcmp.eq.s32.totalorder %v781, 1
      %vm790 = vcmp.eq.s32.totalorder %v782, 1
      %vm791 = vcmp.eq.s32.totalorder %v783, 1
      %vm792 = vcmp.eq.s32.totalorder %v784, 1
      %vm793 = vcmp.eq.s32.totalorder %v785, 1
      %vm794 = vcmp.eq.s32.totalorder %v786, 1
      %vm795 = vcmp.eq.s32.totalorder %v787, 1
      %vm796 = vcmp.eq.s32.totalorder %v788, 1
      %v797 = vsel %vm790, %v747, 0.0
      %v798 = vsel %vm791, %v725, 0.0
      %v799 = vsel %vm792, %v727, 0.0
      %v800 = vsel %vm793, %v729, 0.0
      %v801 = vsel %vm794, %v731, 0.0
      %v802 = vsel %vm795, %v733, 0.0
      %v803 = vsel %vm796, %v735, 0.0
      %v804 = vadd.s32 %v593, 1
      %v805 = vadd.s32 %v594, 1
      %v806 = vadd.s32 %v595, 1
      %v807 = vadd.s32 %v596, 1
      %v808 = vadd.s32 %v597, 1
      %v809 = vadd.s32 %v598, 1
      %v810 = vadd.s32 %v599, 1
      %v811 = vadd.s32 %v600, 1
      %vm812 = vcmp.ge.s32.totalorder %v804, 0
      %vm813 = vcmp.ge.s32.totalorder %v805, 0
      %vm814 = vcmp.ge.s32.totalorder %v806, 0
      %vm815 = vcmp.ge.s32.totalorder %v807, 0
      %vm816 = vcmp.ge.s32.totalorder %v808, 0
      %vm817 = vcmp.ge.s32.totalorder %v809, 0
      %vm818 = vcmp.ge.s32.totalorder %v810, 0
      %vm819 = vcmp.ge.s32.totalorder %v811, 0
      %vm820 = vcmp.lt.s32.totalorder %v804, 8
      %vm821 = vcmp.lt.s32.totalorder %v805, 8
      %vm822 = vcmp.lt.s32.totalorder %v806, 8
      %vm823 = vcmp.lt.s32.totalorder %v807, 8
      %vm824 = vcmp.lt.s32.totalorder %v808, 8
      %vm825 = vcmp.lt.s32.totalorder %v809, 8
      %vm826 = vcmp.lt.s32.totalorder %v810, 8
      %vm827 = vcmp.lt.s32.totalorder %v811, 8
      %vm828 = vmand %vm812, %vm820
      %vm829 = vmand %vm813, %vm821
      %vm830 = vmand %vm814, %vm822
      %vm831 = vmand %vm815, %vm823
      %vm832 = vmand %vm816, %vm824
      %vm833 = vmand %vm817, %vm825
      %vm834 = vmand %vm818, %vm826
      %vm835 = vmand %vm819, %vm827
      %v836 = vsel %vm828, 1, 0
      %v837 = vsel %vm829, 1, 0
      %v838 = vsel %vm830, 1, 0
      %v839 = vsel %vm831, 1, 0
      %v840 = vsel %vm832, 1, 0
      %v841 = vsel %vm833, 1, 0
      %v842 = vsel %vm834, 1, 0
      %v843 = vsel %vm835, 1, 0
      %vm844 = vcmp.eq.s32.totalorder %v836, 1
      %vm845 = vcmp.eq.s32.totalorder %v837, 1
      %vm846 = vcmp.eq.s32.totalorder %v838, 1
      %vm847 = vcmp.eq.s32.totalorder %v839, 1
      %vm848 = vcmp.eq.s32.totalorder %v840, 1
      %vm849 = vcmp.eq.s32.totalorder %v841, 1
      %vm850 = vcmp.eq.s32.totalorder %v842, 1
      %vm851 = vcmp.eq.s32.totalorder %v843, 1
      %vm854 = vcmask 1045504
      %v855 = vrot.slane 0.0, 2
      %v856 = vrot.slane %v747, 2
      %v857 = vsel %vm854, %v855, %v856
      %v858 = vrot.slane %v725, 2
      %v859 = vsel %vm854, %v856, %v858
      %v860 = vrot.slane %v727, 2
      %v861 = vsel %vm854, %v858, %v860
      %v862 = vrot.slane %v729, 2
      %v863 = vsel %vm854, %v860, %v862
      %v864 = vrot.slane %v731, 2
      %v865 = vsel %vm854, %v862, %v864
      %v866 = vrot.slane %v733, 2
      %v867 = vsel %vm854, %v864, %v866
      %v868 = vrot.slane %v735, 2
      %v869 = vsel %vm854, %v866, %v868
      %v870 = vrot.slane %v737, 2
      %v871 = vsel %vm854, %v868, %v870
      %v880 = vsel %vm844, %v857, 0.0
      %v881 = vsel %vm845, %v859, 0.0
      %v882 = vsel %vm846, %v861, 0.0
      %v883 = vsel %vm847, %v863, 0.0
      %v884 = vsel %vm848, %v865, 0.0
      %v885 = vsel %vm849, %v867, 0.0
      %v886 = vsel %vm850, %v869, 0.0
      %v887 = vsel %vm851, %v871, 0.0
      %v888 = vsel %vm789, %v747, 0.0
      %v889 = vsel %vm790, %v725, 0.0
      %v890 = vsel %vm791, %v727, 0.0
      %v891 = vsel %vm792, %v729, 0.0
      %v892 = vsel %vm793, %v731, 0.0
      %v893 = vsel %vm794, %v733, 0.0
      %v894 = vsel %vm795, %v735, 0.0
      %v895 = vsel %vm796, %v737, 0.0
      %v897 = vrot.slane %v748, 2
      %v898 = vsel %vm854, %v870, %v897
      %v900 = vsel %vm844, %v859, 0.0
      %v901 = vsel %vm845, %v861, 0.0
      %v902 = vsel %vm846, %v863, 0.0
      %v903 = vsel %vm847, %v865, 0.0
      %v904 = vsel %vm848, %v867, 0.0
      %v905 = vsel %vm849, %v869, 0.0
      %v906 = vsel %vm850, %v871, 0.0
      %v907 = vsel %vm851, %v898, 0.0
      %v908 = vsel %vm789, %v725, 0.0
      %v909 = vsel %vm790, %v727, 0.0
      %v910 = vsel %vm791, %v729, 0.0
      %v911 = vsel %vm792, %v731, 0.0
      %v912 = vsel %vm793, %v733, 0.0
      %v913 = vsel %vm794, %v735, 0.0
      %v914 = vsel %vm795, %v737, 0.0
      %v915 = vsel %vm796, %v748, 0.0
      %v916 = vsel %vm854, %v897, %v855
      %v918 = vsel %vm844, %v861, 0.0
      %v919 = vsel %vm845, %v863, 0.0
      %v920 = vsel %vm846, %v865, 0.0
      %v921 = vsel %vm847, %v867, 0.0
      %v922 = vsel %vm848, %v869, 0.0
      %v923 = vsel %vm849, %v871, 0.0
      %v924 = vsel %vm850, %v898, 0.0
      %v925 = vsel %vm851, %v916, 0.0
      %vm926 = vcmask 1046528
      %v927 = vrot.slane 0.0, 1
      %v928 = vrot.slane %v747, 1
      %v929 = vsel %vm926, %v927, %v928
      %v930 = vrot.slane %v725, 1
      %v931 = vsel %vm926, %v928, %v930
      %v932 = vrot.slane %v727, 1
      %v933 = vsel %vm926, %v930, %v932
      %v934 = vrot.slane %v729, 1
      %v935 = vsel %vm926, %v932, %v934
      %v936 = vrot.slane %v731, 1
      %v937 = vsel %vm926, %v934, %v936
      %v938 = vrot.slane %v733, 1
      %v939 = vsel %vm926, %v936, %v938
      %v940 = vrot.slane %v735, 1
      %v941 = vsel %vm926, %v938, %v940
      %v942 = vrot.slane %v737, 1
      %v943 = vsel %vm926, %v940, %v942
      %944 = vrot.lane.b32.xlu0 %v929, 16
      %v945 = vpop.permute.xlu0 %944
      %946 = vrot.lane.b32.xlu0 %v931, 16
      %v947 = vpop.permute.xlu0 %946
      %948 = vrot.lane.b32.xlu0 %v933, 16
      %v949 = vpop.permute.xlu0 %948
      %950 = vrot.lane.b32.xlu0 %v935, 16
      %v951 = vpop.permute.xlu0 %950
      %952 = vrot.lane.b32.xlu0 %v937, 16
      %v953 = vpop.permute.xlu0 %952
      %954 = vrot.lane.b32.xlu0 %v939, 16
      %v955 = vpop.permute.xlu0 %954
      %956 = vrot.lane.b32.xlu0 %v941, 16
      %v957 = vpop.permute.xlu0 %956
      %958 = vrot.lane.b32.xlu0 %v943, 16
      %v959 = vpop.permute.xlu0 %958
      %976 = vrot.lane.b32.xlu0 %v880, 32
      %v977 = vpop.permute.xlu0 %976
      %978 = vrot.lane.b32.xlu0 %v881, 32
      %v979 = vpop.permute.xlu0 %978
      %980 = vrot.lane.b32.xlu0 %v882, 32
      %v981 = vpop.permute.xlu0 %980
      %982 = vrot.lane.b32.xlu0 %v883, 32
      %v983 = vpop.permute.xlu0 %982
      %984 = vrot.lane.b32.xlu0 %v884, 32
      %v985 = vpop.permute.xlu0 %984
      %986 = vrot.lane.b32.xlu0 %v885, 32
      %v987 = vpop.permute.xlu0 %986
      %988 = vrot.lane.b32.xlu0 %v886, 32
      %v989 = vpop.permute.xlu0 %988
      %990 = vrot.lane.b32.xlu0 %v887, 32
      %v991 = vpop.permute.xlu0 %990
      %1008 = vrot.lane.b32.xlu0 %v888, 48
      %v1009 = vpop.permute.xlu0 %1008
      %1010 = vrot.lane.b32.xlu0 %v889, 48
      %v1011 = vpop.permute.xlu0 %1010
      %1012 = vrot.lane.b32.xlu0 %v890, 48
      %v1013 = vpop.permute.xlu0 %1012
      %1014 = vrot.lane.b32.xlu0 %v891, 48
      %v1015 = vpop.permute.xlu0 %1014
      %1016 = vrot.lane.b32.xlu0 %v892, 48
      %v1017 = vpop.permute.xlu0 %1016
      %1018 = vrot.lane.b32.xlu0 %v893, 48
      %v1019 = vpop.permute.xlu0 %1018
      %1020 = vrot.lane.b32.xlu0 %v894, 48
      %v1021 = vpop.permute.xlu0 %1020
      %1022 = vrot.lane.b32.xlu0 %v895, 48
      %v1023 = vpop.permute.xlu0 %1022
      %v1032 = vrot.slane %v748, 1
      %v1033 = vsel %vm926, %v942, %v1032
      %1034 = vrot.lane.b32.xlu0 %v931, 64
      %v1035 = vpop.permute.xlu0 %1034
      %1036 = vrot.lane.b32.xlu0 %v933, 64
      %v1037 = vpop.permute.xlu0 %1036
      %1038 = vrot.lane.b32.xlu0 %v935, 64
      %v1039 = vpop.permute.xlu0 %1038
      %1040 = vrot.lane.b32.xlu0 %v937, 64
      %v1041 = vpop.permute.xlu0 %1040
      %1042 = vrot.lane.b32.xlu0 %v939, 64
      %v1043 = vpop.permute.xlu0 %1042
      %1044 = vrot.lane.b32.xlu0 %v941, 64
      %v1045 = vpop.permute.xlu0 %1044
      %1046 = vrot.lane.b32.xlu0 %v943, 64
      %v1047 = vpop.permute.xlu0 %1046
      %1048 = vrot.lane.b32.xlu0 %v1033, 64
      %v1049 = vpop.permute.xlu0 %1048
      %1066 = vrot.lane.b32.xlu0 %v900, 80
      %v1067 = vpop.permute.xlu0 %1066
      %1068 = vrot.lane.b32.xlu0 %v901, 80
      %v1069 = vpop.permute.xlu0 %1068
      %1070 = vrot.lane.b32.xlu0 %v902, 80
      %v1071 = vpop.permute.xlu0 %1070
      %1072 = vrot.lane.b32.xlu0 %v903, 80
      %v1073 = vpop.permute.xlu0 %1072
      %1074 = vrot.lane.b32.xlu0 %v904, 80
      %v1075 = vpop.permute.xlu0 %1074
      %1076 = vrot.lane.b32.xlu0 %v905, 80
      %v1077 = vpop.permute.xlu0 %1076
      %1078 = vrot.lane.b32.xlu0 %v906, 80
      %v1079 = vpop.permute.xlu0 %1078
      %1080 = vrot.lane.b32.xlu0 %v907, 80
      %v1081 = vpop.permute.xlu0 %1080
      %1098 = vrot.lane.b32.xlu0 %v908, 96
      %v1099 = vpop.permute.xlu0 %1098
      %1100 = vrot.lane.b32.xlu0 %v909, 96
      %v1101 = vpop.permute.xlu0 %1100
      %1102 = vrot.lane.b32.xlu0 %v910, 96
      %v1103 = vpop.permute.xlu0 %1102
      %1104 = vrot.lane.b32.xlu0 %v911, 96
      %v1105 = vpop.permute.xlu0 %1104
      %1106 = vrot.lane.b32.xlu0 %v912, 96
      %v1107 = vpop.permute.xlu0 %1106
      %1108 = vrot.lane.b32.xlu0 %v913, 96
      %v1109 = vpop.permute.xlu0 %1108
      %1110 = vrot.lane.b32.xlu0 %v914, 96
      %v1111 = vpop.permute.xlu0 %1110
      %1112 = vrot.lane.b32.xlu0 %v915, 96
      %v1113 = vpop.permute.xlu0 %1112
      %v1122 = vsel %vm926, %v1032, %v927
      %1123 = vrot.lane.b32.xlu0 %v933, 112
      %v1124 = vpop.permute.xlu0 %1123
      %1125 = vrot.lane.b32.xlu0 %v935, 112
      %v1126 = vpop.permute.xlu0 %1125
      %1127 = vrot.lane.b32.xlu0 %v937, 112
      %v1128 = vpop.permute.xlu0 %1127
      %1129 = vrot.lane.b32.xlu0 %v939, 112
      %v1130 = vpop.permute.xlu0 %1129
      %1131 = vrot.lane.b32.xlu0 %v941, 112
      %v1132 = vpop.permute.xlu0 %1131
      %1133 = vrot.lane.b32.xlu0 %v943, 112
      %v1134 = vpop.permute.xlu0 %1133
      %1135 = vrot.lane.b32.xlu0 %v1033, 112
      %v1136 = vpop.permute.xlu0 %1135
      %1137 = vrot.lane.b32.xlu0 %v1122, 112
      %v1138 = vpop.permute.xlu0 %1137
      %v1147 = vsel %vm628, 0.0, %v945
      %v1148 = vsel %vm628, %v797, %v947
      %v1149 = vsel %vm628, %v798, %v949
      %v1150 = vsel %vm628, %v799, %v951
      %v1151 = vsel %vm628, %v800, %v953
      %v1152 = vsel %vm628, %v801, %v955
      %v1153 = vsel %vm628, %v802, %v957
      %v1154 = vsel %vm628, %v803, %v959
      %vm1155 = vcmask 261120
      %v1156 = vsel %vm1155, %v1147, %v977
      %v1157 = vsel %vm1155, %v1148, %v979
      %v1158 = vsel %vm1155, %v1149, %v981
      %v1159 = vsel %vm1155, %v1150, %v983
      %v1160 = vsel %vm1155, %v1151, %v985
      %v1161 = vsel %vm1155, %v1152, %v987
      %v1162 = vsel %vm1155, %v1153, %v989
      %v1163 = vsel %vm1155, %v1154, %v991
      %vm1164 = vcmask 392192
      %v1165 = vsel %vm1164, %v1156, %v1009
      %v1166 = vsel %vm1164, %v1157, %v1011
      %v1167 = vsel %vm1164, %v1158, %v1013
      %v1168 = vsel %vm1164, %v1159, %v1015
      %v1169 = vsel %vm1164, %v1160, %v1017
      %v1170 = vsel %vm1164, %v1161, %v1019
      %v1171 = vsel %vm1164, %v1162, %v1021
      %v1172 = vsel %vm1164, %v1163, %v1023
      %vm1173 = vcmask 523264
      %v1174 = vsel %vm1173, %v1165, %v1035
      %v1175 = vsel %vm1173, %v1166, %v1037
      %v1176 = vsel %vm1173, %v1167, %v1039
      %v1177 = vsel %vm1173, %v1168, %v1041
      %v1178 = vsel %vm1173, %v1169, %v1043
      %v1179 = vsel %vm1173, %v1170, %v1045
      %v1180 = vsel %vm1173, %v1171, %v1047
      %v1181 = vsel %vm1173, %v1172, %v1049
      %vm1182 = vcmask 654336
      %v1183 = vsel %vm1182, %v1174, %v1067
      %v1184 = vsel %vm1182, %v1175, %v1069
      %v1185 = vsel %vm1182, %v1176, %v1071
      %v1186 = vsel %vm1182, %v1177, %v1073
      %v1187 = vsel %vm1182, %v1178, %v1075
      %v1188 = vsel %vm1182, %v1179, %v1077
      %v1189 = vsel %vm1182, %v1180, %v1079
      %v1190 = vsel %vm1182, %v1181, %v1081
      %vm1191 = vcmask 785408
      %v1192 = vsel %vm1191, %v1183, %v1099
      %v1193 = vsel %vm1191, %v1184, %v1101
      %v1194 = vsel %vm1191, %v1185, %v1103
      %v1195 = vsel %vm1191, %v1186, %v1105
      %v1196 = vsel %vm1191, %v1187, %v1107
      %v1197 = vsel %vm1191, %v1188, %v1109
      %v1198 = vsel %vm1191, %v1189, %v1111
      %v1199 = vsel %vm1191, %v1190, %v1113
      %vm1200 = vcmask 916480
      %v1201 = vsel %vm1200, %v1192, %v1124
      %v1202 = vsel %vm1200, %v1193, %v1126
      %v1203 = vsel %vm1200, %v1194, %v1128
      %v1204 = vsel %vm1200, %v1195, %v1130
      %v1205 = vsel %vm1200, %v1196, %v1132
      %v1206 = vsel %vm1200, %v1197, %v1134
      %v1207 = vsel %vm1200, %v1198, %v1136
      %v1208 = vsel %vm1200, %v1199, %v1138
      %v1209 = vpack.c.bf16 %v1202, %v1201
      %v1210 = vpack.c.bf16 %v919, %v918
      %v1211 = vpack.c.bf16 %v1204, %v1203
      %v1212 = vpack.c.bf16 %v921, %v920
      %v1213 = vpack.c.bf16 %v1206, %v1205
      %v1214 = vpack.c.bf16 %v923, %v922
      %v1215 = vpack.c.bf16 %v1208, %v1207
      %v1216 = vpack.c.bf16 %v925, %v924
      %v1217 = vld [vmem:[%s3] sm:$0xf]
      %v1218 = vld [vmem:[%s3 + $0x4] sm:$0xf]
      %v1219 = vld [vmem:[%s3 + $0x8] sm:$0xf]
      %v1220 = vld [vmem:[%s3 + $0xc] sm:$0xf]
      %v1221 = vld [vmem:[%s3 + $0x10] sm:$0xf]
      %v1222 = vld [vmem:[%s3 + $0x14] sm:$0xf]
      %v1223 = vld [vmem:[%s3 + $0x18] sm:$0xf]
      %v1224 = vld [vmem:[%s3 + $0x1c] sm:$0xf]
      %v1225 = vld [vmem:[%s3 + $0x20] sm:$0xf]
      %v1226 = vld [vmem:[%s3 + $0x24] sm:$0xf]
      %v1227 = vld [vmem:[%s3 + $0x28] sm:$0xf]
      %v1228 = vld [vmem:[%s3 + $0x2c] sm:$0xf]
      %v1229 = vld [vmem:[%s3 + $0x30] sm:$0xf]
      %v1230 = vld [vmem:[%s3 + $0x34] sm:$0xf]
      %v1231 = vld [vmem:[%s3 + $0x38] sm:$0xf]
      %v1232 = vld [vmem:[%s3 + $0x3c] sm:$0xf]
      %v1233 = vld [vmem:[%s3 + $0x40] sm:$0xf]
      %v1234 = vld [vmem:[%s3 + $0x44] sm:$0xf]
      %v1235 = vld [vmem:[%s4] sm:$0x1]
      %v1237 = vlaneseq
      %v1238 = vshrl.u32 %v1237, 7
      %v1239 = vsub.s32 0, %v1238
      %v1240 = vrot.slane %v1235, %v1239
      %v1260 = vunpack.c.l.b16 %v1217
      %v1261 = vunpack.c.l.b16 %v1218
      %v1262 = vunpack.c.l.b16 %v1219
      %v1263 = vunpack.c.l.b16 %v1220
      %v1264 = vunpack.c.l.b16 %v1221
      %v1265 = vunpack.c.l.b16 %v1222
      %v1266 = vunpack.c.l.b16 %v1223
      %v1267 = vunpack.c.l.b16 %v1224
      %v1268 = vunpack.c.l.b16 %v1225
      %v1269 = vunpack.c.l.b16 %v1226
      %v1270 = vunpack.c.l.b16 %v1227
      %v1271 = vunpack.c.l.b16 %v1228
      %v1272 = vunpack.c.l.b16 %v1229
      %v1273 = vunpack.c.l.b16 %v1230
      %v1274 = vunpack.c.l.b16 %v1231
      %v1275 = vunpack.c.l.b16 %v1232
      %v1276 = vunpack.c.l.b16 %v1233
      %v1277 = vunpack.c.l.b16 %v1234
      %v1278 = vpack.c.b16 %v1261, %v1260
      %v1279 = vpack.c.b16 %v1263, %v1262
      %v1280 = vpack.c.b16 %v1265, %v1264
      %v1281 = vpack.c.b16 %v1267, %v1266
      %v1282 = vpack.c.b16 %v1269, %v1268
      %v1283 = vpack.c.b16 %v1271, %v1270
      %v1284 = vpack.c.b16 %v1273, %v1272
      %v1285 = vpack.c.b16 %v1275, %v1274
      %v1286 = vpack.c.b16 %v1277, %v1276
      %v1297 = vsel %vm628, %v1210, 0
      %v1300 = vsel %vm628, %v1212, 0
      %v1303 = vsel %vm628, %v1214, 0
      %v1306 = vsel %vm628, %v1216, 0
      %1308 = vmatprep.subr.bf16.mxu0 0
      %1309 = vmatpush1.bf16.msra.mxu0 %v1285
      %1310 = vmatprep.subr.bf16.mxu0 0
      %1311 = vmatpush1.bf16.msra.mxu0 %v1284
      %1312 = vmatprep.subr.bf16.mxu0 0
      %1313 = vmatpush1.bf16.msra.mxu0 %v1283
      %1314 = vmatprep.subr.bf16.mxu0 0
      %1315 = vmatpush1.bf16.msra.mxu0 %v1282
      %1316 = vmatprep.subr.bf16.mxu0 0
      %1317 = vmatpush1.bf16.msra.mxu0 %v1281
      %1318 = vmatprep.subr.bf16.mxu0 0
      %1319 = vmatpush1.bf16.msra.mxu0 %v1280
      %1320 = vmatprep.subr.bf16.mxu0 0
      %1321 = vmatpush1.bf16.msra.mxu0 %v1279
      %1322 = vmatprep.subr.bf16.mxu0 0
      %1323 = vmatpush1.bf16.msra.mxu0 %v1278
      %1324 = vmatprep.subr.bf16.mxu0 0
      %1325 = vmatpush2.bf16.msra.mxu0 0
      %1326 = vmatprep.subr.bf16.mxu0 0
      %1327 = vmatpush2.bf16.msra.mxu0 0
      %1328 = vmatprep.subr.bf16.mxu0 0
      %1329 = vmatpush2.bf16.msra.mxu0 0
      %1330 = vmatprep.subr.bf16.mxu0 0
      %1331 = vmatpush2.bf16.msra.mxu0 0
      %1332 = vmatprep.subr.bf16.mxu0 0
      %1333 = vmatpush2.bf16.msra.mxu0 0
      %1334 = vmatprep.subr.bf16.mxu0 0
      %1335 = vmatpush2.bf16.msra.mxu0 0
      %1336 = vmatprep.subr.bf16.mxu0 0
      %1337 = vmatpush2.bf16.msra.mxu0 0
      %1338 = vmatprep.subr.bf16.mxu0 0
      %1339 = vmatpush2.bf16.msra.mxu0 %v1286
      %1340 = vmatprep.mubr.bf16.mxu0 %v1297
      %1341 = vmatmul.mubr.bf16.gmra.mxu0 %v1209
      %v1342 = vpop.f32.mrf.mxu0
      %v1343 = vadd.f32 %v1240, %v1342
      %v1344 = vpop.f32.mrf.mxu0
      %v1345 = vpop.f32.mrf.mxu0
      %v1346 = vadd.f32 %v1240, %v1345
      %v1347 = vpop.f32.mrf.mxu0
      %1348 = vmatprep.mubr.bf16.mxu0 %v1300
      %1349 = vmatmul.mubr.bf16.gmra.mxu0 %v1211
      %v1350 = vpop.f32.mrf.mxu0
      %v1351 = vadd.f32 %v1240, %v1350
      %v1352 = vpop.f32.mrf.mxu0
      %v1353 = vpop.f32.mrf.mxu0
      %v1354 = vadd.f32 %v1240, %v1353
      %v1355 = vpop.f32.mrf.mxu0
      %1356 = vmatprep.mubr.bf16.mxu0 %v1303
      %1357 = vmatmul.mubr.bf16.gmra.mxu0 %v1213
      %v1358 = vpop.f32.mrf.mxu0
      %v1359 = vadd.f32 %v1240, %v1358
      %v1360 = vpop.f32.mrf.mxu0
      %v1361 = vpop.f32.mrf.mxu0
      %v1362 = vadd.f32 %v1240, %v1361
      %v1363 = vpop.f32.mrf.mxu0
      %1364 = vmatprep.mubr.bf16.mxu0 %v1306
      %1365 = vmatmul.mubr.bf16.gmra.mxu0 %v1215
      %v1366 = vpop.f32.mrf.mxu0
      %v1367 = vadd.f32 %v1240, %v1366
      %v1368 = vpop.f32.mrf.mxu0
      %v1369 = vpop.f32.mrf.mxu0
      %v1370 = vadd.f32 %v1240, %v1369
      %v1371 = vpop.f32.mrf.mxu0
      %1372 = vdwg.mxu0
      %v1373 = vmax.f32 %v1343, 0.0
      %v1374 = vmax.f32 %v1346, 0.0
      %v1375 = vmax.f32 %v1351, 0.0
      %v1376 = vmax.f32 %v1354, 0.0
      %v1377 = vmax.f32 %v1359, 0.0
      %v1378 = vmax.f32 %v1362, 0.0
      %v1379 = vmax.f32 %v1367, 0.0
      %v1380 = vmax.f32 %v1370, 0.0
      %v1381 = vpack.c.bf16 %v679, %v676
      %v1382 = vpack.c.bf16 %v687, %v684
      %v1383 = vpack.c.bf16 %v695, %v692
      %v1384 = vpack.c.bf16 %v703, %v700
      %1389 = vrot.lane.b32.xlu0 %v1381, 112
      %v1390 = vpop.permute.xlu0 %1389
      %1391 = vrot.lane.b32.xlu0 %v1382, 112
      %v1392 = vpop.permute.xlu0 %1391
      %1393 = vrot.lane.b32.xlu0 %v1383, 112
      %v1394 = vpop.permute.xlu0 %1393
      %1395 = vrot.lane.b32.xlu0 %v1384, 112
      %v1396 = vpop.permute.xlu0 %1395
      %1397 = vrot.lane.b32.xlu0 %v1381, 96
      %v1398 = vpop.permute.xlu0 %1397
      %1399 = vrot.lane.b32.xlu0 %v1382, 96
      %v1400 = vpop.permute.xlu0 %1399
      %1401 = vrot.lane.b32.xlu0 %v1383, 96
      %v1402 = vpop.permute.xlu0 %1401
      %1403 = vrot.lane.b32.xlu0 %v1384, 96
      %v1404 = vpop.permute.xlu0 %1403
      %vm1405 = vcmask 31744
      %v1407 = vsel %vm1405, %v1390, 0
      %v1410 = vsel %vm1405, %v1392, 0
      %v1413 = vsel %vm1405, %v1394, 0
      %v1416 = vsel %vm1405, %v1396, 0
      %v1419 = vsel %vm1405, %v1398, 0
      %v1422 = vsel %vm1405, %v1400, 0
      %v1425 = vsel %vm1405, %v1402, 0
      %v1428 = vsel %vm1405, %v1404, 0
      %1430 = vmatprep.subr.bf16.mxu0 0
      %1431 = vmatpush1.bf16.xpose.msra.mxu0 0
      %1432 = vmatprep.subr.bf16.mxu0 0
      %1433 = vmatpush1.bf16.xpose.msra.mxu0 0
      %1434 = vmatprep.subr.bf16.mxu0 0
      %1435 = vmatpush1.bf16.xpose.msra.mxu0 0
      %1436 = vmatprep.subr.bf16.mxu0 0
      %1437 = vmatpush1.bf16.xpose.msra.mxu0 0
      %1438 = vmatprep.subr.bf16.mxu0 0
      %1439 = vmatpush1.bf16.xpose.msra.mxu0 %v1428
      %1440 = vmatprep.subr.bf16.mxu0 0
      %1441 = vmatpush1.bf16.xpose.msra.mxu0 %v1425
      %1442 = vmatprep.subr.bf16.mxu0 0
      %1443 = vmatpush1.bf16.xpose.msra.mxu0 %v1422
      %1444 = vmatprep.subr.bf16.mxu0 0
      %1445 = vmatpush1.bf16.xpose.msra.mxu0 %v1419
      %1446 = vmatprep.subr.bf16.mxu0 0
      %1447 = vmatpush2.bf16.xpose.msra.mxu0 0
      %1448 = vmatprep.subr.bf16.mxu0 0
      %1449 = vmatpush2.bf16.xpose.msra.mxu0 0
      %1450 = vmatprep.subr.bf16.mxu0 0
      %1451 = vmatpush2.bf16.xpose.msra.mxu0 0
      %1452 = vmatprep.subr.bf16.mxu0 0
      %1453 = vmatpush2.bf16.xpose.msra.mxu0 0
      %1454 = vmatprep.subr.bf16.mxu0 0
      %1455 = vmatpush2.bf16.xpose.msra.mxu0 0
      %1456 = vmatprep.subr.bf16.mxu0 0
      %1457 = vmatpush2.bf16.xpose.msra.mxu0 0
      %1458 = vmatprep.subr.bf16.mxu0 0
      %1459 = vmatpush2.bf16.xpose.msra.mxu0 0
      %1460 = vmatprep.subr.bf16.mxu0 0
      %1461 = vmatpush2.bf16.xpose.msra.mxu0 0
      %1462 = vmatprep.mubr.bf16.mxu0 0
      %1463 = vmatmul.mubr.bf16.gmra.mxu0 %v1407
      %v1464 = vpop.f32.mrf.mxu0
      %v1465 = vadd.f32 0.0, %v1464
      %v1466 = vpop.f32.mrf.mxu0
      %v1467 = vpop.f32.mrf.mxu0
      %v1468 = vadd.f32 0.0, %v1467
      %v1469 = vpop.f32.mrf.mxu0
      %1470 = vmatprep.mubr.bf16.mxu0 0
      %1471 = vmatmul.mubr.bf16.gmra.mxu0 %v1410
      %v1472 = vpop.f32.mrf.mxu0
      %v1473 = vadd.f32 0.0, %v1472
      %v1474 = vpop.f32.mrf.mxu0
      %v1475 = vpop.f32.mrf.mxu0
      %v1476 = vadd.f32 0.0, %v1475
      %v1477 = vpop.f32.mrf.mxu0
      %1478 = vmatprep.mubr.bf16.mxu0 0
      %1479 = vmatmul.mubr.bf16.gmra.mxu0 %v1413
      %v1480 = vpop.f32.mrf.mxu0
      %v1481 = vadd.f32 0.0, %v1480
      %v1482 = vpop.f32.mrf.mxu0
      %v1483 = vpop.f32.mrf.mxu0
      %v1484 = vadd.f32 0.0, %v1483
      %v1485 = vpop.f32.mrf.mxu0
      %1486 = vmatprep.mubr.bf16.mxu0 0
      %1487 = vmatmul.mubr.bf16.gmra.mxu0 %v1416
      %v1488 = vpop.f32.mrf.mxu0
      %v1489 = vadd.f32 0.0, %v1488
      %v1490 = vpop.f32.mrf.mxu0
      %v1491 = vpop.f32.mrf.mxu0
      %v1492 = vadd.f32 0.0, %v1491
      %v1493 = vpop.f32.mrf.mxu0
      %1494 = vdwg.mxu0
      %v1495 = vmul.f32 %v1465, 0.5
      %v1496 = vmul.f32 %v1468, 0.5
      %v1497 = vmul.f32 %v1473, 0.5
      %v1498 = vmul.f32 %v1476, 0.5
      %v1499 = vmul.f32 %v1481, 0.5
      %v1500 = vmul.f32 %v1484, 0.5
      %v1501 = vmul.f32 %v1489, 0.5
      %v1502 = vmul.f32 %v1492, 0.5
      %v1503 = vsel %vm1173, %v1495, -inf
      %1504 = vmax.xlane.f32.xlu0 %v1503
      %v1505 = vpop.xlane.xlu0 %1504
      %v1506 = vsel %vm1173, %v1496, -inf
      %1507 = vmax.xlane.f32.xlu0 %v1506
      %v1508 = vpop.xlane.xlu0 %1507
      %v1509 = vsel %vm1173, %v1497, -inf
      %1510 = vmax.xlane.f32.xlu0 %v1509
      %v1511 = vpop.xlane.xlu0 %1510
      %v1512 = vsel %vm1173, %v1498, -inf
      %1513 = vmax.xlane.f32.xlu0 %v1512
      %v1514 = vpop.xlane.xlu0 %1513
      %v1515 = vsel %vm1173, %v1499, -inf
      %1516 = vmax.xlane.f32.xlu0 %v1515
      %v1517 = vpop.xlane.xlu0 %1516
      %v1518 = vsel %vm1173, %v1500, -inf
      %1519 = vmax.xlane.f32.xlu0 %v1518
      %v1520 = vpop.xlane.xlu0 %1519
      %v1521 = vsel %vm1173, %v1501, -inf
      %1522 = vmax.xlane.f32.xlu0 %v1521
      %v1523 = vpop.xlane.xlu0 %1522
      %v1524 = vsel %vm1173, %v1502, -inf
      %1525 = vmax.xlane.f32.xlu0 %v1524
      %v1526 = vpop.xlane.xlu0 %1525
      %v1527 = vsub.f32 %v1495, %v1505
      %v1528 = vsub.f32 %v1496, %v1508
      %v1529 = vsub.f32 %v1497, %v1511
      %v1530 = vsub.f32 %v1498, %v1514
      %v1531 = vsub.f32 %v1499, %v1517
      %v1532 = vsub.f32 %v1500, %v1520
      %v1533 = vsub.f32 %v1501, %v1523
      %v1534 = vsub.f32 %v1502, %v1526
      %v1535 = vmul.f32 %v1527, 1.442695
      %v1536 = vpow.pop %v1535
      %v1537 = vmul.f32 %v1528, 1.442695
      %v1538 = vpow.pop %v1537
      %v1539 = vmul.f32 %v1529, 1.442695
      %v1540 = vpow.pop %v1539
      %v1541 = vmul.f32 %v1530, 1.442695
      %v1542 = vpow.pop %v1541
      %v1543 = vmul.f32 %v1531, 1.442695
      %v1544 = vpow.pop %v1543
      %v1545 = vmul.f32 %v1532, 1.442695
      %v1546 = vpow.pop %v1545
      %v1547 = vmul.f32 %v1533, 1.442695
      %v1548 = vpow.pop %v1547
      %v1549 = vmul.f32 %v1534, 1.442695
      %v1550 = vpow.pop %v1549
      %v1551 = vsel %vm1173, %v1536, 0.0
      %1552 = vadd.xlane.f32.xlu0 %v1551
      %v1553 = vpop.xlane.xlu0 %1552
      %v1554 = vsel %vm1173, %v1538, 0.0
      %1555 = vadd.xlane.f32.xlu0 %v1554
      %v1556 = vpop.xlane.xlu0 %1555
      %v1557 = vsel %vm1173, %v1540, 0.0
      %1558 = vadd.xlane.f32.xlu0 %v1557
      %v1559 = vpop.xlane.xlu0 %1558
      %v1560 = vsel %vm1173, %v1542, 0.0
      %1561 = vadd.xlane.f32.xlu0 %v1560
      %v1562 = vpop.xlane.xlu0 %1561
      %v1563 = vsel %vm1173, %v1544, 0.0
      %1564 = vadd.xlane.f32.xlu0 %v1563
      %v1565 = vpop.xlane.xlu0 %1564
      %v1566 = vsel %vm1173, %v1546, 0.0
      %1567 = vadd.xlane.f32.xlu0 %v1566
      %v1568 = vpop.xlane.xlu0 %1567
      %v1569 = vsel %vm1173, %v1548, 0.0
      %1570 = vadd.xlane.f32.xlu0 %v1569
      %v1571 = vpop.xlane.xlu0 %1570
      %v1572 = vsel %vm1173, %v1550, 0.0
      %1573 = vadd.xlane.f32.xlu0 %v1572
      %v1574 = vpop.xlane.xlu0 %1573
      %v1575 = vrcp.pop %v1553
      %v1576 = vrcp.pop %v1556
      %v1577 = vrcp.pop %v1559
      %v1578 = vrcp.pop %v1562
      %v1579 = vrcp.pop %v1565
      %v1580 = vrcp.pop %v1568
      %v1581 = vrcp.pop %v1571
      %v1582 = vrcp.pop %v1574
      %v1583 = vmul.f32 %v1536, %v1575
      %v1584 = vmul.f32 %v1538, %v1576
      %v1585 = vmul.f32 %v1540, %v1577
      %v1586 = vmul.f32 %v1542, %v1578
      %v1587 = vmul.f32 %v1544, %v1579
      %v1588 = vmul.f32 %v1546, %v1580
      %v1589 = vmul.f32 %v1548, %v1581
      %v1590 = vmul.f32 %v1550, %v1582
      %v1591 = vpack.c.bf16 %v1584, %v1583
      %v1592 = vpack.c.bf16 %v1586, %v1585
      %v1593 = vpack.c.bf16 %v1588, %v1587
      %v1594 = vpack.c.bf16 %v1590, %v1589
      %1595 = vrot.lane.b32.xlu0 %v1381, 80
      %v1596 = vpop.permute.xlu0 %1595
      %1597 = vrot.lane.b32.xlu0 %v1382, 80
      %v1598 = vpop.permute.xlu0 %1597
      %1599 = vrot.lane.b32.xlu0 %v1383, 80
      %v1600 = vpop.permute.xlu0 %1599
      %1601 = vrot.lane.b32.xlu0 %v1384, 80
      %v1602 = vpop.permute.xlu0 %1601
      %v1608 = vsel %vm1173, %v1591, 0
      %v1611 = vsel %vm1173, %v1592, 0
      %v1614 = vsel %vm1173, %v1593, 0
      %v1617 = vsel %vm1173, %v1594, 0
      %1619 = vmatprep.subr.bf16.mxu0 0
      %1620 = vmatpush1.bf16.msra.mxu0 0
      %1621 = vmatprep.subr.bf16.mxu0 0
      %1622 = vmatpush1.bf16.msra.mxu0 0
      %1623 = vmatprep.subr.bf16.mxu0 0
      %1624 = vmatpush1.bf16.msra.mxu0 0
      %1625 = vmatprep.subr.bf16.mxu0 0
      %1626 = vmatpush1.bf16.msra.mxu0 0
      %1627 = vmatprep.subr.bf16.mxu0 0
      %1628 = vmatpush1.bf16.msra.mxu0 %v1602
      %1629 = vmatprep.subr.bf16.mxu0 0
      %1630 = vmatpush1.bf16.msra.mxu0 %v1600
      %1631 = vmatprep.subr.bf16.mxu0 0
      %1632 = vmatpush1.bf16.msra.mxu0 %v1598
      %1633 = vmatprep.subr.bf16.mxu0 0
      %1634 = vmatpush1.bf16.msra.mxu0 %v1596
      %1635 = vmatprep.subr.bf16.mxu0 0
      %1636 = vmatpush2.bf16.msra.mxu0 0
      %1637 = vmatprep.subr.bf16.mxu0 0
      %1638 = vmatpush2.bf16.msra.mxu0 0
      %1639 = vmatprep.subr.bf16.mxu0 0
      %1640 = vmatpush2.bf16.msra.mxu0 0
      %1641 = vmatprep.subr.bf16.mxu0 0
      %1642 = vmatpush2.bf16.msra.mxu0 0
      %1643 = vmatprep.subr.bf16.mxu0 0
      %1644 = vmatpush2.bf16.msra.mxu0 0
      %1645 = vmatprep.subr.bf16.mxu0 0
      %1646 = vmatpush2.bf16.msra.mxu0 0
      %1647 = vmatprep.subr.bf16.mxu0 0
      %1648 = vmatpush2.bf16.msra.mxu0 0
      %1649 = vmatprep.subr.bf16.mxu0 0
      %1650 = vmatpush2.bf16.msra.mxu0 0
      %1651 = vmatprep.mubr.bf16.mxu0 0
      %1652 = vmatmul.mubr.bf16.gmra.mxu0 %v1608
      %v1653 = vpop.f32.mrf.mxu0
      %v1654 = vadd.f32 0.0, %v1653
      %v1655 = vpop.f32.mrf.mxu0
      %v1656 = vpop.f32.mrf.mxu0
      %v1657 = vadd.f32 0.0, %v1656
      %v1658 = vpop.f32.mrf.mxu0
      %1659 = vmatprep.mubr.bf16.mxu0 0
      %1660 = vmatmul.mubr.bf16.gmra.mxu0 %v1611
      %v1661 = vpop.f32.mrf.mxu0
      %v1662 = vadd.f32 0.0, %v1661
      %v1663 = vpop.f32.mrf.mxu0
      %v1664 = vpop.f32.mrf.mxu0
      %v1665 = vadd.f32 0.0, %v1664
      %v1666 = vpop.f32.mrf.mxu0
      %1667 = vmatprep.mubr.bf16.mxu0 0
      %1668 = vmatmul.mubr.bf16.gmra.mxu0 %v1614
      %v1669 = vpop.f32.mrf.mxu0
      %v1670 = vadd.f32 0.0, %v1669
      %v1671 = vpop.f32.mrf.mxu0
      %v1672 = vpop.f32.mrf.mxu0
      %v1673 = vadd.f32 0.0, %v1672
      %v1674 = vpop.f32.mrf.mxu0
      %1675 = vmatprep.mubr.bf16.mxu0 0
      %1676 = vmatmul.mubr.bf16.gmra.mxu0 %v1617
      %v1677 = vpop.f32.mrf.mxu0
      %v1678 = vadd.f32 0.0, %v1677
      %v1679 = vpop.f32.mrf.mxu0
      %v1680 = vpop.f32.mrf.mxu0
      %v1681 = vadd.f32 0.0, %v1680
      %v1682 = vpop.f32.mrf.mxu0
      %1683 = vdwg.mxu0
      %1684 = vrot.lane.b32.xlu0 %v1381, 108
      %v1685 = vpop.permute.xlu0 %1684
      %1686 = vrot.lane.b32.xlu0 %v1382, 108
      %v1687 = vpop.permute.xlu0 %1686
      %1688 = vrot.lane.b32.xlu0 %v1383, 108
      %v1689 = vpop.permute.xlu0 %1688
      %1690 = vrot.lane.b32.xlu0 %v1384, 108
      %v1691 = vpop.permute.xlu0 %1690
      %1692 = vrot.lane.b32.xlu0 %v1381, 92
      %v1693 = vpop.permute.xlu0 %1692
      %1694 = vrot.lane.b32.xlu0 %v1382, 92
      %v1695 = vpop.permute.xlu0 %1694
      %1696 = vrot.lane.b32.xlu0 %v1383, 92
      %v1697 = vpop.permute.xlu0 %1696
      %1698 = vrot.lane.b32.xlu0 %v1384, 92
      %v1699 = vpop.permute.xlu0 %1698
      %v1701 = vsel %vm1405, %v1685, 0
      %v1704 = vsel %vm1405, %v1687, 0
      %v1707 = vsel %vm1405, %v1689, 0
      %v1710 = vsel %vm1405, %v1691, 0
      %v1713 = vsel %vm1405, %v1693, 0
      %v1716 = vsel %vm1405, %v1695, 0
      %v1719 = vsel %vm1405, %v1697, 0
      %v1722 = vsel %vm1405, %v1699, 0
      %1724 = vmatprep.subr.bf16.mxu0 0
      %1725 = vmatpush1.bf16.xpose.msra.mxu0 0
      %1726 = vmatprep.subr.bf16.mxu0 0
      %1727 = vmatpush1.bf16.xpose.msra.mxu0 0
      %1728 = vmatprep.subr.bf16.mxu0 0
      %1729 = vmatpush1.bf16.xpose.msra.mxu0 0
      %1730 = vmatprep.subr.bf16.mxu0 0
      %1731 = vmatpush1.bf16.xpose.msra.mxu0 0
      %1732 = vmatprep.subr.bf16.mxu0 0
      %1733 = vmatpush1.bf16.xpose.msra.mxu0 %v1722
      %1734 = vmatprep.subr.bf16.mxu0 0
      %1735 = vmatpush1.bf16.xpose.msra.mxu0 %v1719
      %1736 = vmatprep.subr.bf16.mxu0 0
      %1737 = vmatpush1.bf16.xpose.msra.mxu0 %v1716
      %1738 = vmatprep.subr.bf16.mxu0 0
      %1739 = vmatpush1.bf16.xpose.msra.mxu0 %v1713
      %1740 = vmatprep.subr.bf16.mxu0 0
      %1741 = vmatpush2.bf16.xpose.msra.mxu0 0
      %1742 = vmatprep.subr.bf16.mxu0 0
      %1743 = vmatpush2.bf16.xpose.msra.mxu0 0
      %1744 = vmatprep.subr.bf16.mxu0 0
      %1745 = vmatpush2.bf16.xpose.msra.mxu0 0
      %1746 = vmatprep.subr.bf16.mxu0 0
      %1747 = vmatpush2.bf16.xpose.msra.mxu0 0
      %1748 = vmatprep.subr.bf16.mxu0 0
      %1749 = vmatpush2.bf16.xpose.msra.mxu0 0
      %1750 = vmatprep.subr.bf16.mxu0 0
      %1751 = vmatpush2.bf16.xpose.msra.mxu0 0
      %1752 = vmatprep.subr.bf16.mxu0 0
      %1753 = vmatpush2.bf16.xpose.msra.mxu0 0
      %1754 = vmatprep.subr.bf16.mxu0 0
      %1755 = vmatpush2.bf16.xpose.msra.mxu0 0
      %1756 = vmatprep.mubr.bf16.mxu0 0
      %1757 = vmatmul.mubr.bf16.gmra.mxu0 %v1701
      %v1758 = vpop.f32.mrf.mxu0
      %v1759 = vadd.f32 0.0, %v1758
      %v1760 = vpop.f32.mrf.mxu0
      %v1761 = vpop.f32.mrf.mxu0
      %v1762 = vadd.f32 0.0, %v1761
      %v1763 = vpop.f32.mrf.mxu0
      %1764 = vmatprep.mubr.bf16.mxu0 0
      %1765 = vmatmul.mubr.bf16.gmra.mxu0 %v1704
      %v1766 = vpop.f32.mrf.mxu0
      %v1767 = vadd.f32 0.0, %v1766
      %v1768 = vpop.f32.mrf.mxu0
      %v1769 = vpop.f32.mrf.mxu0
      %v1770 = vadd.f32 0.0, %v1769
      %v1771 = vpop.f32.mrf.mxu0
      %1772 = vmatprep.mubr.bf16.mxu0 0
      %1773 = vmatmul.mubr.bf16.gmra.mxu0 %v1707
      %v1774 = vpop.f32.mrf.mxu0
      %v1775 = vadd.f32 0.0, %v1774
      %v1776 = vpop.f32.mrf.mxu0
      %v1777 = vpop.f32.mrf.mxu0
      %v1778 = vadd.f32 0.0, %v1777
      %v1779 = vpop.f32.mrf.mxu0
      %1780 = vmatprep.mubr.bf16.mxu0 0
      %1781 = vmatmul.mubr.bf16.gmra.mxu0 %v1710
      %v1782 = vpop.f32.mrf.mxu0
      %v1783 = vadd.f32 0.0, %v1782
      %v1784 = vpop.f32.mrf.mxu0
      %v1785 = vpop.f32.mrf.mxu0
      %v1786 = vadd.f32 0.0, %v1785
      %v1787 = vpop.f32.mrf.mxu0
      %1788 = vdwg.mxu0
      %v1789 = vmul.f32 %v1759, 0.5
      %v1790 = vmul.f32 %v1762, 0.5
      %v1791 = vmul.f32 %v1767, 0.5
      %v1792 = vmul.f32 %v1770, 0.5
      %v1793 = vmul.f32 %v1775, 0.5
      %v1794 = vmul.f32 %v1778, 0.5
      %v1795 = vmul.f32 %v1783, 0.5
      %v1796 = vmul.f32 %v1786, 0.5
      %v1797 = vsel %vm1173, %v1789, -inf
      %1798 = vmax.xlane.f32.xlu0 %v1797
      %v1799 = vpop.xlane.xlu0 %1798
      %v1800 = vsel %vm1173, %v1790, -inf
      %1801 = vmax.xlane.f32.xlu0 %v1800
      %v1802 = vpop.xlane.xlu0 %1801
      %v1803 = vsel %vm1173, %v1791, -inf
      %1804 = vmax.xlane.f32.xlu0 %v1803
      %v1805 = vpop.xlane.xlu0 %1804
      %v1806 = vsel %vm1173, %v1792, -inf
      %1807 = vmax.xlane.f32.xlu0 %v1806
      %v1808 = vpop.xlane.xlu0 %1807
      %v1809 = vsel %vm1173, %v1793, -inf
      %1810 = vmax.xlane.f32.xlu0 %v1809
      %v1811 = vpop.xlane.xlu0 %1810
      %v1812 = vsel %vm1173, %v1794, -inf
      %1813 = vmax.xlane.f32.xlu0 %v1812
      %v1814 = vpop.xlane.xlu0 %1813
      %v1815 = vsel %vm1173, %v1795, -inf
      %1816 = vmax.xlane.f32.xlu0 %v1815
      %v1817 = vpop.xlane.xlu0 %1816
      %v1818 = vsel %vm1173, %v1796, -inf
      %1819 = vmax.xlane.f32.xlu0 %v1818
      %v1820 = vpop.xlane.xlu0 %1819
      %v1821 = vsub.f32 %v1789, %v1799
      %v1822 = vsub.f32 %v1790, %v1802
      %v1823 = vsub.f32 %v1791, %v1805
      %v1824 = vsub.f32 %v1792, %v1808
      %v1825 = vsub.f32 %v1793, %v1811
      %v1826 = vsub.f32 %v1794, %v1814
      %v1827 = vsub.f32 %v1795, %v1817
      %v1828 = vsub.f32 %v1796, %v1820
      %v1829 = vmul.f32 %v1821, 1.442695
      %v1830 = vpow.pop %v1829
      %v1831 = vmul.f32 %v1822, 1.442695
      %v1832 = vpow.pop %v1831
      %v1833 = vmul.f32 %v1823, 1.442695
      %v1834 = vpow.pop %v1833
      %v1835 = vmul.f32 %v1824, 1.442695
      %v1836 = vpow.pop %v1835
      %v1837 = vmul.f32 %v1825, 1.442695
      %v1838 = vpow.pop %v1837
      %v1839 = vmul.f32 %v1826, 1.442695
      %v1840 = vpow.pop %v1839
      %v1841 = vmul.f32 %v1827, 1.442695
      %v1842 = vpow.pop %v1841
      %v1843 = vmul.f32 %v1828, 1.442695
      %v1844 = vpow.pop %v1843
      %v1845 = vsel %vm1173, %v1830, 0.0
      %1846 = vadd.xlane.f32.xlu0 %v1845
      %v1847 = vpop.xlane.xlu0 %1846
      %v1848 = vsel %vm1173, %v1832, 0.0
      %1849 = vadd.xlane.f32.xlu0 %v1848
      %v1850 = vpop.xlane.xlu0 %1849
      %v1851 = vsel %vm1173, %v1834, 0.0
      %1852 = vadd.xlane.f32.xlu0 %v1851
      %v1853 = vpop.xlane.xlu0 %1852
      %v1854 = vsel %vm1173, %v1836, 0.0
      %1855 = vadd.xlane.f32.xlu0 %v1854
      %v1856 = vpop.xlane.xlu0 %1855
      %v1857 = vsel %vm1173, %v1838, 0.0
      %1858 = vadd.xlane.f32.xlu0 %v1857
      %v1859 = vpop.xlane.xlu0 %1858
      %v1860 = vsel %vm1173, %v1840, 0.0
      %1861 = vadd.xlane.f32.xlu0 %v1860
      %v1862 = vpop.xlane.xlu0 %1861
      %v1863 = vsel %vm1173, %v1842, 0.0
      %1864 = vadd.xlane.f32.xlu0 %v1863
      %v1865 = vpop.xlane.xlu0 %1864
      %v1866 = vsel %vm1173, %v1844, 0.0
      %1867 = vadd.xlane.f32.xlu0 %v1866
      %v1868 = vpop.xlane.xlu0 %1867
      %v1869 = vrcp.pop %v1847
      %v1870 = vrcp.pop %v1850
      %v1871 = vrcp.pop %v1853
      %v1872 = vrcp.pop %v1856
      %v1873 = vrcp.pop %v1859
      %v1874 = vrcp.pop %v1862
      %v1875 = vrcp.pop %v1865
      %v1876 = vrcp.pop %v1868
      %v1877 = vmul.f32 %v1830, %v1869
      %v1878 = vmul.f32 %v1832, %v1870
      %v1879 = vmul.f32 %v1834, %v1871
      %v1880 = vmul.f32 %v1836, %v1872
      %v1881 = vmul.f32 %v1838, %v1873
      %v1882 = vmul.f32 %v1840, %v1874
      %v1883 = vmul.f32 %v1842, %v1875
      %v1884 = vmul.f32 %v1844, %v1876
      %v1885 = vpack.c.bf16 %v1878, %v1877
      %v1886 = vpack.c.bf16 %v1880, %v1879
      %v1887 = vpack.c.bf16 %v1882, %v1881
      %v1888 = vpack.c.bf16 %v1884, %v1883
      %1889 = vrot.lane.b32.xlu0 %v1381, 76
      %v1890 = vpop.permute.xlu0 %1889
      %1891 = vrot.lane.b32.xlu0 %v1382, 76
      %v1892 = vpop.permute.xlu0 %1891
      %1893 = vrot.lane.b32.xlu0 %v1383, 76
      %v1894 = vpop.permute.xlu0 %1893
      %1895 = vrot.lane.b32.xlu0 %v1384, 76
      %v1896 = vpop.permute.xlu0 %1895
      %v1902 = vsel %vm1173, %v1885, 0
      %v1905 = vsel %vm1173, %v1886, 0
      %v1908 = vsel %vm1173, %v1887, 0
      %v1911 = vsel %vm1173, %v1888, 0
      %1913 = vmatprep.subr.bf16.mxu0 0
      %1914 = vmatpush1.bf16.msra.mxu0 0
      %1915 = vmatprep.subr.bf16.mxu0 0
      %1916 = vmatpush1.bf16.msra.mxu0 0
      %1917 = vmatprep.subr.bf16.mxu0 0
      %1918 = vmatpush1.bf16.msra.mxu0 0
      %1919 = vmatprep.subr.bf16.mxu0 0
      %1920 = vmatpush1.bf16.msra.mxu0 0
      %1921 = vmatprep.subr.bf16.mxu0 0
      %1922 = vmatpush1.bf16.msra.mxu0 %v1896
      %1923 = vmatprep.subr.bf16.mxu0 0
      %1924 = vmatpush1.bf16.msra.mxu0 %v1894
      %1925 = vmatprep.subr.bf16.mxu0 0
      %1926 = vmatpush1.bf16.msra.mxu0 %v1892
      %1927 = vmatprep.subr.bf16.mxu0 0
      %1928 = vmatpush1.bf16.msra.mxu0 %v1890
      %1929 = vmatprep.subr.bf16.mxu0 0
      %1930 = vmatpush2.bf16.msra.mxu0 0
      %1931 = vmatprep.subr.bf16.mxu0 0
      %1932 = vmatpush2.bf16.msra.mxu0 0
      %1933 = vmatprep.subr.bf16.mxu0 0
      %1934 = vmatpush2.bf16.msra.mxu0 0
      %1935 = vmatprep.subr.bf16.mxu0 0
      %1936 = vmatpush2.bf16.msra.mxu0 0
      %1937 = vmatprep.subr.bf16.mxu0 0
      %1938 = vmatpush2.bf16.msra.mxu0 0
      %1939 = vmatprep.subr.bf16.mxu0 0
      %1940 = vmatpush2.bf16.msra.mxu0 0
      %1941 = vmatprep.subr.bf16.mxu0 0
      %1942 = vmatpush2.bf16.msra.mxu0 0
      %1943 = vmatprep.subr.bf16.mxu0 0
      %1944 = vmatpush2.bf16.msra.mxu0 0
      %1945 = vmatprep.mubr.bf16.mxu0 0
      %1946 = vmatmul.mubr.bf16.gmra.mxu0 %v1902
      %v1947 = vpop.f32.mrf.mxu0
      %v1948 = vadd.f32 0.0, %v1947
      %v1949 = vpop.f32.mrf.mxu0
      %v1950 = vpop.f32.mrf.mxu0
      %v1951 = vadd.f32 0.0, %v1950
      %v1952 = vpop.f32.mrf.mxu0
      %1953 = vmatprep.mubr.bf16.mxu0 0
      %1954 = vmatmul.mubr.bf16.gmra.mxu0 %v1905
      %v1955 = vpop.f32.mrf.mxu0
      %v1956 = vadd.f32 0.0, %v1955
      %v1957 = vpop.f32.mrf.mxu0
      %v1958 = vpop.f32.mrf.mxu0
      %v1959 = vadd.f32 0.0, %v1958
      %v1960 = vpop.f32.mrf.mxu0
      %1961 = vmatprep.mubr.bf16.mxu0 0
      %1962 = vmatmul.mubr.bf16.gmra.mxu0 %v1908
      %v1963 = vpop.f32.mrf.mxu0
      %v1964 = vadd.f32 0.0, %v1963
      %v1965 = vpop.f32.mrf.mxu0
      %v1966 = vpop.f32.mrf.mxu0
      %v1967 = vadd.f32 0.0, %v1966
      %v1968 = vpop.f32.mrf.mxu0
      %1969 = vmatprep.mubr.bf16.mxu0 0
      %1970 = vmatmul.mubr.bf16.gmra.mxu0 %v1911
      %v1971 = vpop.f32.mrf.mxu0
      %v1972 = vadd.f32 0.0, %v1971
      %v1973 = vpop.f32.mrf.mxu0
      %v1974 = vpop.f32.mrf.mxu0
      %v1975 = vadd.f32 0.0, %v1974
      %v1976 = vpop.f32.mrf.mxu0
      %1977 = vdwg.mxu0
      %1978 = vrot.lane.b32.xlu0 %v1381, 104
      %v1979 = vpop.permute.xlu0 %1978
      %1980 = vrot.lane.b32.xlu0 %v1382, 104
      %v1981 = vpop.permute.xlu0 %1980
      %1982 = vrot.lane.b32.xlu0 %v1383, 104
      %v1983 = vpop.permute.xlu0 %1982
      %1984 = vrot.lane.b32.xlu0 %v1384, 104
      %v1985 = vpop.permute.xlu0 %1984
      %1986 = vrot.lane.b32.xlu0 %v1381, 88
      %v1987 = vpop.permute.xlu0 %1986
      %1988 = vrot.lane.b32.xlu0 %v1382, 88
      %v1989 = vpop.permute.xlu0 %1988
      %1990 = vrot.lane.b32.xlu0 %v1383, 88
      %v1991 = vpop.permute.xlu0 %1990
      %1992 = vrot.lane.b32.xlu0 %v1384, 88
      %v1993 = vpop.permute.xlu0 %1992
      %v1995 = vsel %vm1405, %v1979, 0
      %v1998 = vsel %vm1405, %v1981, 0
      %v2001 = vsel %vm1405, %v1983, 0
      %v2004 = vsel %vm1405, %v1985, 0
      %v2007 = vsel %vm1405, %v1987, 0
      %v2010 = vsel %vm1405, %v1989, 0
      %v2013 = vsel %vm1405, %v1991, 0
      %v2016 = vsel %vm1405, %v1993, 0
      %2018 = vmatprep.subr.bf16.mxu0 0
      %2019 = vmatpush1.bf16.xpose.msra.mxu0 0
      %2020 = vmatprep.subr.bf16.mxu0 0
      %2021 = vmatpush1.bf16.xpose.msra.mxu0 0
      %2022 = vmatprep.subr.bf16.mxu0 0
      %2023 = vmatpush1.bf16.xpose.msra.mxu0 0
      %2024 = vmatprep.subr.bf16.mxu0 0
      %2025 = vmatpush1.bf16.xpose.msra.mxu0 0
      %2026 = vmatprep.subr.bf16.mxu0 0
      %2027 = vmatpush1.bf16.xpose.msra.mxu0 %v2016
      %2028 = vmatprep.subr.bf16.mxu0 0
      %2029 = vmatpush1.bf16.xpose.msra.mxu0 %v2013
      %2030 = vmatprep.subr.bf16.mxu0 0
      %2031 = vmatpush1.bf16.xpose.msra.mxu0 %v2010
      %2032 = vmatprep.subr.bf16.mxu0 0
      %2033 = vmatpush1.bf16.xpose.msra.mxu0 %v2007
      %2034 = vmatprep.subr.bf16.mxu0 0
      %2035 = vmatpush2.bf16.xpose.msra.mxu0 0
      %2036 = vmatprep.subr.bf16.mxu0 0
      %2037 = vmatpush2.bf16.xpose.msra.mxu0 0
      %2038 = vmatprep.subr.bf16.mxu0 0
      %2039 = vmatpush2.bf16.xpose.msra.mxu0 0
      %2040 = vmatprep.subr.bf16.mxu0 0
      %2041 = vmatpush2.bf16.xpose.msra.mxu0 0
      %2042 = vmatprep.subr.bf16.mxu0 0
      %2043 = vmatpush2.bf16.xpose.msra.mxu0 0
      %2044 = vmatprep.subr.bf16.mxu0 0
      %2045 = vmatpush2.bf16.xpose.msra.mxu0 0
      %2046 = vmatprep.subr.bf16.mxu0 0
      %2047 = vmatpush2.bf16.xpose.msra.mxu0 0
      %2048 = vmatprep.subr.bf16.mxu0 0
      %2049 = vmatpush2.bf16.xpose.msra.mxu0 0
      %2050 = vmatprep.mubr.bf16.mxu0 0
      %2051 = vmatmul.mubr.bf16.gmra.mxu0 %v1995
      %v2052 = vpop.f32.mrf.mxu0
      %v2053 = vadd.f32 0.0, %v2052
      %v2054 = vpop.f32.mrf.mxu0
      %v2055 = vpop.f32.mrf.mxu0
      %v2056 = vadd.f32 0.0, %v2055
      %v2057 = vpop.f32.mrf.mxu0
      %2058 = vmatprep.mubr.bf16.mxu0 0
      %2059 = vmatmul.mubr.bf16.gmra.mxu0 %v1998
      %v2060 = vpop.f32.mrf.mxu0
      %v2061 = vadd.f32 0.0, %v2060
      %v2062 = vpop.f32.mrf.mxu0
      %v2063 = vpop.f32.mrf.mxu0
      %v2064 = vadd.f32 0.0, %v2063
      %v2065 = vpop.f32.mrf.mxu0
      %2066 = vmatprep.mubr.bf16.mxu0 0
      %2067 = vmatmul.mubr.bf16.gmra.mxu0 %v2001
      %v2068 = vpop.f32.mrf.mxu0
      %v2069 = vadd.f32 0.0, %v2068
      %v2070 = vpop.f32.mrf.mxu0
      %v2071 = vpop.f32.mrf.mxu0
      %v2072 = vadd.f32 0.0, %v2071
      %v2073 = vpop.f32.mrf.mxu0
      %2074 = vmatprep.mubr.bf16.mxu0 0
      %2075 = vmatmul.mubr.bf16.gmra.mxu0 %v2004
      %v2076 = vpop.f32.mrf.mxu0
      %v2077 = vadd.f32 0.0, %v2076
      %v2078 = vpop.f32.mrf.mxu0
      %v2079 = vpop.f32.mrf.mxu0
      %v2080 = vadd.f32 0.0, %v2079
      %v2081 = vpop.f32.mrf.mxu0
      %2082 = vdwg.mxu0
      %v2083 = vmul.f32 %v2053, 0.5
      %v2084 = vmul.f32 %v2056, 0.5
      %v2085 = vmul.f32 %v2061, 0.5
      %v2086 = vmul.f32 %v2064, 0.5
      %v2087 = vmul.f32 %v2069, 0.5
      %v2088 = vmul.f32 %v2072, 0.5
      %v2089 = vmul.f32 %v2077, 0.5
      %v2090 = vmul.f32 %v2080, 0.5
      %v2091 = vsel %vm1173, %v2083, -inf
      %2092 = vmax.xlane.f32.xlu0 %v2091
      %v2093 = vpop.xlane.xlu0 %2092
      %v2094 = vsel %vm1173, %v2084, -inf
      %2095 = vmax.xlane.f32.xlu0 %v2094
      %v2096 = vpop.xlane.xlu0 %2095
      %v2097 = vsel %vm1173, %v2085, -inf
      %2098 = vmax.xlane.f32.xlu0 %v2097
      %v2099 = vpop.xlane.xlu0 %2098
      %v2100 = vsel %vm1173, %v2086, -inf
      %2101 = vmax.xlane.f32.xlu0 %v2100
      %v2102 = vpop.xlane.xlu0 %2101
      %v2103 = vsel %vm1173, %v2087, -inf
      %2104 = vmax.xlane.f32.xlu0 %v2103
      %v2105 = vpop.xlane.xlu0 %2104
      %v2106 = vsel %vm1173, %v2088, -inf
      %2107 = vmax.xlane.f32.xlu0 %v2106
      %v2108 = vpop.xlane.xlu0 %2107
      %v2109 = vsel %vm1173, %v2089, -inf
      %2110 = vmax.xlane.f32.xlu0 %v2109
      %v2111 = vpop.xlane.xlu0 %2110
      %v2112 = vsel %vm1173, %v2090, -inf
      %2113 = vmax.xlane.f32.xlu0 %v2112
      %v2114 = vpop.xlane.xlu0 %2113
      %v2115 = vsub.f32 %v2083, %v2093
      %v2116 = vsub.f32 %v2084, %v2096
      %v2117 = vsub.f32 %v2085, %v2099
      %v2118 = vsub.f32 %v2086, %v2102
      %v2119 = vsub.f32 %v2087, %v2105
      %v2120 = vsub.f32 %v2088, %v2108
      %v2121 = vsub.f32 %v2089, %v2111
      %v2122 = vsub.f32 %v2090, %v2114
      %v2123 = vmul.f32 %v2115, 1.442695
      %v2124 = vpow.pop %v2123
      %v2125 = vmul.f32 %v2116, 1.442695
      %v2126 = vpow.pop %v2125
      %v2127 = vmul.f32 %v2117, 1.442695
      %v2128 = vpow.pop %v2127
      %v2129 = vmul.f32 %v2118, 1.442695
      %v2130 = vpow.pop %v2129
      %v2131 = vmul.f32 %v2119, 1.442695
      %v2132 = vpow.pop %v2131
      %v2133 = vmul.f32 %v2120, 1.442695
      %v2134 = vpow.pop %v2133
      %v2135 = vmul.f32 %v2121, 1.442695
      %v2136 = vpow.pop %v2135
      %v2137 = vmul.f32 %v2122, 1.442695
      %v2138 = vpow.pop %v2137
      %v2139 = vsel %vm1173, %v2124, 0.0
      %2140 = vadd.xlane.f32.xlu0 %v2139
      %v2141 = vpop.xlane.xlu0 %2140
      %v2142 = vsel %vm1173, %v2126, 0.0
      %2143 = vadd.xlane.f32.xlu0 %v2142
      %v2144 = vpop.xlane.xlu0 %2143
      %v2145 = vsel %vm1173, %v2128, 0.0
      %2146 = vadd.xlane.f32.xlu0 %v2145
      %v2147 = vpop.xlane.xlu0 %2146
      %v2148 = vsel %vm1173, %v2130, 0.0
      %2149 = vadd.xlane.f32.xlu0 %v2148
      %v2150 = vpop.xlane.xlu0 %2149
      %v2151 = vsel %vm1173, %v2132, 0.0
      %2152 = vadd.xlane.f32.xlu0 %v2151
      %v2153 = vpop.xlane.xlu0 %2152
      %v2154 = vsel %vm1173, %v2134, 0.0
      %2155 = vadd.xlane.f32.xlu0 %v2154
      %v2156 = vpop.xlane.xlu0 %2155
      %v2157 = vsel %vm1173, %v2136, 0.0
      %2158 = vadd.xlane.f32.xlu0 %v2157
      %v2159 = vpop.xlane.xlu0 %2158
      %v2160 = vsel %vm1173, %v2138, 0.0
      %2161 = vadd.xlane.f32.xlu0 %v2160
      %v2162 = vpop.xlane.xlu0 %2161
      %v2163 = vrcp.pop %v2141
      %v2164 = vrcp.pop %v2144
      %v2165 = vrcp.pop %v2147
      %v2166 = vrcp.pop %v2150
      %v2167 = vrcp.pop %v2153
      %v2168 = vrcp.pop %v2156
      %v2169 = vrcp.pop %v2159
      %v2170 = vrcp.pop %v2162
      %v2171 = vmul.f32 %v2124, %v2163
      %v2172 = vmul.f32 %v2126, %v2164
      %v2173 = vmul.f32 %v2128, %v2165
      %v2174 = vmul.f32 %v2130, %v2166
      %v2175 = vmul.f32 %v2132, %v2167
      %v2176 = vmul.f32 %v2134, %v2168
      %v2177 = vmul.f32 %v2136, %v2169
      %v2178 = vmul.f32 %v2138, %v2170
      %v2179 = vpack.c.bf16 %v2172, %v2171
      %v2180 = vpack.c.bf16 %v2174, %v2173
      %v2181 = vpack.c.bf16 %v2176, %v2175
      %v2182 = vpack.c.bf16 %v2178, %v2177
      %2183 = vrot.lane.b32.xlu0 %v1381, 72
      %v2184 = vpop.permute.xlu0 %2183
      %2185 = vrot.lane.b32.xlu0 %v1382, 72
      %v2186 = vpop.permute.xlu0 %2185
      %2187 = vrot.lane.b32.xlu0 %v1383, 72
      %v2188 = vpop.permute.xlu0 %2187
      %2189 = vrot.lane.b32.xlu0 %v1384, 72
      %v2190 = vpop.permute.xlu0 %2189
      %v2196 = vsel %vm1173, %v2179, 0
      %v2199 = vsel %vm1173, %v2180, 0
      %v2202 = vsel %vm1173, %v2181, 0
      %v2205 = vsel %vm1173, %v2182, 0
      %2207 = vmatprep.subr.bf16.mxu0 0
      %2208 = vmatpush1.bf16.msra.mxu0 0
      %2209 = vmatprep.subr.bf16.mxu0 0
      %2210 = vmatpush1.bf16.msra.mxu0 0
      %2211 = vmatprep.subr.bf16.mxu0 0
      %2212 = vmatpush1.bf16.msra.mxu0 0
      %2213 = vmatprep.subr.bf16.mxu0 0
      %2214 = vmatpush1.bf16.msra.mxu0 0
      %2215 = vmatprep.subr.bf16.mxu0 0
      %2216 = vmatpush1.bf16.msra.mxu0 %v2190
      %2217 = vmatprep.subr.bf16.mxu0 0
      %2218 = vmatpush1.bf16.msra.mxu0 %v2188
      %2219 = vmatprep.subr.bf16.mxu0 0
      %2220 = vmatpush1.bf16.msra.mxu0 %v2186
      %2221 = vmatprep.subr.bf16.mxu0 0
      %2222 = vmatpush1.bf16.msra.mxu0 %v2184
      %2223 = vmatprep.subr.bf16.mxu0 0
      %2224 = vmatpush2.bf16.msra.mxu0 0
      %2225 = vmatprep.subr.bf16.mxu0 0
      %2226 = vmatpush2.bf16.msra.mxu0 0
      %2227 = vmatprep.subr.bf16.mxu0 0
      %2228 = vmatpush2.bf16.msra.mxu0 0
      %2229 = vmatprep.subr.bf16.mxu0 0
      %2230 = vmatpush2.bf16.msra.mxu0 0
      %2231 = vmatprep.subr.bf16.mxu0 0
      %2232 = vmatpush2.bf16.msra.mxu0 0
      %2233 = vmatprep.subr.bf16.mxu0 0
      %2234 = vmatpush2.bf16.msra.mxu0 0
      %2235 = vmatprep.subr.bf16.mxu0 0
      %2236 = vmatpush2.bf16.msra.mxu0 0
      %2237 = vmatprep.subr.bf16.mxu0 0
      %2238 = vmatpush2.bf16.msra.mxu0 0
      %2239 = vmatprep.mubr.bf16.mxu0 0
      %2240 = vmatmul.mubr.bf16.gmra.mxu0 %v2196
      %v2241 = vpop.f32.mrf.mxu0
      %v2242 = vadd.f32 0.0, %v2241
      %v2243 = vpop.f32.mrf.mxu0
      %v2244 = vpop.f32.mrf.mxu0
      %v2245 = vadd.f32 0.0, %v2244
      %v2246 = vpop.f32.mrf.mxu0
      %2247 = vmatprep.mubr.bf16.mxu0 0
      %2248 = vmatmul.mubr.bf16.gmra.mxu0 %v2199
      %v2249 = vpop.f32.mrf.mxu0
      %v2250 = vadd.f32 0.0, %v2249
      %v2251 = vpop.f32.mrf.mxu0
      %v2252 = vpop.f32.mrf.mxu0
      %v2253 = vadd.f32 0.0, %v2252
      %v2254 = vpop.f32.mrf.mxu0
      %2255 = vmatprep.mubr.bf16.mxu0 0
      %2256 = vmatmul.mubr.bf16.gmra.mxu0 %v2202
      %v2257 = vpop.f32.mrf.mxu0
      %v2258 = vadd.f32 0.0, %v2257
      %v2259 = vpop.f32.mrf.mxu0
      %v2260 = vpop.f32.mrf.mxu0
      %v2261 = vadd.f32 0.0, %v2260
      %v2262 = vpop.f32.mrf.mxu0
      %2263 = vmatprep.mubr.bf16.mxu0 0
      %2264 = vmatmul.mubr.bf16.gmra.mxu0 %v2205
      %v2265 = vpop.f32.mrf.mxu0
      %v2266 = vadd.f32 0.0, %v2265
      %v2267 = vpop.f32.mrf.mxu0
      %v2268 = vpop.f32.mrf.mxu0
      %v2269 = vadd.f32 0.0, %v2268
      %v2270 = vpop.f32.mrf.mxu0
      %2271 = vdwg.mxu0
      %2272 = vrot.lane.b32.xlu0 %v1381, 100
      %v2273 = vpop.permute.xlu0 %2272
      %2274 = vrot.lane.b32.xlu0 %v1382, 100
      %v2275 = vpop.permute.xlu0 %2274
      %2276 = vrot.lane.b32.xlu0 %v1383, 100
      %v2277 = vpop.permute.xlu0 %2276
      %2278 = vrot.lane.b32.xlu0 %v1384, 100
      %v2279 = vpop.permute.xlu0 %2278
      %2280 = vrot.lane.b32.xlu0 %v1381, 84
      %v2281 = vpop.permute.xlu0 %2280
      %2282 = vrot.lane.b32.xlu0 %v1382, 84
      %v2283 = vpop.permute.xlu0 %2282
      %2284 = vrot.lane.b32.xlu0 %v1383, 84
      %v2285 = vpop.permute.xlu0 %2284
      %2286 = vrot.lane.b32.xlu0 %v1384, 84
      %v2287 = vpop.permute.xlu0 %2286
      %v2289 = vsel %vm1405, %v2273, 0
      %v2292 = vsel %vm1405, %v2275, 0
      %v2295 = vsel %vm1405, %v2277, 0
      %v2298 = vsel %vm1405, %v2279, 0
      %v2301 = vsel %vm1405, %v2281, 0
      %v2304 = vsel %vm1405, %v2283, 0
      %v2307 = vsel %vm1405, %v2285, 0
      %v2310 = vsel %vm1405, %v2287, 0
      %2312 = vmatprep.subr.bf16.mxu0 0
      %2313 = vmatpush1.bf16.xpose.msra.mxu0 0
      %2314 = vmatprep.subr.bf16.mxu0 0
      %2315 = vmatpush1.bf16.xpose.msra.mxu0 0
      %2316 = vmatprep.subr.bf16.mxu0 0
      %2317 = vmatpush1.bf16.xpose.msra.mxu0 0
      %2318 = vmatprep.subr.bf16.mxu0 0
      %2319 = vmatpush1.bf16.xpose.msra.mxu0 0
      %2320 = vmatprep.subr.bf16.mxu0 0
      %2321 = vmatpush1.bf16.xpose.msra.mxu0 %v2310
      %2322 = vmatprep.subr.bf16.mxu0 0
      %2323 = vmatpush1.bf16.xpose.msra.mxu0 %v2307
      %2324 = vmatprep.subr.bf16.mxu0 0
      %2325 = vmatpush1.bf16.xpose.msra.mxu0 %v2304
      %2326 = vmatprep.subr.bf16.mxu0 0
      %2327 = vmatpush1.bf16.xpose.msra.mxu0 %v2301
      %2328 = vmatprep.subr.bf16.mxu0 0
      %2329 = vmatpush2.bf16.xpose.msra.mxu0 0
      %2330 = vmatprep.subr.bf16.mxu0 0
      %2331 = vmatpush2.bf16.xpose.msra.mxu0 0
      %2332 = vmatprep.subr.bf16.mxu0 0
      %2333 = vmatpush2.bf16.xpose.msra.mxu0 0
      %2334 = vmatprep.subr.bf16.mxu0 0
      %2335 = vmatpush2.bf16.xpose.msra.mxu0 0
      %2336 = vmatprep.subr.bf16.mxu0 0
      %2337 = vmatpush2.bf16.xpose.msra.mxu0 0
      %2338 = vmatprep.subr.bf16.mxu0 0
      %2339 = vmatpush2.bf16.xpose.msra.mxu0 0
      %2340 = vmatprep.subr.bf16.mxu0 0
      %2341 = vmatpush2.bf16.xpose.msra.mxu0 0
      %2342 = vmatprep.subr.bf16.mxu0 0
      %2343 = vmatpush2.bf16.xpose.msra.mxu0 0
      %2344 = vmatprep.mubr.bf16.mxu0 0
      %2345 = vmatmul.mubr.bf16.gmra.mxu0 %v2289
      %v2346 = vpop.f32.mrf.mxu0
      %v2347 = vadd.f32 0.0, %v2346
      %v2348 = vpop.f32.mrf.mxu0
      %v2349 = vpop.f32.mrf.mxu0
      %v2350 = vadd.f32 0.0, %v2349
      %v2351 = vpop.f32.mrf.mxu0
      %2352 = vmatprep.mubr.bf16.mxu0 0
      %2353 = vmatmul.mubr.bf16.gmra.mxu0 %v2292
      %v2354 = vpop.f32.mrf.mxu0
      %v2355 = vadd.f32 0.0, %v2354
      %v2356 = vpop.f32.mrf.mxu0
      %v2357 = vpop.f32.mrf.mxu0
      %v2358 = vadd.f32 0.0, %v2357
      %v2359 = vpop.f32.mrf.mxu0
      %2360 = vmatprep.mubr.bf16.mxu0 0
      %2361 = vmatmul.mubr.bf16.gmra.mxu0 %v2295
      %v2362 = vpop.f32.mrf.mxu0
      %v2363 = vadd.f32 0.0, %v2362
      %v2364 = vpop.f32.mrf.mxu0
      %v2365 = vpop.f32.mrf.mxu0
      %v2366 = vadd.f32 0.0, %v2365
      %v2367 = vpop.f32.mrf.mxu0
      %2368 = vmatprep.mubr.bf16.mxu0 0
      %2369 = vmatmul.mubr.bf16.gmra.mxu0 %v2298
      %v2370 = vpop.f32.mrf.mxu0
      %v2371 = vadd.f32 0.0, %v2370
      %v2372 = vpop.f32.mrf.mxu0
      %v2373 = vpop.f32.mrf.mxu0
      %v2374 = vadd.f32 0.0, %v2373
      %v2375 = vpop.f32.mrf.mxu0
      %2376 = vdwg.mxu0
      %v2377 = vmul.f32 %v2347, 0.5
      %v2378 = vmul.f32 %v2350, 0.5
      %v2379 = vmul.f32 %v2355, 0.5
      %v2380 = vmul.f32 %v2358, 0.5
      %v2381 = vmul.f32 %v2363, 0.5
      %v2382 = vmul.f32 %v2366, 0.5
      %v2383 = vmul.f32 %v2371, 0.5
      %v2384 = vmul.f32 %v2374, 0.5
      %v2385 = vsel %vm1173, %v2377, -inf
      %2386 = vmax.xlane.f32.xlu0 %v2385
      %v2387 = vpop.xlane.xlu0 %2386
      %v2388 = vsel %vm1173, %v2378, -inf
      %2389 = vmax.xlane.f32.xlu0 %v2388
      %v2390 = vpop.xlane.xlu0 %2389
      %v2391 = vsel %vm1173, %v2379, -inf
      %2392 = vmax.xlane.f32.xlu0 %v2391
      %v2393 = vpop.xlane.xlu0 %2392
      %v2394 = vsel %vm1173, %v2380, -inf
      %2395 = vmax.xlane.f32.xlu0 %v2394
      %v2396 = vpop.xlane.xlu0 %2395
      %v2397 = vsel %vm1173, %v2381, -inf
      %2398 = vmax.xlane.f32.xlu0 %v2397
      %v2399 = vpop.xlane.xlu0 %2398
      %v2400 = vsel %vm1173, %v2382, -inf
      %2401 = vmax.xlane.f32.xlu0 %v2400
      %v2402 = vpop.xlane.xlu0 %2401
      %v2403 = vsel %vm1173, %v2383, -inf
      %2404 = vmax.xlane.f32.xlu0 %v2403
      %v2405 = vpop.xlane.xlu0 %2404
      %v2406 = vsel %vm1173, %v2384, -inf
      %2407 = vmax.xlane.f32.xlu0 %v2406
      %v2408 = vpop.xlane.xlu0 %2407
      %v2409 = vsub.f32 %v2377, %v2387
      %v2410 = vsub.f32 %v2378, %v2390
      %v2411 = vsub.f32 %v2379, %v2393
      %v2412 = vsub.f32 %v2380, %v2396
      %v2413 = vsub.f32 %v2381, %v2399
      %v2414 = vsub.f32 %v2382, %v2402
      %v2415 = vsub.f32 %v2383, %v2405
      %v2416 = vsub.f32 %v2384, %v2408
      %v2417 = vmul.f32 %v2409, 1.442695
      %v2418 = vpow.pop %v2417
      %v2419 = vmul.f32 %v2410, 1.442695
      %v2420 = vpow.pop %v2419
      %v2421 = vmul.f32 %v2411, 1.442695
      %v2422 = vpow.pop %v2421
      %v2423 = vmul.f32 %v2412, 1.442695
      %v2424 = vpow.pop %v2423
      %v2425 = vmul.f32 %v2413, 1.442695
      %v2426 = vpow.pop %v2425
      %v2427 = vmul.f32 %v2414, 1.442695
      %v2428 = vpow.pop %v2427
      %v2429 = vmul.f32 %v2415, 1.442695
      %v2430 = vpow.pop %v2429
      %v2431 = vmul.f32 %v2416, 1.442695
      %v2432 = vpow.pop %v2431
      %v2433 = vsel %vm1173, %v2418, 0.0
      %2434 = vadd.xlane.f32.xlu0 %v2433
      %v2435 = vpop.xlane.xlu0 %2434
      %v2436 = vsel %vm1173, %v2420, 0.0
      %2437 = vadd.xlane.f32.xlu0 %v2436
      %v2438 = vpop.xlane.xlu0 %2437
      %v2439 = vsel %vm1173, %v2422, 0.0
      %2440 = vadd.xlane.f32.xlu0 %v2439
      %v2441 = vpop.xlane.xlu0 %2440
      %v2442 = vsel %vm1173, %v2424, 0.0
      %2443 = vadd.xlane.f32.xlu0 %v2442
      %v2444 = vpop.xlane.xlu0 %2443
      %v2445 = vsel %vm1173, %v2426, 0.0
      %2446 = vadd.xlane.f32.xlu0 %v2445
      %v2447 = vpop.xlane.xlu0 %2446
      %v2448 = vsel %vm1173, %v2428, 0.0
      %2449 = vadd.xlane.f32.xlu0 %v2448
      %v2450 = vpop.xlane.xlu0 %2449
      %v2451 = vsel %vm1173, %v2430, 0.0
      %2452 = vadd.xlane.f32.xlu0 %v2451
      %v2453 = vpop.xlane.xlu0 %2452
      %v2454 = vsel %vm1173, %v2432, 0.0
      %2455 = vadd.xlane.f32.xlu0 %v2454
      %v2456 = vpop.xlane.xlu0 %2455
      %v2457 = vrcp.pop %v2435
      %v2458 = vrcp.pop %v2438
      %v2459 = vrcp.pop %v2441
      %v2460 = vrcp.pop %v2444
      %v2461 = vrcp.pop %v2447
      %v2462 = vrcp.pop %v2450
      %v2463 = vrcp.pop %v2453
      %v2464 = vrcp.pop %v2456
      %v2465 = vmul.f32 %v2418, %v2457
      %v2466 = vmul.f32 %v2420, %v2458
      %v2467 = vmul.f32 %v2422, %v2459
      %v2468 = vmul.f32 %v2424, %v2460
      %v2469 = vmul.f32 %v2426, %v2461
      %v2470 = vmul.f32 %v2428, %v2462
      %v2471 = vmul.f32 %v2430, %v2463
      %v2472 = vmul.f32 %v2432, %v2464
      %v2473 = vpack.c.bf16 %v2466, %v2465
      %v2474 = vpack.c.bf16 %v2468, %v2467
      %v2475 = vpack.c.bf16 %v2470, %v2469
      %v2476 = vpack.c.bf16 %v2472, %v2471
      %2477 = vrot.lane.b32.xlu0 %v1381, 68
      %v2478 = vpop.permute.xlu0 %2477
      %2479 = vrot.lane.b32.xlu0 %v1382, 68
      %v2480 = vpop.permute.xlu0 %2479
      %2481 = vrot.lane.b32.xlu0 %v1383, 68
      %v2482 = vpop.permute.xlu0 %2481
      %2483 = vrot.lane.b32.xlu0 %v1384, 68
      %v2484 = vpop.permute.xlu0 %2483
      %v2490 = vsel %vm1173, %v2473, 0
      %v2493 = vsel %vm1173, %v2474, 0
      %v2496 = vsel %vm1173, %v2475, 0
      %v2499 = vsel %vm1173, %v2476, 0
      %2501 = vmatprep.subr.bf16.mxu0 0
      %2502 = vmatpush1.bf16.msra.mxu0 0
      %2503 = vmatprep.subr.bf16.mxu0 0
      %2504 = vmatpush1.bf16.msra.mxu0 0
      %2505 = vmatprep.subr.bf16.mxu0 0
      %2506 = vmatpush1.bf16.msra.mxu0 0
      %2507 = vmatprep.subr.bf16.mxu0 0
      %2508 = vmatpush1.bf16.msra.mxu0 0
      %2509 = vmatprep.subr.bf16.mxu0 0
      %2510 = vmatpush1.bf16.msra.mxu0 %v2484
      %2511 = vmatprep.subr.bf16.mxu0 0
      %2512 = vmatpush1.bf16.msra.mxu0 %v2482
      %2513 = vmatprep.subr.bf16.mxu0 0
      %2514 = vmatpush1.bf16.msra.mxu0 %v2480
      %2515 = vmatprep.subr.bf16.mxu0 0
      %2516 = vmatpush1.bf16.msra.mxu0 %v2478
      %2517 = vmatprep.subr.bf16.mxu0 0
      %2518 = vmatpush2.bf16.msra.mxu0 0
      %2519 = vmatprep.subr.bf16.mxu0 0
      %2520 = vmatpush2.bf16.msra.mxu0 0
      %2521 = vmatprep.subr.bf16.mxu0 0
      %2522 = vmatpush2.bf16.msra.mxu0 0
      %2523 = vmatprep.subr.bf16.mxu0 0
      %2524 = vmatpush2.bf16.msra.mxu0 0
      %2525 = vmatprep.subr.bf16.mxu0 0
      %2526 = vmatpush2.bf16.msra.mxu0 0
      %2527 = vmatprep.subr.bf16.mxu0 0
      %2528 = vmatpush2.bf16.msra.mxu0 0
      %2529 = vmatprep.subr.bf16.mxu0 0
      %2530 = vmatpush2.bf16.msra.mxu0 0
      %2531 = vmatprep.subr.bf16.mxu0 0
      %2532 = vmatpush2.bf16.msra.mxu0 0
      %2533 = vmatprep.mubr.bf16.mxu0 0
      %2534 = vmatmul.mubr.bf16.gmra.mxu0 %v2490
      %v2535 = vpop.f32.mrf.mxu0
      %v2536 = vadd.f32 0.0, %v2535
      %v2537 = vpop.f32.mrf.mxu0
      %v2538 = vpop.f32.mrf.mxu0
      %v2539 = vadd.f32 0.0, %v2538
      %v2540 = vpop.f32.mrf.mxu0
      %2541 = vmatprep.mubr.bf16.mxu0 0
      %2542 = vmatmul.mubr.bf16.gmra.mxu0 %v2493
      %v2543 = vpop.f32.mrf.mxu0
      %v2544 = vadd.f32 0.0, %v2543
      %v2545 = vpop.f32.mrf.mxu0
      %v2546 = vpop.f32.mrf.mxu0
      %v2547 = vadd.f32 0.0, %v2546
      %v2548 = vpop.f32.mrf.mxu0
      %2549 = vmatprep.mubr.bf16.mxu0 0
      %2550 = vmatmul.mubr.bf16.gmra.mxu0 %v2496
      %v2551 = vpop.f32.mrf.mxu0
      %v2552 = vadd.f32 0.0, %v2551
      %v2553 = vpop.f32.mrf.mxu0
      %v2554 = vpop.f32.mrf.mxu0
      %v2555 = vadd.f32 0.0, %v2554
      %v2556 = vpop.f32.mrf.mxu0
      %2557 = vmatprep.mubr.bf16.mxu0 0
      %2558 = vmatmul.mubr.bf16.gmra.mxu0 %v2499
      %v2559 = vpop.f32.mrf.mxu0
      %v2560 = vadd.f32 0.0, %v2559
      %v2561 = vpop.f32.mrf.mxu0
      %v2562 = vpop.f32.mrf.mxu0
      %v2563 = vadd.f32 0.0, %v2562
      %v2564 = vpop.f32.mrf.mxu0
      %2565 = vdwg.mxu0
      %2574 = vrot.lane.b32.xlu0 %v1948, 4
      %v2575 = vpop.permute.xlu0 %2574
      %2576 = vrot.lane.b32.xlu0 %v1951, 4
      %v2577 = vpop.permute.xlu0 %2576
      %2578 = vrot.lane.b32.xlu0 %v1956, 4
      %v2579 = vpop.permute.xlu0 %2578
      %2580 = vrot.lane.b32.xlu0 %v1959, 4
      %v2581 = vpop.permute.xlu0 %2580
      %2582 = vrot.lane.b32.xlu0 %v1964, 4
      %v2583 = vpop.permute.xlu0 %2582
      %2584 = vrot.lane.b32.xlu0 %v1967, 4
      %v2585 = vpop.permute.xlu0 %2584
      %2586 = vrot.lane.b32.xlu0 %v1972, 4
      %v2587 = vpop.permute.xlu0 %2586
      %2588 = vrot.lane.b32.xlu0 %v1975, 4
      %v2589 = vpop.permute.xlu0 %2588
      %2606 = vrot.lane.b32.xlu0 %v2242, 8
      %v2607 = vpop.permute.xlu0 %2606
      %2608 = vrot.lane.b32.xlu0 %v2245, 8
      %v2609 = vpop.permute.xlu0 %2608
      %2610 = vrot.lane.b32.xlu0 %v2250, 8
      %v2611 = vpop.permute.xlu0 %2610
      %2612 = vrot.lane.b32.xlu0 %v2253, 8
      %v2613 = vpop.permute.xlu0 %2612
      %2614 = vrot.lane.b32.xlu0 %v2258, 8
      %v2615 = vpop.permute.xlu0 %2614
      %2616 = vrot.lane.b32.xlu0 %v2261, 8
      %v2617 = vpop.permute.xlu0 %2616
      %2618 = vrot.lane.b32.xlu0 %v2266, 8
      %v2619 = vpop.permute.xlu0 %2618
      %2620 = vrot.lane.b32.xlu0 %v2269, 8
      %v2621 = vpop.permute.xlu0 %2620
      %2638 = vrot.lane.b32.xlu0 %v2536, 12
      %v2639 = vpop.permute.xlu0 %2638
      %2640 = vrot.lane.b32.xlu0 %v2539, 12
      %v2641 = vpop.permute.xlu0 %2640
      %2642 = vrot.lane.b32.xlu0 %v2544, 12
      %v2643 = vpop.permute.xlu0 %2642
      %2644 = vrot.lane.b32.xlu0 %v2547, 12
      %v2645 = vpop.permute.xlu0 %2644
      %2646 = vrot.lane.b32.xlu0 %v2552, 12
      %v2647 = vpop.permute.xlu0 %2646
      %2648 = vrot.lane.b32.xlu0 %v2555, 12
      %v2649 = vpop.permute.xlu0 %2648
      %2650 = vrot.lane.b32.xlu0 %v2560, 12
      %v2651 = vpop.permute.xlu0 %2650
      %2652 = vrot.lane.b32.xlu0 %v2563, 12
      %v2653 = vpop.permute.xlu0 %2652
      %v2662 = vsel %vm1405, %v1654, %v2575
      %v2663 = vsel %vm1405, %v1657, %v2577
      %v2664 = vsel %vm1405, %v1662, %v2579
      %v2665 = vsel %vm1405, %v1665, %v2581
      %v2666 = vsel %vm1405, %v1670, %v2583
      %v2667 = vsel %vm1405, %v1673, %v2585
      %v2668 = vsel %vm1405, %v1678, %v2587
      %v2669 = vsel %vm1405, %v1681, %v2589
      %vm2670 = vcmask 64512
      %v2671 = vsel %vm2670, %v2662, %v2607
      %v2672 = vsel %vm2670, %v2663, %v2609
      %v2673 = vsel %vm2670, %v2664, %v2611
      %v2674 = vsel %vm2670, %v2665, %v2613
      %v2675 = vsel %vm2670, %v2666, %v2615
      %v2676 = vsel %vm2670, %v2667, %v2617
      %v2677 = vsel %vm2670, %v2668, %v2619
      %v2678 = vsel %vm2670, %v2669, %v2621
      %vm2679 = vcmask 97280
      %v2680 = vsel %vm2679, %v2671, %v2639
      %v2681 = vsel %vm2679, %v2672, %v2641
      %v2682 = vsel %vm2679, %v2673, %v2643
      %v2683 = vsel %vm2679, %v2674, %v2645
      %v2684 = vsel %vm2679, %v2675, %v2647
      %v2685 = vsel %vm2679, %v2676, %v2649
      %v2686 = vsel %vm2679, %v2677, %v2651
      %v2687 = vsel %vm2679, %v2678, %v2653
      %v2688 = vpack.c.bf16 %v2681, %v2680
      %v2689 = vpack.c.bf16 %v2683, %v2682
      %v2690 = vpack.c.bf16 %v2685, %v2684
      %v2691 = vpack.c.bf16 %v2687, %v2686
      %v2692 = vld [vmem:[%s5] sm:$0xf]
      %v2693 = vld [vmem:[%s5 + $0x4] sm:$0xf]
      %v2694 = vld [vmem:[%s6] sm:$0x1]
      %v2696 = vlaneseq
      %v2697 = vshrl.u32 %v2696, 7
      %v2698 = vsub.s32 0, %v2697
      %v2699 = vrot.slane %v2694, %v2698
      %v2703 = vunpack.c.l.b16 %v2692
      %v2704 = vunpack.c.l.b16 %v2693
      %v2705 = vpack.c.b16 %v2704, %v2703
      %v2708 = vsel %vm628, %v2688, 0
      %v2711 = vsel %vm628, %v2689, 0
      %v2714 = vsel %vm628, %v2690, 0
      %v2717 = vsel %vm628, %v2691, 0
      %2719 = vmatprep.subr.bf16.mxu0 0
      %2720 = vmatpush1.bf16.msra.mxu0 0
      %2721 = vmatprep.subr.bf16.mxu0 0
      %2722 = vmatpush1.bf16.msra.mxu0 0
      %2723 = vmatprep.subr.bf16.mxu0 0
      %2724 = vmatpush1.bf16.msra.mxu0 0
      %2725 = vmatprep.subr.bf16.mxu0 0
      %2726 = vmatpush1.bf16.msra.mxu0 0
      %2727 = vmatprep.subr.bf16.mxu0 0
      %2728 = vmatpush1.bf16.msra.mxu0 0
      %2729 = vmatprep.subr.bf16.mxu0 0
      %2730 = vmatpush1.bf16.msra.mxu0 0
      %2731 = vmatprep.subr.bf16.mxu0 0
      %2732 = vmatpush1.bf16.msra.mxu0 0
      %2733 = vmatprep.subr.bf16.mxu0 0
      %2734 = vmatpush1.bf16.msra.mxu0 %v2705
      %2735 = vmatprep.subr.bf16.mxu0 0
      %2736 = vmatpush2.bf16.msra.mxu0 0
      %2737 = vmatprep.subr.bf16.mxu0 0
      %2738 = vmatpush2.bf16.msra.mxu0 0
      %2739 = vmatprep.subr.bf16.mxu0 0
      %2740 = vmatpush2.bf16.msra.mxu0 0
      %2741 = vmatprep.subr.bf16.mxu0 0
      %2742 = vmatpush2.bf16.msra.mxu0 0
      %2743 = vmatprep.subr.bf16.mxu0 0
      %2744 = vmatpush2.bf16.msra.mxu0 0
      %2745 = vmatprep.subr.bf16.mxu0 0
      %2746 = vmatpush2.bf16.msra.mxu0 0
      %2747 = vmatprep.subr.bf16.mxu0 0
      %2748 = vmatpush2.bf16.msra.mxu0 0
      %2749 = vmatprep.subr.bf16.mxu0 0
      %2750 = vmatpush2.bf16.msra.mxu0 0
      %2751 = vmatprep.mubr.bf16.mxu0 0
      %2752 = vmatmul.mubr.bf16.gmra.mxu0 %v2708
      %v2753 = vpop.f32.mrf.mxu0
      %v2754 = vadd.f32 %v2699, %v2753
      %v2755 = vpop.f32.mrf.mxu0
      %v2756 = vpop.f32.mrf.mxu0
      %v2757 = vadd.f32 %v2699, %v2756
      %v2758 = vpop.f32.mrf.mxu0
      %2759 = vmatprep.mubr.bf16.mxu0 0
      %2760 = vmatmul.mubr.bf16.gmra.mxu0 %v2711
      %v2761 = vpop.f32.mrf.mxu0
      %v2762 = vadd.f32 %v2699, %v2761
      %v2763 = vpop.f32.mrf.mxu0
      %v2764 = vpop.f32.mrf.mxu0
      %v2765 = vadd.f32 %v2699, %v2764
      %v2766 = vpop.f32.mrf.mxu0
      %2767 = vmatprep.mubr.bf16.mxu0 0
      %2768 = vmatmul.mubr.bf16.gmra.mxu0 %v2714
      %v2769 = vpop.f32.mrf.mxu0
      %v2770 = vadd.f32 %v2699, %v2769
      %v2771 = vpop.f32.mrf.mxu0
      %v2772 = vpop.f32.mrf.mxu0
      %v2773 = vadd.f32 %v2699, %v2772
      %v2774 = vpop.f32.mrf.mxu0
      %2775 = vmatprep.mubr.bf16.mxu0 0
      %2776 = vmatmul.mubr.bf16.gmra.mxu0 %v2717
      %v2777 = vpop.f32.mrf.mxu0
      %v2778 = vadd.f32 %v2699, %v2777
      %v2779 = vpop.f32.mrf.mxu0
      %v2780 = vpop.f32.mrf.mxu0
      %v2781 = vadd.f32 %v2699, %v2780
      %v2782 = vpop.f32.mrf.mxu0
      %2783 = vdwg.mxu0
      %v2784 = vadd.f32 %v1373, %v2754
      %v2785 = vadd.f32 %v1374, %v2757
      %v2786 = vadd.f32 %v1375, %v2762
      %v2787 = vadd.f32 %v1376, %v2765
      %v2788 = vadd.f32 %v1377, %v2770
      %v2789 = vadd.f32 %v1378, %v2773
      %v2790 = vadd.f32 %v1379, %v2778
      %v2791 = vadd.f32 %v1380, %v2781
      %v2792 = vpack.c.bf16 %v2785, %v2784
      %v2793 = vpack.c.bf16 %v2787, %v2786
      %v2794 = vpack.c.bf16 %v2789, %v2788
      %v2795 = vpack.c.bf16 %v2791, %v2790
      %2800 = vrot.lane.b32.xlu0 %v2792, 16
      %v2801 = vpop.permute.xlu0 %2800
      %2802 = vrot.lane.b32.xlu0 %v2793, 16
      %v2803 = vpop.permute.xlu0 %2802
      %2804 = vrot.lane.b32.xlu0 %v2794, 16
      %v2805 = vpop.permute.xlu0 %2804
      %2806 = vrot.lane.b32.xlu0 %v2795, 16
      %v2807 = vpop.permute.xlu0 %2806
      %v2809 = vsel %vm628, %v609, %v2801
      %v2811 = vsel %vm628, %v610, %v2803
      %v2813 = vsel %vm628, %v611, %v2805
      %v2815 = vsel %vm628, %v612, %v2807
      %v2816 = vld [vmem:[%s7] sm:$0xf]
      %v2817 = vld [vmem:[%s7 + $0x4] sm:$0xf]
      %v2818 = vld [vmem:[%s7 + $0x8] sm:$0x3]
      %v2819 = vld [vmem:[%s8] sm:$0x1]
      %v2821 = vlaneseq
      %v2822 = vshrl.u32 %v2821, 7
      %v2823 = vsub.s32 0, %v2822
      %v2824 = vrot.slane %v2819, %v2823
      %v2829 = vunpack.c.l.b16 %v2816
      %v2830 = vunpack.c.l.b16 %v2817
      %v2831 = vunpack.c.l.b16 %v2818
      %v2832 = vpack.c.b16 %v2830, %v2829
      %v2833 = vpack.c.b16 %v2831, %v2831
      %vm2835 = vcmask 162816
      %v2836 = vsel %vm2835, %v2809, 0
      %v2838 = vsel %vm2835, %v2811, 0
      %v2840 = vsel %vm2835, %v2813, 0
      %v2842 = vsel %vm2835, %v2815, 0
      %vm2844 = vcmask 1041408
      %v2846 = vsel %vm2844, %v2833, 0
      %2848 = vmatprep.subr.bf16.mxu0 0
      %2849 = vmatpush1.bf16.msra.mxu0 0
      %2850 = vmatprep.subr.bf16.mxu0 0
      %2851 = vmatpush1.bf16.msra.mxu0 0
      %2852 = vmatprep.subr.bf16.mxu0 0
      %2853 = vmatpush1.bf16.msra.mxu0 0
      %2854 = vmatprep.subr.bf16.mxu0 0
      %2855 = vmatpush1.bf16.msra.mxu0 0
      %2856 = vmatprep.subr.bf16.mxu0 0
      %2857 = vmatpush1.bf16.msra.mxu0 0
      %2858 = vmatprep.subr.bf16.mxu0 0
      %2859 = vmatpush1.bf16.msra.mxu0 0
      %2860 = vmatprep.subr.bf16.mxu0 0
      %2861 = vmatpush1.bf16.msra.mxu0 %v2846
      %2862 = vmatprep.subr.bf16.mxu0 0
      %2863 = vmatpush1.bf16.msra.mxu0 %v2832
      %2864 = vmatprep.subr.bf16.mxu0 0
      %2865 = vmatpush2.bf16.msra.mxu0 0
      %2866 = vmatprep.subr.bf16.mxu0 0
      %2867 = vmatpush2.bf16.msra.mxu0 0
      %2868 = vmatprep.subr.bf16.mxu0 0
      %2869 = vmatpush2.bf16.msra.mxu0 0
      %2870 = vmatprep.subr.bf16.mxu0 0
      %2871 = vmatpush2.bf16.msra.mxu0 0
      %2872 = vmatprep.subr.bf16.mxu0 0
      %2873 = vmatpush2.bf16.msra.mxu0 0
      %2874 = vmatprep.subr.bf16.mxu0 0
      %2875 = vmatpush2.bf16.msra.mxu0 0
      %2876 = vmatprep.subr.bf16.mxu0 0
      %2877 = vmatpush2.bf16.msra.mxu0 0
      %2878 = vmatprep.subr.bf16.mxu0 0
      %2879 = vmatpush2.bf16.msra.mxu0 0
      %2880 = vmatprep.mubr.bf16.mxu0 0
      %2881 = vmatmul.mubr.bf16.gmra.mxu0 %v2836
      %v2882 = vpop.f32.mrf.mxu0
      %v2883 = vadd.f32 %v2824, %v2882
      %v2884 = vpop.f32.mrf.mxu0
      %v2885 = vpop.f32.mrf.mxu0
      %v2886 = vadd.f32 %v2824, %v2885
      %v2887 = vpop.f32.mrf.mxu0
      %2888 = vmatprep.mubr.bf16.mxu0 0
      %2889 = vmatmul.mubr.bf16.gmra.mxu0 %v2838
      %v2890 = vpop.f32.mrf.mxu0
      %v2891 = vadd.f32 %v2824, %v2890
      %v2892 = vpop.f32.mrf.mxu0
      %v2893 = vpop.f32.mrf.mxu0
      %v2894 = vadd.f32 %v2824, %v2893
      %v2895 = vpop.f32.mrf.mxu0
      %2896 = vmatprep.mubr.bf16.mxu0 0
      %2897 = vmatmul.mubr.bf16.gmra.mxu0 %v2840
      %v2898 = vpop.f32.mrf.mxu0
      %v2899 = vadd.f32 %v2824, %v2898
      %v2900 = vpop.f32.mrf.mxu0
      %v2901 = vpop.f32.mrf.mxu0
      %v2902 = vadd.f32 %v2824, %v2901
      %v2903 = vpop.f32.mrf.mxu0
      %2904 = vmatprep.mubr.bf16.mxu0 0
      %2905 = vmatmul.mubr.bf16.gmra.mxu0 %v2842
      %v2906 = vpop.f32.mrf.mxu0
      %v2907 = vadd.f32 %v2824, %v2906
      %v2908 = vpop.f32.mrf.mxu0
      %v2909 = vpop.f32.mrf.mxu0
      %v2910 = vadd.f32 %v2824, %v2909
      %v2911 = vpop.f32.mrf.mxu0
      %2912 = vdwg.mxu0
      %v2913 = vmax.f32 %v2883, 0.0
      %v2914 = vmax.f32 %v2886, 0.0
      %v2915 = vmax.f32 %v2891, 0.0
      %v2916 = vmax.f32 %v2894, 0.0
      %v2917 = vmax.f32 %v2899, 0.0
      %v2918 = vmax.f32 %v2902, 0.0
      %v2919 = vmax.f32 %v2907, 0.0
      %v2920 = vmax.f32 %v2910, 0.0
      %v2929 = vrot.slane %v2913, 7
      %v2930 = vrot.slane %v2914, 7
      %v2931 = vsel %vm722, %v2929, %v2930
      %v2932 = vrot.slane %v2915, 7
      %v2933 = vsel %vm722, %v2930, %v2932
      %v2934 = vrot.slane %v2916, 7
      %v2935 = vsel %vm722, %v2932, %v2934
      %v2936 = vrot.slane %v2917, 7
      %v2937 = vsel %vm722, %v2934, %v2936
      %v2938 = vrot.slane %v2918, 7
      %v2939 = vsel %vm722, %v2936, %v2938
      %v2940 = vrot.slane %v2919, 7
      %v2941 = vsel %vm722, %v2938, %v2940
      %v2942 = vrot.slane %v2920, 7
      %v2943 = vsel %vm722, %v2940, %v2942
      %v2953 = vsel %vm722, 0.0, %v2929
      %v2954 = vsel %vm722, %v2942, 0.0
      %v2955 = vsel %vm790, %v2953, 0.0
      %v2956 = vsel %vm791, %v2931, 0.0
      %v2957 = vsel %vm792, %v2933, 0.0
      %v2958 = vsel %vm793, %v2935, 0.0
      %v2959 = vsel %vm794, %v2937, 0.0
      %v2960 = vsel %vm795, %v2939, 0.0
      %v2961 = vsel %vm796, %v2941, 0.0
      %v2963 = vrot.slane %v2953, 2
      %v2964 = vsel %vm854, %v855, %v2963
      %v2965 = vrot.slane %v2931, 2
      %v2966 = vsel %vm854, %v2963, %v2965
      %v2967 = vrot.slane %v2933, 2
      %v2968 = vsel %vm854, %v2965, %v2967
      %v2969 = vrot.slane %v2935, 2
      %v2970 = vsel %vm854, %v2967, %v2969
      %v2971 = vrot.slane %v2937, 2
      %v2972 = vsel %vm854, %v2969, %v2971
      %v2973 = vrot.slane %v2939, 2
      %v2974 = vsel %vm854, %v2971, %v2973
      %v2975 = vrot.slane %v2941, 2
      %v2976 = vsel %vm854, %v2973, %v2975
      %v2977 = vrot.slane %v2943, 2
      %v2978 = vsel %vm854, %v2975, %v2977
      %v2987 = vsel %vm844, %v2964, 0.0
      %v2988 = vsel %vm845, %v2966, 0.0
      %v2989 = vsel %vm846, %v2968, 0.0
      %v2990 = vsel %vm847, %v2970, 0.0
      %v2991 = vsel %vm848, %v2972, 0.0
      %v2992 = vsel %vm849, %v2974, 0.0
      %v2993 = vsel %vm850, %v2976, 0.0
      %v2994 = vsel %vm851, %v2978, 0.0
      %v2995 = vsel %vm789, %v2953, 0.0
      %v2996 = vsel %vm790, %v2931, 0.0
      %v2997 = vsel %vm791, %v2933, 0.0
      %v2998 = vsel %vm792, %v2935, 0.0
      %v2999 = vsel %vm793, %v2937, 0.0
      %v3000 = vsel %vm794, %v2939, 0.0
      %v3001 = vsel %vm795, %v2941, 0.0
      %v3002 = vsel %vm796, %v2943, 0.0
      %v3004 = vrot.slane %v2954, 2
      %v3005 = vsel %vm854, %v2977, %v3004
      %v3007 = vsel %vm844, %v2966, 0.0
      %v3008 = vsel %vm845, %v2968, 0.0
      %v3009 = vsel %vm846, %v2970, 0.0
      %v3010 = vsel %vm847, %v2972, 0.0
      %v3011 = vsel %vm848, %v2974, 0.0
      %v3012 = vsel %vm849, %v2976, 0.0
      %v3013 = vsel %vm850, %v2978, 0.0
      %v3014 = vsel %vm851, %v3005, 0.0
      %v3015 = vsel %vm789, %v2931, 0.0
      %v3016 = vsel %vm790, %v2933, 0.0
      %v3017 = vsel %vm791, %v2935, 0.0
      %v3018 = vsel %vm792, %v2937, 0.0
      %v3019 = vsel %vm793, %v2939, 0.0
      %v3020 = vsel %vm794, %v2941, 0.0
      %v3021 = vsel %vm795, %v2943, 0.0
      %v3022 = vsel %vm796, %v2954, 0.0
      %v3023 = vsel %vm854, %v3004, %v855
      %v3025 = vsel %vm844, %v2968, 0.0
      %v3026 = vsel %vm845, %v2970, 0.0
      %v3027 = vsel %vm846, %v2972, 0.0
      %v3028 = vsel %vm847, %v2974, 0.0
      %v3029 = vsel %vm848, %v2976, 0.0
      %v3030 = vsel %vm849, %v2978, 0.0
      %v3031 = vsel %vm850, %v3005, 0.0
      %v3032 = vsel %vm851, %v3023, 0.0
      %v3033 = vrot.slane %v2953, 1
      %v3034 = vsel %vm926, %v927, %v3033
      %v3035 = vrot.slane %v2931, 1
      %v3036 = vsel %vm926, %v3033, %v3035
      %v3037 = vrot.slane %v2933, 1
      %v3038 = vsel %vm926, %v3035, %v3037
      %v3039 = vrot.slane %v2935, 1
      %v3040 = vsel %vm926, %v3037, %v3039
      %v3041 = vrot.slane %v2937, 1
      %v3042 = vsel %vm926, %v3039, %v3041
      %v3043 = vrot.slane %v2939, 1
      %v3044 = vsel %vm926, %v3041, %v3043
      %v3045 = vrot.slane %v2941, 1
      %v3046 = vsel %vm926, %v3043, %v3045
      %v3047 = vrot.slane %v2943, 1
      %v3048 = vsel %vm926, %v3045, %v3047
      %3049 = vrot.lane.b32.xlu0 %v3034, 20
      %v3050 = vpop.permute.xlu0 %3049
      %3051 = vrot.lane.b32.xlu0 %v3036, 20
      %v3052 = vpop.permute.xlu0 %3051
      %3053 = vrot.lane.b32.xlu0 %v3038, 20
      %v3054 = vpop.permute.xlu0 %3053
      %3055 = vrot.lane.b32.xlu0 %v3040, 20
      %v3056 = vpop.permute.xlu0 %3055
      %3057 = vrot.lane.b32.xlu0 %v3042, 20
      %v3058 = vpop.permute.xlu0 %3057
      %3059 = vrot.lane.b32.xlu0 %v3044, 20
      %v3060 = vpop.permute.xlu0 %3059
      %3061 = vrot.lane.b32.xlu0 %v3046, 20
      %v3062 = vpop.permute.xlu0 %3061
      %3063 = vrot.lane.b32.xlu0 %v3048, 20
      %v3064 = vpop.permute.xlu0 %3063
      %3081 = vrot.lane.b32.xlu0 %v2987, 40
      %v3082 = vpop.permute.xlu0 %3081
      %3083 = vrot.lane.b32.xlu0 %v2988, 40
      %v3084 = vpop.permute.xlu0 %3083
      %3085 = vrot.lane.b32.xlu0 %v2989, 40
      %v3086 = vpop.permute.xlu0 %3085
      %3087 = vrot.lane.b32.xlu0 %v2990, 40
      %v3088 = vpop.permute.xlu0 %3087
      %3089 = vrot.lane.b32.xlu0 %v2991, 40
      %v3090 = vpop.permute.xlu0 %3089
      %3091 = vrot.lane.b32.xlu0 %v2992, 40
      %v3092 = vpop.permute.xlu0 %3091
      %3093 = vrot.lane.b32.xlu0 %v2993, 40
      %v3094 = vpop.permute.xlu0 %3093
      %3095 = vrot.lane.b32.xlu0 %v2994, 40
      %v3096 = vpop.permute.xlu0 %3095
      %3113 = vrot.lane.b32.xlu0 %v2995, 60
      %v3114 = vpop.permute.xlu0 %3113
      %3115 = vrot.lane.b32.xlu0 %v2996, 60
      %v3116 = vpop.permute.xlu0 %3115
      %3117 = vrot.lane.b32.xlu0 %v2997, 60
      %v3118 = vpop.permute.xlu0 %3117
      %3119 = vrot.lane.b32.xlu0 %v2998, 60
      %v3120 = vpop.permute.xlu0 %3119
      %3121 = vrot.lane.b32.xlu0 %v2999, 60
      %v3122 = vpop.permute.xlu0 %3121
      %3123 = vrot.lane.b32.xlu0 %v3000, 60
      %v3124 = vpop.permute.xlu0 %3123
      %3125 = vrot.lane.b32.xlu0 %v3001, 60
      %v3126 = vpop.permute.xlu0 %3125
      %3127 = vrot.lane.b32.xlu0 %v3002, 60
      %v3128 = vpop.permute.xlu0 %3127
      %v3137 = vrot.slane %v2954, 1
      %v3138 = vsel %vm926, %v3047, %v3137
      %3139 = vrot.lane.b32.xlu0 %v3036, 80
      %v3140 = vpop.permute.xlu0 %3139
      %3141 = vrot.lane.b32.xlu0 %v3038, 80
      %v3142 = vpop.permute.xlu0 %3141
      %3143 = vrot.lane.b32.xlu0 %v3040, 80
      %v3144 = vpop.permute.xlu0 %3143
      %3145 = vrot.lane.b32.xlu0 %v3042, 80
      %v3146 = vpop.permute.xlu0 %3145
      %3147 = vrot.lane.b32.xlu0 %v3044, 80
      %v3148 = vpop.permute.xlu0 %3147
      %3149 = vrot.lane.b32.xlu0 %v3046, 80
      %v3150 = vpop.permute.xlu0 %3149
      %3151 = vrot.lane.b32.xlu0 %v3048, 80
      %v3152 = vpop.permute.xlu0 %3151
      %3153 = vrot.lane.b32.xlu0 %v3138, 80
      %v3154 = vpop.permute.xlu0 %3153
      %3171 = vrot.lane.b32.xlu0 %v3007, 100
      %v3172 = vpop.permute.xlu0 %3171
      %3173 = vrot.lane.b32.xlu0 %v3008, 100
      %v3174 = vpop.permute.xlu0 %3173
      %3175 = vrot.lane.b32.xlu0 %v3009, 100
      %v3176 = vpop.permute.xlu0 %3175
      %3177 = vrot.lane.b32.xlu0 %v3010, 100
      %v3178 = vpop.permute.xlu0 %3177
      %3179 = vrot.lane.b32.xlu0 %v3011, 100
      %v3180 = vpop.permute.xlu0 %3179
      %3181 = vrot.lane.b32.xlu0 %v3012, 100
      %v3182 = vpop.permute.xlu0 %3181
      %3183 = vrot.lane.b32.xlu0 %v3013, 100
      %v3184 = vpop.permute.xlu0 %3183
      %3185 = vrot.lane.b32.xlu0 %v3014, 100
      %v3186 = vpop.permute.xlu0 %3185
      %3203 = vrot.lane.b32.xlu0 %v3015, 120
      %v3204 = vpop.permute.xlu0 %3203
      %3205 = vrot.lane.b32.xlu0 %v3016, 120
      %v3206 = vpop.permute.xlu0 %3205
      %3207 = vrot.lane.b32.xlu0 %v3017, 120
      %v3208 = vpop.permute.xlu0 %3207
      %3209 = vrot.lane.b32.xlu0 %v3018, 120
      %v3210 = vpop.permute.xlu0 %3209
      %3211 = vrot.lane.b32.xlu0 %v3019, 120
      %v3212 = vpop.permute.xlu0 %3211
      %3213 = vrot.lane.b32.xlu0 %v3020, 120
      %v3214 = vpop.permute.xlu0 %3213
      %3215 = vrot.lane.b32.xlu0 %v3021, 120
      %v3216 = vpop.permute.xlu0 %3215
      %3217 = vrot.lane.b32.xlu0 %v3022, 120
      %v3218 = vpop.permute.xlu0 %3217
      %v3227 = vsel %vm926, %v3137, %v927
      %3228 = vrot.lane.b32.xlu0 %v3038, 12
      %v3229 = vpop.permute.xlu0 %3228
      %3230 = vrot.lane.b32.xlu0 %v3040, 12
      %v3231 = vpop.permute.xlu0 %3230
      %3232 = vrot.lane.b32.xlu0 %v3042, 12
      %v3233 = vpop.permute.xlu0 %3232
      %3234 = vrot.lane.b32.xlu0 %v3044, 12
      %v3235 = vpop.permute.xlu0 %3234
      %3236 = vrot.lane.b32.xlu0 %v3046, 12
      %v3237 = vpop.permute.xlu0 %3236
      %3238 = vrot.lane.b32.xlu0 %v3048, 12
      %v3239 = vpop.permute.xlu0 %3238
      %3240 = vrot.lane.b32.xlu0 %v3138, 12
      %v3241 = vpop.permute.xlu0 %3240
      %3242 = vrot.lane.b32.xlu0 %v3227, 12
      %v3243 = vpop.permute.xlu0 %3242
      %3260 = vrot.lane.b32.xlu0 %v3025, 32
      %v3261 = vpop.permute.xlu0 %3260
      %3262 = vrot.lane.b32.xlu0 %v3026, 32
      %v3263 = vpop.permute.xlu0 %3262
      %3264 = vrot.lane.b32.xlu0 %v3027, 32
      %v3265 = vpop.permute.xlu0 %3264
      %3266 = vrot.lane.b32.xlu0 %v3028, 32
      %v3267 = vpop.permute.xlu0 %3266
      %3268 = vrot.lane.b32.xlu0 %v3029, 32
      %v3269 = vpop.permute.xlu0 %3268
      %3270 = vrot.lane.b32.xlu0 %v3030, 32
      %v3271 = vpop.permute.xlu0 %3270
      %3272 = vrot.lane.b32.xlu0 %v3031, 32
      %v3273 = vpop.permute.xlu0 %3272
      %3274 = vrot.lane.b32.xlu0 %v3032, 32
      %v3275 = vpop.permute.xlu0 %3274
      %v3284 = vsel %vm2835, 0.0, %v3050
      %v3285 = vsel %vm2835, %v2955, %v3052
      %v3286 = vsel %vm2835, %v2956, %v3054
      %v3287 = vsel %vm2835, %v2957, %v3056
      %v3288 = vsel %vm2835, %v2958, %v3058
      %v3289 = vsel %vm2835, %v2959, %v3060
      %v3290 = vsel %vm2835, %v2960, %v3062
      %v3291 = vsel %vm2835, %v2961, %v3064
      %vm3292 = vcmask 326656
      %v3293 = vsel %vm3292, %v3284, %v3082
      %v3294 = vsel %vm3292, %v3285, %v3084
      %v3295 = vsel %vm3292, %v3286, %v3086
      %v3296 = vsel %vm3292, %v3287, %v3088
      %v3297 = vsel %vm3292, %v3288, %v3090
      %v3298 = vsel %vm3292, %v3289, %v3092
      %v3299 = vsel %vm3292, %v3290, %v3094
      %v3300 = vsel %vm3292, %v3291, %v3096
      %vm3301 = vcmask 490496
      %v3302 = vsel %vm3301, %v3293, %v3114
      %v3303 = vsel %vm3301, %v3294, %v3116
      %v3304 = vsel %vm3301, %v3295, %v3118
      %v3305 = vsel %vm3301, %v3296, %v3120
      %v3306 = vsel %vm3301, %v3297, %v3122
      %v3307 = vsel %vm3301, %v3298, %v3124
      %v3308 = vsel %vm3301, %v3299, %v3126
      %v3309 = vsel %vm3301, %v3300, %v3128
      %v3310 = vsel %vm1182, %v3302, %v3140
      %v3311 = vsel %vm1182, %v3303, %v3142
      %v3312 = vsel %vm1182, %v3304, %v3144
      %v3313 = vsel %vm1182, %v3305, %v3146
      %v3314 = vsel %vm1182, %v3306, %v3148
      %v3315 = vsel %vm1182, %v3307, %v3150
      %v3316 = vsel %vm1182, %v3308, %v3152
      %v3317 = vsel %vm1182, %v3309, %v3154
      %vm3318 = vcmask 818176
      %v3319 = vsel %vm3318, %v3310, %v3172
      %v3320 = vsel %vm3318, %v3311, %v3174
      %v3321 = vsel %vm3318, %v3312, %v3176
      %v3322 = vsel %vm3318, %v3313, %v3178
      %v3323 = vsel %vm3318, %v3314, %v3180
      %v3324 = vsel %vm3318, %v3315, %v3182
      %v3325 = vsel %vm3318, %v3316, %v3184
      %v3326 = vsel %vm3318, %v3317, %v3186
      %vm3327 = vcmask 982016
      %v3328 = vsel %vm3327, %v3319, %v3204
      %v3329 = vsel %vm3327, %v3320, %v3206
      %v3330 = vsel %vm3327, %v3321, %v3208
      %v3331 = vsel %vm3327, %v3322, %v3210
      %v3332 = vsel %vm3327, %v3323, %v3212
      %v3333 = vsel %vm3327, %v3324, %v3214
      %v3334 = vsel %vm3327, %v3325, %v3216
      %v3335 = vsel %vm3327, %v3326, %v3218
      %v3336 = vsel %vm2679, %v3204, %v3229
      %v3337 = vsel %vm2679, %v3206, %v3231
      %v3338 = vsel %vm2679, %v3208, %v3233
      %v3339 = vsel %vm2679, %v3210, %v3235
      %v3340 = vsel %vm2679, %v3212, %v3237
      %v3341 = vsel %vm2679, %v3214, %v3239
      %v3342 = vsel %vm2679, %v3216, %v3241
      %v3343 = vsel %vm2679, %v3218, %v3243
      %v3344 = vsel %vm1155, %v3336, %v3261
      %v3345 = vsel %vm1155, %v3337, %v3263
      %v3346 = vsel %vm1155, %v3338, %v3265
      %v3347 = vsel %vm1155, %v3339, %v3267
      %v3348 = vsel %vm1155, %v3340, %v3269
      %v3349 = vsel %vm1155, %v3341, %v3271
      %v3350 = vsel %vm1155, %v3342, %v3273
      %v3351 = vsel %vm1155, %v3343, %v3275
      %v3352 = vpack.c.bf16 %v3329, %v3328
      %v3353 = vpack.c.bf16 %v3345, %v3344
      %v3354 = vpack.c.bf16 %v3331, %v3330
      %v3355 = vpack.c.bf16 %v3347, %v3346
      %v3356 = vpack.c.bf16 %v3333, %v3332
      %v3357 = vpack.c.bf16 %v3349, %v3348
      %v3358 = vpack.c.bf16 %v3335, %v3334
      %v3359 = vpack.c.bf16 %v3351, %v3350
      %v3360 = vld [vmem:[%s9] sm:$0xf]
      %v3361 = vld [vmem:[%s9 + $0x4] sm:$0xf]
      %v3362 = vld [vmem:[%s9 + $0x8] sm:$0xf]
      %v3363 = vld [vmem:[%s9 + $0xc] sm:$0xf]
      %v3364 = vld [vmem:[%s9 + $0x10] sm:$0xf]
      %v3365 = vld [vmem:[%s9 + $0x14] sm:$0xf]
      %v3366 = vld [vmem:[%s9 + $0x18] sm:$0xf]
      %v3367 = vld [vmem:[%s9 + $0x1c] sm:$0xf]
      %v3368 = vld [vmem:[%s9 + $0x20] sm:$0xf]
      %v3369 = vld [vmem:[%s9 + $0x24] sm:$0xf]
      %v3370 = vld [vmem:[%s9 + $0x28] sm:$0xf]
      %v3371 = vld [vmem:[%s9 + $0x2c] sm:$0xf]
      %v3372 = vld [vmem:[%s9 + $0x30] sm:$0xf]
      %v3373 = vld [vmem:[%s9 + $0x34] sm:$0xf]
      %v3374 = vld [vmem:[%s9 + $0x38] sm:$0xf]
      %v3375 = vld [vmem:[%s9 + $0x3c] sm:$0xf]
      %v3376 = vld [vmem:[%s9 + $0x40] sm:$0xf]
      %v3377 = vld [vmem:[%s9 + $0x44] sm:$0xf]
      %v3378 = vld [vmem:[%s9 + $0x48] sm:$0xf]
      %v3379 = vld [vmem:[%s9 + $0x4c] sm:$0xf]
      %v3380 = vld [vmem:[%s9 + $0x50] sm:$0xf]
      %v3381 = vld [vmem:[%s9 + $0x54] sm:$0xf]
      %v3382 = vld [vmem:[%s9 + $0x58] sm:$0x3]
      %v3383 = vld [vmem:[%s10] sm:$0x1]
      %v3385 = vlaneseq
      %v3386 = vshrl.u32 %v3385, 7
      %v3387 = vsub.s32 0, %v3386
      %v3388 = vrot.slane %v3383, %v3387
      %v3413 = vunpack.c.l.b16 %v3360
      %v3414 = vunpack.c.l.b16 %v3361
      %v3415 = vunpack.c.l.b16 %v3362
      %v3416 = vunpack.c.l.b16 %v3363
      %v3417 = vunpack.c.l.b16 %v3364
      %v3418 = vunpack.c.l.b16 %v3365
      %v3419 = vunpack.c.l.b16 %v3366
      %v3420 = vunpack.c.l.b16 %v3367
      %v3421 = vunpack.c.l.b16 %v3368
      %v3422 = vunpack.c.l.b16 %v3369
      %v3423 = vunpack.c.l.b16 %v3370
      %v3424 = vunpack.c.l.b16 %v3371
      %v3425 = vunpack.c.l.b16 %v3372
      %v3426 = vunpack.c.l.b16 %v3373
      %v3427 = vunpack.c.l.b16 %v3374
      %v3428 = vunpack.c.l.b16 %v3375
      %v3429 = vunpack.c.l.b16 %v3376
      %v3430 = vunpack.c.l.b16 %v3377
      %v3431 = vunpack.c.l.b16 %v3378
      %v3432 = vunpack.c.l.b16 %v3379
      %v3433 = vunpack.c.l.b16 %v3380
      %v3434 = vunpack.c.l.b16 %v3381
      %v3435 = vunpack.c.l.b16 %v3382
      %v3436 = vpack.c.b16 %v3414, %v3413
      %v3437 = vpack.c.b16 %v3416, %v3415
      %v3438 = vpack.c.b16 %v3418, %v3417
      %v3439 = vpack.c.b16 %v3420, %v3419
      %v3440 = vpack.c.b16 %v3422, %v3421
      %v3441 = vpack.c.b16 %v3424, %v3423
      %v3442 = vpack.c.b16 %v3426, %v3425
      %v3443 = vpack.c.b16 %v3428, %v3427
      %v3444 = vpack.c.b16 %v3430, %v3429
      %v3445 = vpack.c.b16 %v3432, %v3431
      %v3446 = vpack.c.b16 %v3434, %v3433
      %v3447 = vpack.c.b16 %v3435, %v3435
      %vm3459 = vcmask 424960
      %v3461 = vsel %vm3459, %v3353, 0
      %v3464 = vsel %vm3459, %v3355, 0
      %v3467 = vsel %vm3459, %v3357, 0
      %v3470 = vsel %vm3459, %v3359, 0
      %v3473 = vsel %vm2844, %v3447, 0
      %3475 = vmatprep.subr.bf16.mxu0 0
      %3476 = vmatpush1.bf16.msra.mxu0 %v3443
      %3477 = vmatprep.subr.bf16.mxu0 0
      %3478 = vmatpush1.bf16.msra.mxu0 %v3442
      %3479 = vmatprep.subr.bf16.mxu0 0
      %3480 = vmatpush1.bf16.msra.mxu0 %v3441
      %3481 = vmatprep.subr.bf16.mxu0 0
      %3482 = vmatpush1.bf16.msra.mxu0 %v3440
      %3483 = vmatprep.subr.bf16.mxu0 0
      %3484 = vmatpush1.bf16.msra.mxu0 %v3439
      %3485 = vmatprep.subr.bf16.mxu0 0
      %3486 = vmatpush1.bf16.msra.mxu0 %v3438
      %3487 = vmatprep.subr.bf16.mxu0 0
      %3488 = vmatpush1.bf16.msra.mxu0 %v3437
      %3489 = vmatprep.subr.bf16.mxu0 0
      %3490 = vmatpush1.bf16.msra.mxu0 %v3436
      %3491 = vmatprep.subr.bf16.mxu0 0
      %3492 = vmatpush2.bf16.msra.mxu0 0
      %3493 = vmatprep.subr.bf16.mxu0 0
      %3494 = vmatpush2.bf16.msra.mxu0 0
      %3495 = vmatprep.subr.bf16.mxu0 0
      %3496 = vmatpush2.bf16.msra.mxu0 0
      %3497 = vmatprep.subr.bf16.mxu0 0
      %3498 = vmatpush2.bf16.msra.mxu0 0
      %3499 = vmatprep.subr.bf16.mxu0 0
      %3500 = vmatpush2.bf16.msra.mxu0 %v3473
      %3501 = vmatprep.subr.bf16.mxu0 0
      %3502 = vmatpush2.bf16.msra.mxu0 %v3446
      %3503 = vmatprep.subr.bf16.mxu0 0
      %3504 = vmatpush2.bf16.msra.mxu0 %v3445
      %3505 = vmatprep.subr.bf16.mxu0 0
      %3506 = vmatpush2.bf16.msra.mxu0 %v3444
      %3507 = vmatprep.mubr.bf16.mxu0 %v3461
      %3508 = vmatmul.mubr.bf16.gmra.mxu0 %v3352
      %v3509 = vpop.f32.mrf.mxu0
      %v3510 = vadd.f32 %v3388, %v3509
      %v3511 = vpop.f32.mrf.mxu0
      %v3512 = vpop.f32.mrf.mxu0
      %v3513 = vadd.f32 %v3388, %v3512
      %v3514 = vpop.f32.mrf.mxu0
      %3515 = vmatprep.mubr.bf16.mxu0 %v3464
      %3516 = vmatmul.mubr.bf16.gmra.mxu0 %v3354
      %v3517 = vpop.f32.mrf.mxu0
      %v3518 = vadd.f32 %v3388, %v3517
      %v3519 = vpop.f32.mrf.mxu0
      %v3520 = vpop.f32.mrf.mxu0
      %v3521 = vadd.f32 %v3388, %v3520
      %v3522 = vpop.f32.mrf.mxu0
      %3523 = vmatprep.mubr.bf16.mxu0 %v3467
      %3524 = vmatmul.mubr.bf16.gmra.mxu0 %v3356
      %v3525 = vpop.f32.mrf.mxu0
      %v3526 = vadd.f32 %v3388, %v3525
      %v3527 = vpop.f32.mrf.mxu0
      %v3528 = vpop.f32.mrf.mxu0
      %v3529 = vadd.f32 %v3388, %v3528
      %v3530 = vpop.f32.mrf.mxu0
      %3531 = vmatprep.mubr.bf16.mxu0 %v3470
      %3532 = vmatmul.mubr.bf16.gmra.mxu0 %v3358
      %v3533 = vpop.f32.mrf.mxu0
      %v3534 = vadd.f32 %v3388, %v3533
      %v3535 = vpop.f32.mrf.mxu0
      %v3536 = vpop.f32.mrf.mxu0
      %v3537 = vadd.f32 %v3388, %v3536
      %v3538 = vpop.f32.mrf.mxu0
      %3539 = vdwg.mxu0
      %v3540 = vmax.f32 %v3510, 0.0
      %v3541 = vmax.f32 %v3513, 0.0
      %v3542 = vmax.f32 %v3518, 0.0
      %v3543 = vmax.f32 %v3521, 0.0
      %v3544 = vmax.f32 %v3526, 0.0
      %v3545 = vmax.f32 %v3529, 0.0
      %v3546 = vmax.f32 %v3534, 0.0
      %v3547 = vmax.f32 %v3537, 0.0
      %v3548 = vpack.c.bf16 %v2886, %v2883
      %v3549 = vpack.c.bf16 %v2894, %v2891
      %v3550 = vpack.c.bf16 %v2902, %v2899
      %v3551 = vpack.c.bf16 %v2910, %v2907
      %3556 = vrot.lane.b32.xlu0 %v3548, 108
      %v3557 = vpop.permute.xlu0 %3556
      %3558 = vrot.lane.b32.xlu0 %v3549, 108
      %v3559 = vpop.permute.xlu0 %3558
      %3560 = vrot.lane.b32.xlu0 %v3550, 108
      %v3561 = vpop.permute.xlu0 %3560
      %3562 = vrot.lane.b32.xlu0 %v3551, 108
      %v3563 = vpop.permute.xlu0 %3562
      %3564 = vrot.lane.b32.xlu0 %v3548, 88
      %v3565 = vpop.permute.xlu0 %3564
      %3566 = vrot.lane.b32.xlu0 %v3549, 88
      %v3567 = vpop.permute.xlu0 %3566
      %3568 = vrot.lane.b32.xlu0 %v3550, 88
      %v3569 = vpop.permute.xlu0 %3568
      %3570 = vrot.lane.b32.xlu0 %v3551, 88
      %v3571 = vpop.permute.xlu0 %3570
      %vm3572 = vcmask 39936
      %v3574 = vsel %vm3572, %v3557, 0
      %v3577 = vsel %vm3572, %v3559, 0
      %v3580 = vsel %vm3572, %v3561, 0
      %v3583 = vsel %vm3572, %v3563, 0
      %v3586 = vsel %vm3572, %v3565, 0
      %v3589 = vsel %vm3572, %v3567, 0
      %v3592 = vsel %vm3572, %v3569, 0
      %v3595 = vsel %vm3572, %v3571, 0
      %3597 = vmatprep.subr.bf16.mxu0 0
      %3598 = vmatpush1.bf16.xpose.msra.mxu0 0
      %3599 = vmatprep.subr.bf16.mxu0 0
      %3600 = vmatpush1.bf16.xpose.msra.mxu0 0
      %3601 = vmatprep.subr.bf16.mxu0 0
      %3602 = vmatpush1.bf16.xpose.msra.mxu0 0
      %3603 = vmatprep.subr.bf16.mxu0 0
      %3604 = vmatpush1.bf16.xpose.msra.mxu0 0
      %3605 = vmatprep.subr.bf16.mxu0 0
      %3606 = vmatpush1.bf16.xpose.msra.mxu0 %v3595
      %3607 = vmatprep.subr.bf16.mxu0 0
      %3608 = vmatpush1.bf16.xpose.msra.mxu0 %v3592
      %3609 = vmatprep.subr.bf16.mxu0 0
      %3610 = vmatpush1.bf16.xpose.msra.mxu0 %v3589
      %3611 = vmatprep.subr.bf16.mxu0 0
      %3612 = vmatpush1.bf16.xpose.msra.mxu0 %v3586
      %3613 = vmatprep.subr.bf16.mxu0 0
      %3614 = vmatpush2.bf16.xpose.msra.mxu0 0
      %3615 = vmatprep.subr.bf16.mxu0 0
      %3616 = vmatpush2.bf16.xpose.msra.mxu0 0
      %3617 = vmatprep.subr.bf16.mxu0 0
      %3618 = vmatpush2.bf16.xpose.msra.mxu0 0
      %3619 = vmatprep.subr.bf16.mxu0 0
      %3620 = vmatpush2.bf16.xpose.msra.mxu0 0
      %3621 = vmatprep.subr.bf16.mxu0 0
      %3622 = vmatpush2.bf16.xpose.msra.mxu0 0
      %3623 = vmatprep.subr.bf16.mxu0 0
      %3624 = vmatpush2.bf16.xpose.msra.mxu0 0
      %3625 = vmatprep.subr.bf16.mxu0 0
      %3626 = vmatpush2.bf16.xpose.msra.mxu0 0
      %3627 = vmatprep.subr.bf16.mxu0 0
      %3628 = vmatpush2.bf16.xpose.msra.mxu0 0
      %3629 = vmatprep.mubr.bf16.mxu0 0
      %3630 = vmatmul.mubr.bf16.gmra.mxu0 %v3574
      %v3631 = vpop.f32.mrf.mxu0
      %v3632 = vadd.f32 0.0, %v3631
      %v3633 = vpop.f32.mrf.mxu0
      %v3634 = vpop.f32.mrf.mxu0
      %v3635 = vadd.f32 0.0, %v3634
      %v3636 = vpop.f32.mrf.mxu0
      %3637 = vmatprep.mubr.bf16.mxu0 0
      %3638 = vmatmul.mubr.bf16.gmra.mxu0 %v3577
      %v3639 = vpop.f32.mrf.mxu0
      %v3640 = vadd.f32 0.0, %v3639
      %v3641 = vpop.f32.mrf.mxu0
      %v3642 = vpop.f32.mrf.mxu0
      %v3643 = vadd.f32 0.0, %v3642
      %v3644 = vpop.f32.mrf.mxu0
      %3645 = vmatprep.mubr.bf16.mxu0 0
      %3646 = vmatmul.mubr.bf16.gmra.mxu0 %v3580
      %v3647 = vpop.f32.mrf.mxu0
      %v3648 = vadd.f32 0.0, %v3647
      %v3649 = vpop.f32.mrf.mxu0
      %v3650 = vpop.f32.mrf.mxu0
      %v3651 = vadd.f32 0.0, %v3650
      %v3652 = vpop.f32.mrf.mxu0
      %3653 = vmatprep.mubr.bf16.mxu0 0
      %3654 = vmatmul.mubr.bf16.gmra.mxu0 %v3583
      %v3655 = vpop.f32.mrf.mxu0
      %v3656 = vadd.f32 0.0, %v3655
      %v3657 = vpop.f32.mrf.mxu0
      %v3658 = vpop.f32.mrf.mxu0
      %v3659 = vadd.f32 0.0, %v3658
      %v3660 = vpop.f32.mrf.mxu0
      %3661 = vdwg.mxu0
      %v3662 = vmul.f32 %v3632, 0.4472136
      %v3663 = vmul.f32 %v3635, 0.4472136
      %v3664 = vmul.f32 %v3640, 0.4472136
      %v3665 = vmul.f32 %v3643, 0.4472136
      %v3666 = vmul.f32 %v3648, 0.4472136
      %v3667 = vmul.f32 %v3651, 0.4472136
      %v3668 = vmul.f32 %v3656, 0.4472136
      %v3669 = vmul.f32 %v3659, 0.4472136
      %v3670 = vsel %vm1173, %v3662, -inf
      %3671 = vmax.xlane.f32.xlu0 %v3670
      %v3672 = vpop.xlane.xlu0 %3671
      %v3673 = vsel %vm1173, %v3663, -inf
      %3674 = vmax.xlane.f32.xlu0 %v3673
      %v3675 = vpop.xlane.xlu0 %3674
      %v3676 = vsel %vm1173, %v3664, -inf
      %3677 = vmax.xlane.f32.xlu0 %v3676
      %v3678 = vpop.xlane.xlu0 %3677
      %v3679 = vsel %vm1173, %v3665, -inf
      %3680 = vmax.xlane.f32.xlu0 %v3679
      %v3681 = vpop.xlane.xlu0 %3680
      %v3682 = vsel %vm1173, %v3666, -inf
      %3683 = vmax.xlane.f32.xlu0 %v3682
      %v3684 = vpop.xlane.xlu0 %3683
      %v3685 = vsel %vm1173, %v3667, -inf
      %3686 = vmax.xlane.f32.xlu0 %v3685
      %v3687 = vpop.xlane.xlu0 %3686
      %v3688 = vsel %vm1173, %v3668, -inf
      %3689 = vmax.xlane.f32.xlu0 %v3688
      %v3690 = vpop.xlane.xlu0 %3689
      %v3691 = vsel %vm1173, %v3669, -inf
      %3692 = vmax.xlane.f32.xlu0 %v3691
      %v3693 = vpop.xlane.xlu0 %3692
      %v3694 = vsub.f32 %v3662, %v3672
      %v3695 = vsub.f32 %v3663, %v3675
      %v3696 = vsub.f32 %v3664, %v3678
      %v3697 = vsub.f32 %v3665, %v3681
      %v3698 = vsub.f32 %v3666, %v3684
      %v3699 = vsub.f32 %v3667, %v3687
      %v3700 = vsub.f32 %v3668, %v3690
      %v3701 = vsub.f32 %v3669, %v3693
      %v3702 = vmul.f32 %v3694, 1.442695
      %v3703 = vpow.pop %v3702
      %v3704 = vmul.f32 %v3695, 1.442695
      %v3705 = vpow.pop %v3704
      %v3706 = vmul.f32 %v3696, 1.442695
      %v3707 = vpow.pop %v3706
      %v3708 = vmul.f32 %v3697, 1.442695
      %v3709 = vpow.pop %v3708
      %v3710 = vmul.f32 %v3698, 1.442695
      %v3711 = vpow.pop %v3710
      %v3712 = vmul.f32 %v3699, 1.442695
      %v3713 = vpow.pop %v3712
      %v3714 = vmul.f32 %v3700, 1.442695
      %v3715 = vpow.pop %v3714
      %v3716 = vmul.f32 %v3701, 1.442695
      %v3717 = vpow.pop %v3716
      %v3718 = vsel %vm1173, %v3703, 0.0
      %3719 = vadd.xlane.f32.xlu0 %v3718
      %v3720 = vpop.xlane.xlu0 %3719
      %v3721 = vsel %vm1173, %v3705, 0.0
      %3722 = vadd.xlane.f32.xlu0 %v3721
      %v3723 = vpop.xlane.xlu0 %3722
      %v3724 = vsel %vm1173, %v3707, 0.0
      %3725 = vadd.xlane.f32.xlu0 %v3724
      %v3726 = vpop.xlane.xlu0 %3725
      %v3727 = vsel %vm1173, %v3709, 0.0
      %3728 = vadd.xlane.f32.xlu0 %v3727
      %v3729 = vpop.xlane.xlu0 %3728
      %v3730 = vsel %vm1173, %v3711, 0.0
      %3731 = vadd.xlane.f32.xlu0 %v3730
      %v3732 = vpop.xlane.xlu0 %3731
      %v3733 = vsel %vm1173, %v3713, 0.0
      %3734 = vadd.xlane.f32.xlu0 %v3733
      %v3735 = vpop.xlane.xlu0 %3734
      %v3736 = vsel %vm1173, %v3715, 0.0
      %3737 = vadd.xlane.f32.xlu0 %v3736
      %v3738 = vpop.xlane.xlu0 %3737
      %v3739 = vsel %vm1173, %v3717, 0.0
      %3740 = vadd.xlane.f32.xlu0 %v3739
      %v3741 = vpop.xlane.xlu0 %3740
      %v3742 = vrcp.pop %v3720
      %v3743 = vrcp.pop %v3723
      %v3744 = vrcp.pop %v3726
      %v3745 = vrcp.pop %v3729
      %v3746 = vrcp.pop %v3732
      %v3747 = vrcp.pop %v3735
      %v3748 = vrcp.pop %v3738
      %v3749 = vrcp.pop %v3741
      %v3750 = vmul.f32 %v3703, %v3742
      %v3751 = vmul.f32 %v3705, %v3743
      %v3752 = vmul.f32 %v3707, %v3744
      %v3753 = vmul.f32 %v3709, %v3745
      %v3754 = vmul.f32 %v3711, %v3746
      %v3755 = vmul.f32 %v3713, %v3747
      %v3756 = vmul.f32 %v3715, %v3748
      %v3757 = vmul.f32 %v3717, %v3749
      %v3758 = vpack.c.bf16 %v3751, %v3750
      %v3759 = vpack.c.bf16 %v3753, %v3752
      %v3760 = vpack.c.bf16 %v3755, %v3754
      %v3761 = vpack.c.bf16 %v3757, %v3756
      %3762 = vrot.lane.b32.xlu0 %v3548, 68
      %v3763 = vpop.permute.xlu0 %3762
      %3764 = vrot.lane.b32.xlu0 %v3549, 68
      %v3765 = vpop.permute.xlu0 %3764
      %3766 = vrot.lane.b32.xlu0 %v3550, 68
      %v3767 = vpop.permute.xlu0 %3766
      %3768 = vrot.lane.b32.xlu0 %v3551, 68
      %v3769 = vpop.permute.xlu0 %3768
      %v3775 = vsel %vm1173, %v3758, 0
      %v3778 = vsel %vm1173, %v3759, 0
      %v3781 = vsel %vm1173, %v3760, 0
      %v3784 = vsel %vm1173, %v3761, 0
      %3786 = vmatprep.subr.bf16.mxu0 0
      %3787 = vmatpush1.bf16.msra.mxu0 0
      %3788 = vmatprep.subr.bf16.mxu0 0
      %3789 = vmatpush1.bf16.msra.mxu0 0
      %3790 = vmatprep.subr.bf16.mxu0 0
      %3791 = vmatpush1.bf16.msra.mxu0 0
      %3792 = vmatprep.subr.bf16.mxu0 0
      %3793 = vmatpush1.bf16.msra.mxu0 0
      %3794 = vmatprep.subr.bf16.mxu0 0
      %3795 = vmatpush1.bf16.msra.mxu0 %v3769
      %3796 = vmatprep.subr.bf16.mxu0 0
      %3797 = vmatpush1.bf16.msra.mxu0 %v3767
      %3798 = vmatprep.subr.bf16.mxu0 0
      %3799 = vmatpush1.bf16.msra.mxu0 %v3765
      %3800 = vmatprep.subr.bf16.mxu0 0
      %3801 = vmatpush1.bf16.msra.mxu0 %v3763
      %3802 = vmatprep.subr.bf16.mxu0 0
      %3803 = vmatpush2.bf16.msra.mxu0 0
      %3804 = vmatprep.subr.bf16.mxu0 0
      %3805 = vmatpush2.bf16.msra.mxu0 0
      %3806 = vmatprep.subr.bf16.mxu0 0
      %3807 = vmatpush2.bf16.msra.mxu0 0
      %3808 = vmatprep.subr.bf16.mxu0 0
      %3809 = vmatpush2.bf16.msra.mxu0 0
      %3810 = vmatprep.subr.bf16.mxu0 0
      %3811 = vmatpush2.bf16.msra.mxu0 0
      %3812 = vmatprep.subr.bf16.mxu0 0
      %3813 = vmatpush2.bf16.msra.mxu0 0
      %3814 = vmatprep.subr.bf16.mxu0 0
      %3815 = vmatpush2.bf16.msra.mxu0 0
      %3816 = vmatprep.subr.bf16.mxu0 0
      %3817 = vmatpush2.bf16.msra.mxu0 0
      %3818 = vmatprep.mubr.bf16.mxu0 0
      %3819 = vmatmul.mubr.bf16.gmra.mxu0 %v3775
      %v3820 = vpop.f32.mrf.mxu0
      %v3821 = vadd.f32 0.0, %v3820
      %v3822 = vpop.f32.mrf.mxu0
      %v3823 = vpop.f32.mrf.mxu0
      %v3824 = vadd.f32 0.0, %v3823
      %v3825 = vpop.f32.mrf.mxu0
      %3826 = vmatprep.mubr.bf16.mxu0 0
      %3827 = vmatmul.mubr.bf16.gmra.mxu0 %v3778
      %v3828 = vpop.f32.mrf.mxu0
      %v3829 = vadd.f32 0.0, %v3828
      %v3830 = vpop.f32.mrf.mxu0
      %v3831 = vpop.f32.mrf.mxu0
      %v3832 = vadd.f32 0.0, %v3831
      %v3833 = vpop.f32.mrf.mxu0
      %3834 = vmatprep.mubr.bf16.mxu0 0
      %3835 = vmatmul.mubr.bf16.gmra.mxu0 %v3781
      %v3836 = vpop.f32.mrf.mxu0
      %v3837 = vadd.f32 0.0, %v3836
      %v3838 = vpop.f32.mrf.mxu0
      %v3839 = vpop.f32.mrf.mxu0
      %v3840 = vadd.f32 0.0, %v3839
      %v3841 = vpop.f32.mrf.mxu0
      %3842 = vmatprep.mubr.bf16.mxu0 0
      %3843 = vmatmul.mubr.bf16.gmra.mxu0 %v3784
      %v3844 = vpop.f32.mrf.mxu0
      %v3845 = vadd.f32 0.0, %v3844
      %v3846 = vpop.f32.mrf.mxu0
      %v3847 = vpop.f32.mrf.mxu0
      %v3848 = vadd.f32 0.0, %v3847
      %v3849 = vpop.f32.mrf.mxu0
      %3850 = vdwg.mxu0
      %3851 = vrot.lane.b32.xlu0 %v3548, 103
      %v3852 = vpop.permute.xlu0 %3851
      %3853 = vrot.lane.b32.xlu0 %v3549, 103
      %v3854 = vpop.permute.xlu0 %3853
      %3855 = vrot.lane.b32.xlu0 %v3550, 103
      %v3856 = vpop.permute.xlu0 %3855
      %3857 = vrot.lane.b32.xlu0 %v3551, 103
      %v3858 = vpop.permute.xlu0 %3857
      %3859 = vrot.lane.b32.xlu0 %v3548, 83
      %v3860 = vpop.permute.xlu0 %3859
      %3861 = vrot.lane.b32.xlu0 %v3549, 83
      %v3862 = vpop.permute.xlu0 %3861
      %3863 = vrot.lane.b32.xlu0 %v3550, 83
      %v3864 = vpop.permute.xlu0 %3863
      %3865 = vrot.lane.b32.xlu0 %v3551, 83
      %v3866 = vpop.permute.xlu0 %3865
      %v3868 = vsel %vm3572, %v3852, 0
      %v3871 = vsel %vm3572, %v3854, 0
      %v3874 = vsel %vm3572, %v3856, 0
      %v3877 = vsel %vm3572, %v3858, 0
      %v3880 = vsel %vm3572, %v3860, 0
      %v3883 = vsel %vm3572, %v3862, 0
      %v3886 = vsel %vm3572, %v3864, 0
      %v3889 = vsel %vm3572, %v3866, 0
      %3891 = vmatprep.subr.bf16.mxu0 0
      %3892 = vmatpush1.bf16.xpose.msra.mxu0 0
      %3893 = vmatprep.subr.bf16.mxu0 0
      %3894 = vmatpush1.bf16.xpose.msra.mxu0 0
      %3895 = vmatprep.subr.bf16.mxu0 0
      %3896 = vmatpush1.bf16.xpose.msra.mxu0 0
      %3897 = vmatprep.subr.bf16.mxu0 0
      %3898 = vmatpush1.bf16.xpose.msra.mxu0 0
      %3899 = vmatprep.subr.bf16.mxu0 0
      %3900 = vmatpush1.bf16.xpose.msra.mxu0 %v3889
      %3901 = vmatprep.subr.bf16.mxu0 0
      %3902 = vmatpush1.bf16.xpose.msra.mxu0 %v3886
      %3903 = vmatprep.subr.bf16.mxu0 0
      %3904 = vmatpush1.bf16.xpose.msra.mxu0 %v3883
      %3905 = vmatprep.subr.bf16.mxu0 0
      %3906 = vmatpush1.bf16.xpose.msra.mxu0 %v3880
      %3907 = vmatprep.subr.bf16.mxu0 0
      %3908 = vmatpush2.bf16.xpose.msra.mxu0 0
      %3909 = vmatprep.subr.bf16.mxu0 0
      %3910 = vmatpush2.bf16.xpose.msra.mxu0 0
      %3911 = vmatprep.subr.bf16.mxu0 0
      %3912 = vmatpush2.bf16.xpose.msra.mxu0 0
      %3913 = vmatprep.subr.bf16.mxu0 0
      %3914 = vmatpush2.bf16.xpose.msra.mxu0 0
      %3915 = vmatprep.subr.bf16.mxu0 0
      %3916 = vmatpush2.bf16.xpose.msra.mxu0 0
      %3917 = vmatprep.subr.bf16.mxu0 0
      %3918 = vmatpush2.bf16.xpose.msra.mxu0 0
      %3919 = vmatprep.subr.bf16.mxu0 0
      %3920 = vmatpush2.bf16.xpose.msra.mxu0 0
      %3921 = vmatprep.subr.bf16.mxu0 0
      %3922 = vmatpush2.bf16.xpose.msra.mxu0 0
      %3923 = vmatprep.mubr.bf16.mxu0 0
      %3924 = vmatmul.mubr.bf16.gmra.mxu0 %v3868
      %v3925 = vpop.f32.mrf.mxu0
      %v3926 = vadd.f32 0.0, %v3925
      %v3927 = vpop.f32.mrf.mxu0
      %v3928 = vpop.f32.mrf.mxu0
      %v3929 = vadd.f32 0.0, %v3928
      %v3930 = vpop.f32.mrf.mxu0
      %3931 = vmatprep.mubr.bf16.mxu0 0
      %3932 = vmatmul.mubr.bf16.gmra.mxu0 %v3871
      %v3933 = vpop.f32.mrf.mxu0
      %v3934 = vadd.f32 0.0, %v3933
      %v3935 = vpop.f32.mrf.mxu0
      %v3936 = vpop.f32.mrf.mxu0
      %v3937 = vadd.f32 0.0, %v3936
      %v3938 = vpop.f32.mrf.mxu0
      %3939 = vmatprep.mubr.bf16.mxu0 0
      %3940 = vmatmul.mubr.bf16.gmra.mxu0 %v3874
      %v3941 = vpop.f32.mrf.mxu0
      %v3942 = vadd.f32 0.0, %v3941
      %v3943 = vpop.f32.mrf.mxu0
      %v3944 = vpop.f32.mrf.mxu0
      %v3945 = vadd.f32 0.0, %v3944
      %v3946 = vpop.f32.mrf.mxu0
      %3947 = vmatprep.mubr.bf16.mxu0 0
      %3948 = vmatmul.mubr.bf16.gmra.mxu0 %v3877
      %v3949 = vpop.f32.mrf.mxu0
      %v3950 = vadd.f32 0.0, %v3949
      %v3951 = vpop.f32.mrf.mxu0
      %v3952 = vpop.f32.mrf.mxu0
      %v3953 = vadd.f32 0.0, %v3952
      %v3954 = vpop.f32.mrf.mxu0
      %3955 = vdwg.mxu0
      %v3956 = vmul.f32 %v3926, 0.4472136
      %v3957 = vmul.f32 %v3929, 0.4472136
      %v3958 = vmul.f32 %v3934, 0.4472136
      %v3959 = vmul.f32 %v3937, 0.4472136
      %v3960 = vmul.f32 %v3942, 0.4472136
      %v3961 = vmul.f32 %v3945, 0.4472136
      %v3962 = vmul.f32 %v3950, 0.4472136
      %v3963 = vmul.f32 %v3953, 0.4472136
      %v3964 = vsel %vm1173, %v3956, -inf
      %3965 = vmax.xlane.f32.xlu0 %v3964
      %v3966 = vpop.xlane.xlu0 %3965
      %v3967 = vsel %vm1173, %v3957, -inf
      %3968 = vmax.xlane.f32.xlu0 %v3967
      %v3969 = vpop.xlane.xlu0 %3968
      %v3970 = vsel %vm1173, %v3958, -inf
      %3971 = vmax.xlane.f32.xlu0 %v3970
      %v3972 = vpop.xlane.xlu0 %3971
      %v3973 = vsel %vm1173, %v3959, -inf
      %3974 = vmax.xlane.f32.xlu0 %v3973
      %v3975 = vpop.xlane.xlu0 %3974
      %v3976 = vsel %vm1173, %v3960, -inf
      %3977 = vmax.xlane.f32.xlu0 %v3976
      %v3978 = vpop.xlane.xlu0 %3977
      %v3979 = vsel %vm1173, %v3961, -inf
      %3980 = vmax.xlane.f32.xlu0 %v3979
      %v3981 = vpop.xlane.xlu0 %3980
      %v3982 = vsel %vm1173, %v3962, -inf
      %3983 = vmax.xlane.f32.xlu0 %v3982
      %v3984 = vpop.xlane.xlu0 %3983
      %v3985 = vsel %vm1173, %v3963, -inf
      %3986 = vmax.xlane.f32.xlu0 %v3985
      %v3987 = vpop.xlane.xlu0 %3986
      %v3988 = vsub.f32 %v3956, %v3966
      %v3989 = vsub.f32 %v3957, %v3969
      %v3990 = vsub.f32 %v3958, %v3972
      %v3991 = vsub.f32 %v3959, %v3975
      %v3992 = vsub.f32 %v3960, %v3978
      %v3993 = vsub.f32 %v3961, %v3981
      %v3994 = vsub.f32 %v3962, %v3984
      %v3995 = vsub.f32 %v3963, %v3987
      %v3996 = vmul.f32 %v3988, 1.442695
      %v3997 = vpow.pop %v3996
      %v3998 = vmul.f32 %v3989, 1.442695
      %v3999 = vpow.pop %v3998
      %v4000 = vmul.f32 %v3990, 1.442695
      %v4001 = vpow.pop %v4000
      %v4002 = vmul.f32 %v3991, 1.442695
      %v4003 = vpow.pop %v4002
      %v4004 = vmul.f32 %v3992, 1.442695
      %v4005 = vpow.pop %v4004
      %v4006 = vmul.f32 %v3993, 1.442695
      %v4007 = vpow.pop %v4006
      %v4008 = vmul.f32 %v3994, 1.442695
      %v4009 = vpow.pop %v4008
      %v4010 = vmul.f32 %v3995, 1.442695
      %v4011 = vpow.pop %v4010
      %v4012 = vsel %vm1173, %v3997, 0.0
      %4013 = vadd.xlane.f32.xlu0 %v4012
      %v4014 = vpop.xlane.xlu0 %4013
      %v4015 = vsel %vm1173, %v3999, 0.0
      %4016 = vadd.xlane.f32.xlu0 %v4015
      %v4017 = vpop.xlane.xlu0 %4016
      %v4018 = vsel %vm1173, %v4001, 0.0
      %4019 = vadd.xlane.f32.xlu0 %v4018
      %v4020 = vpop.xlane.xlu0 %4019
      %v4021 = vsel %vm1173, %v4003, 0.0
      %4022 = vadd.xlane.f32.xlu0 %v4021
      %v4023 = vpop.xlane.xlu0 %4022
      %v4024 = vsel %vm1173, %v4005, 0.0
      %4025 = vadd.xlane.f32.xlu0 %v4024
      %v4026 = vpop.xlane.xlu0 %4025
      %v4027 = vsel %vm1173, %v4007, 0.0
      %4028 = vadd.xlane.f32.xlu0 %v4027
      %v4029 = vpop.xlane.xlu0 %4028
      %v4030 = vsel %vm1173, %v4009, 0.0
      %4031 = vadd.xlane.f32.xlu0 %v4030
      %v4032 = vpop.xlane.xlu0 %4031
      %v4033 = vsel %vm1173, %v4011, 0.0
      %4034 = vadd.xlane.f32.xlu0 %v4033
      %v4035 = vpop.xlane.xlu0 %4034
      %v4036 = vrcp.pop %v4014
      %v4037 = vrcp.pop %v4017
      %v4038 = vrcp.pop %v4020
      %v4039 = vrcp.pop %v4023
      %v4040 = vrcp.pop %v4026
      %v4041 = vrcp.pop %v4029
      %v4042 = vrcp.pop %v4032
      %v4043 = vrcp.pop %v4035
      %v4044 = vmul.f32 %v3997, %v4036
      %v4045 = vmul.f32 %v3999, %v4037
      %v4046 = vmul.f32 %v4001, %v4038
      %v4047 = vmul.f32 %v4003, %v4039
      %v4048 = vmul.f32 %v4005, %v4040
      %v4049 = vmul.f32 %v4007, %v4041
      %v4050 = vmul.f32 %v4009, %v4042
      %v4051 = vmul.f32 %v4011, %v4043
      %v4052 = vpack.c.bf16 %v4045, %v4044
      %v4053 = vpack.c.bf16 %v4047, %v4046
      %v4054 = vpack.c.bf16 %v4049, %v4048
      %v4055 = vpack.c.bf16 %v4051, %v4050
      %4056 = vrot.lane.b32.xlu0 %v3548, 63
      %v4057 = vpop.permute.xlu0 %4056
      %4058 = vrot.lane.b32.xlu0 %v3549, 63
      %v4059 = vpop.permute.xlu0 %4058
      %4060 = vrot.lane.b32.xlu0 %v3550, 63
      %v4061 = vpop.permute.xlu0 %4060
      %4062 = vrot.lane.b32.xlu0 %v3551, 63
      %v4063 = vpop.permute.xlu0 %4062
      %v4069 = vsel %vm1173, %v4052, 0
      %v4072 = vsel %vm1173, %v4053, 0
      %v4075 = vsel %vm1173, %v4054, 0
      %v4078 = vsel %vm1173, %v4055, 0
      %4080 = vmatprep.subr.bf16.mxu0 0
      %4081 = vmatpush1.bf16.msra.mxu0 0
      %4082 = vmatprep.subr.bf16.mxu0 0
      %4083 = vmatpush1.bf16.msra.mxu0 0
      %4084 = vmatprep.subr.bf16.mxu0 0
      %4085 = vmatpush1.bf16.msra.mxu0 0
      %4086 = vmatprep.subr.bf16.mxu0 0
      %4087 = vmatpush1.bf16.msra.mxu0 0
      %4088 = vmatprep.subr.bf16.mxu0 0
      %4089 = vmatpush1.bf16.msra.mxu0 %v4063
      %4090 = vmatprep.subr.bf16.mxu0 0
      %4091 = vmatpush1.bf16.msra.mxu0 %v4061
      %4092 = vmatprep.subr.bf16.mxu0 0
      %4093 = vmatpush1.bf16.msra.mxu0 %v4059
      %4094 = vmatprep.subr.bf16.mxu0 0
      %4095 = vmatpush1.bf16.msra.mxu0 %v4057
      %4096 = vmatprep.subr.bf16.mxu0 0
      %4097 = vmatpush2.bf16.msra.mxu0 0
      %4098 = vmatprep.subr.bf16.mxu0 0
      %4099 = vmatpush2.bf16.msra.mxu0 0
      %4100 = vmatprep.subr.bf16.mxu0 0
      %4101 = vmatpush2.bf16.msra.mxu0 0
      %4102 = vmatprep.subr.bf16.mxu0 0
      %4103 = vmatpush2.bf16.msra.mxu0 0
      %4104 = vmatprep.subr.bf16.mxu0 0
      %4105 = vmatpush2.bf16.msra.mxu0 0
      %4106 = vmatprep.subr.bf16.mxu0 0
      %4107 = vmatpush2.bf16.msra.mxu0 0
      %4108 = vmatprep.subr.bf16.mxu0 0
      %4109 = vmatpush2.bf16.msra.mxu0 0
      %4110 = vmatprep.subr.bf16.mxu0 0
      %4111 = vmatpush2.bf16.msra.mxu0 0
      %4112 = vmatprep.mubr.bf16.mxu0 0
      %4113 = vmatmul.mubr.bf16.gmra.mxu0 %v4069
      %v4114 = vpop.f32.mrf.mxu0
      %v4115 = vadd.f32 0.0, %v4114
      %v4116 = vpop.f32.mrf.mxu0
      %v4117 = vpop.f32.mrf.mxu0
      %v4118 = vadd.f32 0.0, %v4117
      %v4119 = vpop.f32.mrf.mxu0
      %4120 = vmatprep.mubr.bf16.mxu0 0
      %4121 = vmatmul.mubr.bf16.gmra.mxu0 %v4072
      %v4122 = vpop.f32.mrf.mxu0
      %v4123 = vadd.f32 0.0, %v4122
      %v4124 = vpop.f32.mrf.mxu0
      %v4125 = vpop.f32.mrf.mxu0
      %v4126 = vadd.f32 0.0, %v4125
      %v4127 = vpop.f32.mrf.mxu0
      %4128 = vmatprep.mubr.bf16.mxu0 0
      %4129 = vmatmul.mubr.bf16.gmra.mxu0 %v4075
      %v4130 = vpop.f32.mrf.mxu0
      %v4131 = vadd.f32 0.0, %v4130
      %v4132 = vpop.f32.mrf.mxu0
      %v4133 = vpop.f32.mrf.mxu0
      %v4134 = vadd.f32 0.0, %v4133
      %v4135 = vpop.f32.mrf.mxu0
      %4136 = vmatprep.mubr.bf16.mxu0 0
      %4137 = vmatmul.mubr.bf16.gmra.mxu0 %v4078
      %v4138 = vpop.f32.mrf.mxu0
      %v4139 = vadd.f32 0.0, %v4138
      %v4140 = vpop.f32.mrf.mxu0
      %v4141 = vpop.f32.mrf.mxu0
      %v4142 = vadd.f32 0.0, %v4141
      %v4143 = vpop.f32.mrf.mxu0
      %4144 = vdwg.mxu0
      %4145 = vrot.lane.b32.xlu0 %v3548, 98
      %v4146 = vpop.permute.xlu0 %4145
      %4147 = vrot.lane.b32.xlu0 %v3549, 98
      %v4148 = vpop.permute.xlu0 %4147
      %4149 = vrot.lane.b32.xlu0 %v3550, 98
      %v4150 = vpop.permute.xlu0 %4149
      %4151 = vrot.lane.b32.xlu0 %v3551, 98
      %v4152 = vpop.permute.xlu0 %4151
      %4153 = vrot.lane.b32.xlu0 %v3548, 78
      %v4154 = vpop.permute.xlu0 %4153
      %4155 = vrot.lane.b32.xlu0 %v3549, 78
      %v4156 = vpop.permute.xlu0 %4155
      %4157 = vrot.lane.b32.xlu0 %v3550, 78
      %v4158 = vpop.permute.xlu0 %4157
      %4159 = vrot.lane.b32.xlu0 %v3551, 78
      %v4160 = vpop.permute.xlu0 %4159
      %v4162 = vsel %vm3572, %v4146, 0
      %v4165 = vsel %vm3572, %v4148, 0
      %v4168 = vsel %vm3572, %v4150, 0
      %v4171 = vsel %vm3572, %v4152, 0
      %v4174 = vsel %vm3572, %v4154, 0
      %v4177 = vsel %vm3572, %v4156, 0
      %v4180 = vsel %vm3572, %v4158, 0
      %v4183 = vsel %vm3572, %v4160, 0
      %4185 = vmatprep.subr.bf16.mxu0 0
      %4186 = vmatpush1.bf16.xpose.msra.mxu0 0
      %4187 = vmatprep.subr.bf16.mxu0 0
      %4188 = vmatpush1.bf16.xpose.msra.mxu0 0
      %4189 = vmatprep.subr.bf16.mxu0 0
      %4190 = vmatpush1.bf16.xpose.msra.mxu0 0
      %4191 = vmatprep.subr.bf16.mxu0 0
      %4192 = vmatpush1.bf16.xpose.msra.mxu0 0
      %4193 = vmatprep.subr.bf16.mxu0 0
      %4194 = vmatpush1.bf16.xpose.msra.mxu0 %v4183
      %4195 = vmatprep.subr.bf16.mxu0 0
      %4196 = vmatpush1.bf16.xpose.msra.mxu0 %v4180
      %4197 = vmatprep.subr.bf16.mxu0 0
      %4198 = vmatpush1.bf16.xpose.msra.mxu0 %v4177
      %4199 = vmatprep.subr.bf16.mxu0 0
      %4200 = vmatpush1.bf16.xpose.msra.mxu0 %v4174
      %4201 = vmatprep.subr.bf16.mxu0 0
      %4202 = vmatpush2.bf16.xpose.msra.mxu0 0
      %4203 = vmatprep.subr.bf16.mxu0 0
      %4204 = vmatpush2.bf16.xpose.msra.mxu0 0
      %4205 = vmatprep.subr.bf16.mxu0 0
      %4206 = vmatpush2.bf16.xpose.msra.mxu0 0
      %4207 = vmatprep.subr.bf16.mxu0 0
      %4208 = vmatpush2.bf16.xpose.msra.mxu0 0
      %4209 = vmatprep.subr.bf16.mxu0 0
      %4210 = vmatpush2.bf16.xpose.msra.mxu0 0
      %4211 = vmatprep.subr.bf16.mxu0 0
      %4212 = vmatpush2.bf16.xpose.msra.mxu0 0
      %4213 = vmatprep.subr.bf16.mxu0 0
      %4214 = vmatpush2.bf16.xpose.msra.mxu0 0
      %4215 = vmatprep.subr.bf16.mxu0 0
      %4216 = vmatpush2.bf16.xpose.msra.mxu0 0
      %4217 = vmatprep.mubr.bf16.mxu0 0
      %4218 = vmatmul.mubr.bf16.gmra.mxu0 %v4162
      %v4219 = vpop.f32.mrf.mxu0
      %v4220 = vadd.f32 0.0, %v4219
      %v4221 = vpop.f32.mrf.mxu0
      %v4222 = vpop.f32.mrf.mxu0
      %v4223 = vadd.f32 0.0, %v4222
      %v4224 = vpop.f32.mrf.mxu0
      %4225 = vmatprep.mubr.bf16.mxu0 0
      %4226 = vmatmul.mubr.bf16.gmra.mxu0 %v4165
      %v4227 = vpop.f32.mrf.mxu0
      %v4228 = vadd.f32 0.0, %v4227
      %v4229 = vpop.f32.mrf.mxu0
      %v4230 = vpop.f32.mrf.mxu0
      %v4231 = vadd.f32 0.0, %v4230
      %v4232 = vpop.f32.mrf.mxu0
      %4233 = vmatprep.mubr.bf16.mxu0 0
      %4234 = vmatmul.mubr.bf16.gmra.mxu0 %v4168
      %v4235 = vpop.f32.mrf.mxu0
      %v4236 = vadd.f32 0.0, %v4235
      %v4237 = vpop.f32.mrf.mxu0
      %v4238 = vpop.f32.mrf.mxu0
      %v4239 = vadd.f32 0.0, %v4238
      %v4240 = vpop.f32.mrf.mxu0
      %4241 = vmatprep.mubr.bf16.mxu0 0
      %4242 = vmatmul.mubr.bf16.gmra.mxu0 %v4171
      %v4243 = vpop.f32.mrf.mxu0
      %v4244 = vadd.f32 0.0, %v4243
      %v4245 = vpop.f32.mrf.mxu0
      %v4246 = vpop.f32.mrf.mxu0
      %v4247 = vadd.f32 0.0, %v4246
      %v4248 = vpop.f32.mrf.mxu0
      %4249 = vdwg.mxu0
      %v4250 = vmul.f32 %v4220, 0.4472136
      %v4251 = vmul.f32 %v4223, 0.4472136
      %v4252 = vmul.f32 %v4228, 0.4472136
      %v4253 = vmul.f32 %v4231, 0.4472136
      %v4254 = vmul.f32 %v4236, 0.4472136
      %v4255 = vmul.f32 %v4239, 0.4472136
      %v4256 = vmul.f32 %v4244, 0.4472136
      %v4257 = vmul.f32 %v4247, 0.4472136
      %v4258 = vsel %vm1173, %v4250, -inf
      %4259 = vmax.xlane.f32.xlu0 %v4258
      %v4260 = vpop.xlane.xlu0 %4259
      %v4261 = vsel %vm1173, %v4251, -inf
      %4262 = vmax.xlane.f32.xlu0 %v4261
      %v4263 = vpop.xlane.xlu0 %4262
      %v4264 = vsel %vm1173, %v4252, -inf
      %4265 = vmax.xlane.f32.xlu0 %v4264
      %v4266 = vpop.xlane.xlu0 %4265
      %v4267 = vsel %vm1173, %v4253, -inf
      %4268 = vmax.xlane.f32.xlu0 %v4267
      %v4269 = vpop.xlane.xlu0 %4268
      %v4270 = vsel %vm1173, %v4254, -inf
      %4271 = vmax.xlane.f32.xlu0 %v4270
      %v4272 = vpop.xlane.xlu0 %4271
      %v4273 = vsel %vm1173, %v4255, -inf
      %4274 = vmax.xlane.f32.xlu0 %v4273
      %v4275 = vpop.xlane.xlu0 %4274
      %v4276 = vsel %vm1173, %v4256, -inf
      %4277 = vmax.xlane.f32.xlu0 %v4276
      %v4278 = vpop.xlane.xlu0 %4277
      %v4279 = vsel %vm1173, %v4257, -inf
      %4280 = vmax.xlane.f32.xlu0 %v4279
      %v4281 = vpop.xlane.xlu0 %4280
      %v4282 = vsub.f32 %v4250, %v4260
      %v4283 = vsub.f32 %v4251, %v4263
      %v4284 = vsub.f32 %v4252, %v4266
      %v4285 = vsub.f32 %v4253, %v4269
      %v4286 = vsub.f32 %v4254, %v4272
      %v4287 = vsub.f32 %v4255, %v4275
      %v4288 = vsub.f32 %v4256, %v4278
      %v4289 = vsub.f32 %v4257, %v4281
      %v4290 = vmul.f32 %v4282, 1.442695
      %v4291 = vpow.pop %v4290
      %v4292 = vmul.f32 %v4283, 1.442695
      %v4293 = vpow.pop %v4292
      %v4294 = vmul.f32 %v4284, 1.442695
      %v4295 = vpow.pop %v4294
      %v4296 = vmul.f32 %v4285, 1.442695
      %v4297 = vpow.pop %v4296
      %v4298 = vmul.f32 %v4286, 1.442695
      %v4299 = vpow.pop %v4298
      %v4300 = vmul.f32 %v4287, 1.442695
      %v4301 = vpow.pop %v4300
      %v4302 = vmul.f32 %v4288, 1.442695
      %v4303 = vpow.pop %v4302
      %v4304 = vmul.f32 %v4289, 1.442695
      %v4305 = vpow.pop %v4304
      %v4306 = vsel %vm1173, %v4291, 0.0
      %4307 = vadd.xlane.f32.xlu0 %v4306
      %v4308 = vpop.xlane.xlu0 %4307
      %v4309 = vsel %vm1173, %v4293, 0.0
      %4310 = vadd.xlane.f32.xlu0 %v4309
      %v4311 = vpop.xlane.xlu0 %4310
      %v4312 = vsel %vm1173, %v4295, 0.0
      %4313 = vadd.xlane.f32.xlu0 %v4312
      %v4314 = vpop.xlane.xlu0 %4313
      %v4315 = vsel %vm1173, %v4297, 0.0
      %4316 = vadd.xlane.f32.xlu0 %v4315
      %v4317 = vpop.xlane.xlu0 %4316
      %v4318 = vsel %vm1173, %v4299, 0.0
      %4319 = vadd.xlane.f32.xlu0 %v4318
      %v4320 = vpop.xlane.xlu0 %4319
      %v4321 = vsel %vm1173, %v4301, 0.0
      %4322 = vadd.xlane.f32.xlu0 %v4321
      %v4323 = vpop.xlane.xlu0 %4322
      %v4324 = vsel %vm1173, %v4303, 0.0
      %4325 = vadd.xlane.f32.xlu0 %v4324
      %v4326 = vpop.xlane.xlu0 %4325
      %v4327 = vsel %vm1173, %v4305, 0.0
      %4328 = vadd.xlane.f32.xlu0 %v4327
      %v4329 = vpop.xlane.xlu0 %4328
      %v4330 = vrcp.pop %v4308
      %v4331 = vrcp.pop %v4311
      %v4332 = vrcp.pop %v4314
      %v4333 = vrcp.pop %v4317
      %v4334 = vrcp.pop %v4320
      %v4335 = vrcp.pop %v4323
      %v4336 = vrcp.pop %v4326
      %v4337 = vrcp.pop %v4329
      %v4338 = vmul.f32 %v4291, %v4330
      %v4339 = vmul.f32 %v4293, %v4331
      %v4340 = vmul.f32 %v4295, %v4332
      %v4341 = vmul.f32 %v4297, %v4333
      %v4342 = vmul.f32 %v4299, %v4334
      %v4343 = vmul.f32 %v4301, %v4335
      %v4344 = vmul.f32 %v4303, %v4336
      %v4345 = vmul.f32 %v4305, %v4337
      %v4346 = vpack.c.bf16 %v4339, %v4338
      %v4347 = vpack.c.bf16 %v4341, %v4340
      %v4348 = vpack.c.bf16 %v4343, %v4342
      %v4349 = vpack.c.bf16 %v4345, %v4344
      %4350 = vrot.lane.b32.xlu0 %v3548, 58
      %v4351 = vpop.permute.xlu0 %4350
      %4352 = vrot.lane.b32.xlu0 %v3549, 58
      %v4353 = vpop.permute.xlu0 %4352
      %4354 = vrot.lane.b32.xlu0 %v3550, 58
      %v4355 = vpop.permute.xlu0 %4354
      %4356 = vrot.lane.b32.xlu0 %v3551, 58
      %v4357 = vpop.permute.xlu0 %4356
      %v4363 = vsel %vm1173, %v4346, 0
      %v4366 = vsel %vm1173, %v4347, 0
      %v4369 = vsel %vm1173, %v4348, 0
      %v4372 = vsel %vm1173, %v4349, 0
      %4374 = vmatprep.subr.bf16.mxu0 0
      %4375 = vmatpush1.bf16.msra.mxu0 0
      %4376 = vmatprep.subr.bf16.mxu0 0
      %4377 = vmatpush1.bf16.msra.mxu0 0
      %4378 = vmatprep.subr.bf16.mxu0 0
      %4379 = vmatpush1.bf16.msra.mxu0 0
      %4380 = vmatprep.subr.bf16.mxu0 0
      %4381 = vmatpush1.bf16.msra.mxu0 0
      %4382 = vmatprep.subr.bf16.mxu0 0
      %4383 = vmatpush1.bf16.msra.mxu0 %v4357
      %4384 = vmatprep.subr.bf16.mxu0 0
      %4385 = vmatpush1.bf16.msra.mxu0 %v4355
      %4386 = vmatprep.subr.bf16.mxu0 0
      %4387 = vmatpush1.bf16.msra.mxu0 %v4353
      %4388 = vmatprep.subr.bf16.mxu0 0
      %4389 = vmatpush1.bf16.msra.mxu0 %v4351
      %4390 = vmatprep.subr.bf16.mxu0 0
      %4391 = vmatpush2.bf16.msra.mxu0 0
      %4392 = vmatprep.subr.bf16.mxu0 0
      %4393 = vmatpush2.bf16.msra.mxu0 0
      %4394 = vmatprep.subr.bf16.mxu0 0
      %4395 = vmatpush2.bf16.msra.mxu0 0
      %4396 = vmatprep.subr.bf16.mxu0 0
      %4397 = vmatpush2.bf16.msra.mxu0 0
      %4398 = vmatprep.subr.bf16.mxu0 0
      %4399 = vmatpush2.bf16.msra.mxu0 0
      %4400 = vmatprep.subr.bf16.mxu0 0
      %4401 = vmatpush2.bf16.msra.mxu0 0
      %4402 = vmatprep.subr.bf16.mxu0 0
      %4403 = vmatpush2.bf16.msra.mxu0 0
      %4404 = vmatprep.subr.bf16.mxu0 0
      %4405 = vmatpush2.bf16.msra.mxu0 0
      %4406 = vmatprep.mubr.bf16.mxu0 0
      %4407 = vmatmul.mubr.bf16.gmra.mxu0 %v4363
      %v4408 = vpop.f32.mrf.mxu0
      %v4409 = vadd.f32 0.0, %v4408
      %v4410 = vpop.f32.mrf.mxu0
      %v4411 = vpop.f32.mrf.mxu0
      %v4412 = vadd.f32 0.0, %v4411
      %v4413 = vpop.f32.mrf.mxu0
      %4414 = vmatprep.mubr.bf16.mxu0 0
      %4415 = vmatmul.mubr.bf16.gmra.mxu0 %v4366
      %v4416 = vpop.f32.mrf.mxu0
      %v4417 = vadd.f32 0.0, %v4416
      %v4418 = vpop.f32.mrf.mxu0
      %v4419 = vpop.f32.mrf.mxu0
      %v4420 = vadd.f32 0.0, %v4419
      %v4421 = vpop.f32.mrf.mxu0
      %4422 = vmatprep.mubr.bf16.mxu0 0
      %4423 = vmatmul.mubr.bf16.gmra.mxu0 %v4369
      %v4424 = vpop.f32.mrf.mxu0
      %v4425 = vadd.f32 0.0, %v4424
      %v4426 = vpop.f32.mrf.mxu0
      %v4427 = vpop.f32.mrf.mxu0
      %v4428 = vadd.f32 0.0, %v4427
      %v4429 = vpop.f32.mrf.mxu0
      %4430 = vmatprep.mubr.bf16.mxu0 0
      %4431 = vmatmul.mubr.bf16.gmra.mxu0 %v4372
      %v4432 = vpop.f32.mrf.mxu0
      %v4433 = vadd.f32 0.0, %v4432
      %v4434 = vpop.f32.mrf.mxu0
      %v4435 = vpop.f32.mrf.mxu0
      %v4436 = vadd.f32 0.0, %v4435
      %v4437 = vpop.f32.mrf.mxu0
      %4438 = vdwg.mxu0
      %4439 = vrot.lane.b32.xlu0 %v3548, 93
      %v4440 = vpop.permute.xlu0 %4439
      %4441 = vrot.lane.b32.xlu0 %v3549, 93
      %v4442 = vpop.permute.xlu0 %4441
      %4443 = vrot.lane.b32.xlu0 %v3550, 93
      %v4444 = vpop.permute.xlu0 %4443
      %4445 = vrot.lane.b32.xlu0 %v3551, 93
      %v4446 = vpop.permute.xlu0 %4445
      %4447 = vrot.lane.b32.xlu0 %v3548, 73
      %v4448 = vpop.permute.xlu0 %4447
      %4449 = vrot.lane.b32.xlu0 %v3549, 73
      %v4450 = vpop.permute.xlu0 %4449
      %4451 = vrot.lane.b32.xlu0 %v3550, 73
      %v4452 = vpop.permute.xlu0 %4451
      %4453 = vrot.lane.b32.xlu0 %v3551, 73
      %v4454 = vpop.permute.xlu0 %4453
      %v4456 = vsel %vm3572, %v4440, 0
      %v4459 = vsel %vm3572, %v4442, 0
      %v4462 = vsel %vm3572, %v4444, 0
      %v4465 = vsel %vm3572, %v4446, 0
      %v4468 = vsel %vm3572, %v4448, 0
      %v4471 = vsel %vm3572, %v4450, 0
      %v4474 = vsel %vm3572, %v4452, 0
      %v4477 = vsel %vm3572, %v4454, 0
      %4479 = vmatprep.subr.bf16.mxu0 0
      %4480 = vmatpush1.bf16.xpose.msra.mxu0 0
      %4481 = vmatprep.subr.bf16.mxu0 0
      %4482 = vmatpush1.bf16.xpose.msra.mxu0 0
      %4483 = vmatprep.subr.bf16.mxu0 0
      %4484 = vmatpush1.bf16.xpose.msra.mxu0 0
      %4485 = vmatprep.subr.bf16.mxu0 0
      %4486 = vmatpush1.bf16.xpose.msra.mxu0 0
      %4487 = vmatprep.subr.bf16.mxu0 0
      %4488 = vmatpush1.bf16.xpose.msra.mxu0 %v4477
      %4489 = vmatprep.subr.bf16.mxu0 0
      %4490 = vmatpush1.bf16.xpose.msra.mxu0 %v4474
      %4491 = vmatprep.subr.bf16.mxu0 0
      %4492 = vmatpush1.bf16.xpose.msra.mxu0 %v4471
      %4493 = vmatprep.subr.bf16.mxu0 0
      %4494 = vmatpush1.bf16.xpose.msra.mxu0 %v4468
      %4495 = vmatprep.subr.bf16.mxu0 0
      %4496 = vmatpush2.bf16.xpose.msra.mxu0 0
      %4497 = vmatprep.subr.bf16.mxu0 0
      %4498 = vmatpush2.bf16.xpose.msra.mxu0 0
      %4499 = vmatprep.subr.bf16.mxu0 0
      %4500 = vmatpush2.bf16.xpose.msra.mxu0 0
      %4501 = vmatprep.subr.bf16.mxu0 0
      %4502 = vmatpush2.bf16.xpose.msra.mxu0 0
      %4503 = vmatprep.subr.bf16.mxu0 0
      %4504 = vmatpush2.bf16.xpose.msra.mxu0 0
      %4505 = vmatprep.subr.bf16.mxu0 0
      %4506 = vmatpush2.bf16.xpose.msra.mxu0 0
      %4507 = vmatprep.subr.bf16.mxu0 0
      %4508 = vmatpush2.bf16.xpose.msra.mxu0 0
      %4509 = vmatprep.subr.bf16.mxu0 0
      %4510 = vmatpush2.bf16.xpose.msra.mxu0 0
      %4511 = vmatprep.mubr.bf16.mxu0 0
      %4512 = vmatmul.mubr.bf16.gmra.mxu0 %v4456
      %v4513 = vpop.f32.mrf.mxu0
      %v4514 = vadd.f32 0.0, %v4513
      %v4515 = vpop.f32.mrf.mxu0
      %v4516 = vpop.f32.mrf.mxu0
      %v4517 = vadd.f32 0.0, %v4516
      %v4518 = vpop.f32.mrf.mxu0
      %4519 = vmatprep.mubr.bf16.mxu0 0
      %4520 = vmatmul.mubr.bf16.gmra.mxu0 %v4459
      %v4521 = vpop.f32.mrf.mxu0
      %v4522 = vadd.f32 0.0, %v4521
      %v4523 = vpop.f32.mrf.mxu0
      %v4524 = vpop.f32.mrf.mxu0
      %v4525 = vadd.f32 0.0, %v4524
      %v4526 = vpop.f32.mrf.mxu0
      %4527 = vmatprep.mubr.bf16.mxu0 0
      %4528 = vmatmul.mubr.bf16.gmra.mxu0 %v4462
      %v4529 = vpop.f32.mrf.mxu0
      %v4530 = vadd.f32 0.0, %v4529
      %v4531 = vpop.f32.mrf.mxu0
      %v4532 = vpop.f32.mrf.mxu0
      %v4533 = vadd.f32 0.0, %v4532
      %v4534 = vpop.f32.mrf.mxu0
      %4535 = vmatprep.mubr.bf16.mxu0 0
      %4536 = vmatmul.mubr.bf16.gmra.mxu0 %v4465
      %v4537 = vpop.f32.mrf.mxu0
      %v4538 = vadd.f32 0.0, %v4537
      %v4539 = vpop.f32.mrf.mxu0
      %v4540 = vpop.f32.mrf.mxu0
      %v4541 = vadd.f32 0.0, %v4540
      %v4542 = vpop.f32.mrf.mxu0
      %4543 = vdwg.mxu0
      %v4544 = vmul.f32 %v4514, 0.4472136
      %v4545 = vmul.f32 %v4517, 0.4472136
      %v4546 = vmul.f32 %v4522, 0.4472136
      %v4547 = vmul.f32 %v4525, 0.4472136
      %v4548 = vmul.f32 %v4530, 0.4472136
      %v4549 = vmul.f32 %v4533, 0.4472136
      %v4550 = vmul.f32 %v4538, 0.4472136
      %v4551 = vmul.f32 %v4541, 0.4472136
      %v4552 = vsel %vm1173, %v4544, -inf
      %4553 = vmax.xlane.f32.xlu0 %v4552
      %v4554 = vpop.xlane.xlu0 %4553
      %v4555 = vsel %vm1173, %v4545, -inf
      %4556 = vmax.xlane.f32.xlu0 %v4555
      %v4557 = vpop.xlane.xlu0 %4556
      %v4558 = vsel %vm1173, %v4546, -inf
      %4559 = vmax.xlane.f32.xlu0 %v4558
      %v4560 = vpop.xlane.xlu0 %4559
      %v4561 = vsel %vm1173, %v4547, -inf
      %4562 = vmax.xlane.f32.xlu0 %v4561
      %v4563 = vpop.xlane.xlu0 %4562
      %v4564 = vsel %vm1173, %v4548, -inf
      %4565 = vmax.xlane.f32.xlu0 %v4564
      %v4566 = vpop.xlane.xlu0 %4565
      %v4567 = vsel %vm1173, %v4549, -inf
      %4568 = vmax.xlane.f32.xlu0 %v4567
      %v4569 = vpop.xlane.xlu0 %4568
      %v4570 = vsel %vm1173, %v4550, -inf
      %4571 = vmax.xlane.f32.xlu0 %v4570
      %v4572 = vpop.xlane.xlu0 %4571
      %v4573 = vsel %vm1173, %v4551, -inf
      %4574 = vmax.xlane.f32.xlu0 %v4573
      %v4575 = vpop.xlane.xlu0 %4574
      %v4576 = vsub.f32 %v4544, %v4554
      %v4577 = vsub.f32 %v4545, %v4557
      %v4578 = vsub.f32 %v4546, %v4560
      %v4579 = vsub.f32 %v4547, %v4563
      %v4580 = vsub.f32 %v4548, %v4566
      %v4581 = vsub.f32 %v4549, %v4569
      %v4582 = vsub.f32 %v4550, %v4572
      %v4583 = vsub.f32 %v4551, %v4575
      %v4584 = vmul.f32 %v4576, 1.442695
      %v4585 = vpow.pop %v4584
      %v4586 = vmul.f32 %v4577, 1.442695
      %v4587 = vpow.pop %v4586
      %v4588 = vmul.f32 %v4578, 1.442695
      %v4589 = vpow.pop %v4588
      %v4590 = vmul.f32 %v4579, 1.442695
      %v4591 = vpow.pop %v4590
      %v4592 = vmul.f32 %v4580, 1.442695
      %v4593 = vpow.pop %v4592
      %v4594 = vmul.f32 %v4581, 1.442695
      %v4595 = vpow.pop %v4594
      %v4596 = vmul.f32 %v4582, 1.442695
      %v4597 = vpow.pop %v4596
      %v4598 = vmul.f32 %v4583, 1.442695
      %v4599 = vpow.pop %v4598
      %v4600 = vsel %vm1173, %v4585, 0.0
      %4601 = vadd.xlane.f32.xlu0 %v4600
      %v4602 = vpop.xlane.xlu0 %4601
      %v4603 = vsel %vm1173, %v4587, 0.0
      %4604 = vadd.xlane.f32.xlu0 %v4603
      %v4605 = vpop.xlane.xlu0 %4604
      %v4606 = vsel %vm1173, %v4589, 0.0
      %4607 = vadd.xlane.f32.xlu0 %v4606
      %v4608 = vpop.xlane.xlu0 %4607
      %v4609 = vsel %vm1173, %v4591, 0.0
      %4610 = vadd.xlane.f32.xlu0 %v4609
      %v4611 = vpop.xlane.xlu0 %4610
      %v4612 = vsel %vm1173, %v4593, 0.0
      %4613 = vadd.xlane.f32.xlu0 %v4612
      %v4614 = vpop.xlane.xlu0 %4613
      %v4615 = vsel %vm1173, %v4595, 0.0
      %4616 = vadd.xlane.f32.xlu0 %v4615
      %v4617 = vpop.xlane.xlu0 %4616
      %v4618 = vsel %vm1173, %v4597, 0.0
      %4619 = vadd.xlane.f32.xlu0 %v4618
      %v4620 = vpop.xlane.xlu0 %4619
      %v4621 = vsel %vm1173, %v4599, 0.0
      %4622 = vadd.xlane.f32.xlu0 %v4621
      %v4623 = vpop.xlane.xlu0 %4622
      %v4624 = vrcp.pop %v4602
      %v4625 = vrcp.pop %v4605
      %v4626 = vrcp.pop %v4608
      %v4627 = vrcp.pop %v4611
      %v4628 = vrcp.pop %v4614
      %v4629 = vrcp.pop %v4617
      %v4630 = vrcp.pop %v4620
      %v4631 = vrcp.pop %v4623
      %v4632 = vmul.f32 %v4585, %v4624
      %v4633 = vmul.f32 %v4587, %v4625
      %v4634 = vmul.f32 %v4589, %v4626
      %v4635 = vmul.f32 %v4591, %v4627
      %v4636 = vmul.f32 %v4593, %v4628
      %v4637 = vmul.f32 %v4595, %v4629
      %v4638 = vmul.f32 %v4597, %v4630
      %v4639 = vmul.f32 %v4599, %v4631
      %v4640 = vpack.c.bf16 %v4633, %v4632
      %v4641 = vpack.c.bf16 %v4635, %v4634
      %v4642 = vpack.c.bf16 %v4637, %v4636
      %v4643 = vpack.c.bf16 %v4639, %v4638
      %4644 = vrot.lane.b32.xlu0 %v3548, 53
      %v4645 = vpop.permute.xlu0 %4644
      %4646 = vrot.lane.b32.xlu0 %v3549, 53
      %v4647 = vpop.permute.xlu0 %4646
      %4648 = vrot.lane.b32.xlu0 %v3550, 53
      %v4649 = vpop.permute.xlu0 %4648
      %4650 = vrot.lane.b32.xlu0 %v3551, 53
      %v4651 = vpop.permute.xlu0 %4650
      %v4657 = vsel %vm1173, %v4640, 0
      %v4660 = vsel %vm1173, %v4641, 0
      %v4663 = vsel %vm1173, %v4642, 0
      %v4666 = vsel %vm1173, %v4643, 0
      %4668 = vmatprep.subr.bf16.mxu0 0
      %4669 = vmatpush1.bf16.msra.mxu0 0
      %4670 = vmatprep.subr.bf16.mxu0 0
      %4671 = vmatpush1.bf16.msra.mxu0 0
      %4672 = vmatprep.subr.bf16.mxu0 0
      %4673 = vmatpush1.bf16.msra.mxu0 0
      %4674 = vmatprep.subr.bf16.mxu0 0
      %4675 = vmatpush1.bf16.msra.mxu0 0
      %4676 = vmatprep.subr.bf16.mxu0 0
      %4677 = vmatpush1.bf16.msra.mxu0 %v4651
      %4678 = vmatprep.subr.bf16.mxu0 0
      %4679 = vmatpush1.bf16.msra.mxu0 %v4649
      %4680 = vmatprep.subr.bf16.mxu0 0
      %4681 = vmatpush1.bf16.msra.mxu0 %v4647
      %4682 = vmatprep.subr.bf16.mxu0 0
      %4683 = vmatpush1.bf16.msra.mxu0 %v4645
      %4684 = vmatprep.subr.bf16.mxu0 0
      %4685 = vmatpush2.bf16.msra.mxu0 0
      %4686 = vmatprep.subr.bf16.mxu0 0
      %4687 = vmatpush2.bf16.msra.mxu0 0
      %4688 = vmatprep.subr.bf16.mxu0 0
      %4689 = vmatpush2.bf16.msra.mxu0 0
      %4690 = vmatprep.subr.bf16.mxu0 0
      %4691 = vmatpush2.bf16.msra.mxu0 0
      %4692 = vmatprep.subr.bf16.mxu0 0
      %4693 = vmatpush2.bf16.msra.mxu0 0
      %4694 = vmatprep.subr.bf16.mxu0 0
      %4695 = vmatpush2.bf16.msra.mxu0 0
      %4696 = vmatprep.subr.bf16.mxu0 0
      %4697 = vmatpush2.bf16.msra.mxu0 0
      %4698 = vmatprep.subr.bf16.mxu0 0
      %4699 = vmatpush2.bf16.msra.mxu0 0
      %4700 = vmatprep.mubr.bf16.mxu0 0
      %4701 = vmatmul.mubr.bf16.gmra.mxu0 %v4657
      %v4702 = vpop.f32.mrf.mxu0
      %v4703 = vadd.f32 0.0, %v4702
      %v4704 = vpop.f32.mrf.mxu0
      %v4705 = vpop.f32.mrf.mxu0
      %v4706 = vadd.f32 0.0, %v4705
      %v4707 = vpop.f32.mrf.mxu0
      %4708 = vmatprep.mubr.bf16.mxu0 0
      %4709 = vmatmul.mubr.bf16.gmra.mxu0 %v4660
      %v4710 = vpop.f32.mrf.mxu0
      %v4711 = vadd.f32 0.0, %v4710
      %v4712 = vpop.f32.mrf.mxu0
      %v4713 = vpop.f32.mrf.mxu0
      %v4714 = vadd.f32 0.0, %v4713
      %v4715 = vpop.f32.mrf.mxu0
      %4716 = vmatprep.mubr.bf16.mxu0 0
      %4717 = vmatmul.mubr.bf16.gmra.mxu0 %v4663
      %v4718 = vpop.f32.mrf.mxu0
      %v4719 = vadd.f32 0.0, %v4718
      %v4720 = vpop.f32.mrf.mxu0
      %v4721 = vpop.f32.mrf.mxu0
      %v4722 = vadd.f32 0.0, %v4721
      %v4723 = vpop.f32.mrf.mxu0
      %4724 = vmatprep.mubr.bf16.mxu0 0
      %4725 = vmatmul.mubr.bf16.gmra.mxu0 %v4666
      %v4726 = vpop.f32.mrf.mxu0
      %v4727 = vadd.f32 0.0, %v4726
      %v4728 = vpop.f32.mrf.mxu0
      %v4729 = vpop.f32.mrf.mxu0
      %v4730 = vadd.f32 0.0, %v4729
      %v4731 = vpop.f32.mrf.mxu0
      %4732 = vdwg.mxu0
      %4741 = vrot.lane.b32.xlu0 %v4115, 5
      %v4742 = vpop.permute.xlu0 %4741
      %4743 = vrot.lane.b32.xlu0 %v4118, 5
      %v4744 = vpop.permute.xlu0 %4743
      %4745 = vrot.lane.b32.xlu0 %v4123, 5
      %v4746 = vpop.permute.xlu0 %4745
      %4747 = vrot.lane.b32.xlu0 %v4126, 5
      %v4748 = vpop.permute.xlu0 %4747
      %4749 = vrot.lane.b32.xlu0 %v4131, 5
      %v4750 = vpop.permute.xlu0 %4749
      %4751 = vrot.lane.b32.xlu0 %v4134, 5
      %v4752 = vpop.permute.xlu0 %4751
      %4753 = vrot.lane.b32.xlu0 %v4139, 5
      %v4754 = vpop.permute.xlu0 %4753
      %4755 = vrot.lane.b32.xlu0 %v4142, 5
      %v4756 = vpop.permute.xlu0 %4755
      %4773 = vrot.lane.b32.xlu0 %v4409, 10
      %v4774 = vpop.permute.xlu0 %4773
      %4775 = vrot.lane.b32.xlu0 %v4412, 10
      %v4776 = vpop.permute.xlu0 %4775
      %4777 = vrot.lane.b32.xlu0 %v4417, 10
      %v4778 = vpop.permute.xlu0 %4777
      %4779 = vrot.lane.b32.xlu0 %v4420, 10
      %v4780 = vpop.permute.xlu0 %4779
      %4781 = vrot.lane.b32.xlu0 %v4425, 10
      %v4782 = vpop.permute.xlu0 %4781
      %4783 = vrot.lane.b32.xlu0 %v4428, 10
      %v4784 = vpop.permute.xlu0 %4783
      %4785 = vrot.lane.b32.xlu0 %v4433, 10
      %v4786 = vpop.permute.xlu0 %4785
      %4787 = vrot.lane.b32.xlu0 %v4436, 10
      %v4788 = vpop.permute.xlu0 %4787
      %4805 = vrot.lane.b32.xlu0 %v4703, 15
      %v4806 = vpop.permute.xlu0 %4805
      %4807 = vrot.lane.b32.xlu0 %v4706, 15
      %v4808 = vpop.permute.xlu0 %4807
      %4809 = vrot.lane.b32.xlu0 %v4711, 15
      %v4810 = vpop.permute.xlu0 %4809
      %4811 = vrot.lane.b32.xlu0 %v4714, 15
      %v4812 = vpop.permute.xlu0 %4811
      %4813 = vrot.lane.b32.xlu0 %v4719, 15
      %v4814 = vpop.permute.xlu0 %4813
      %4815 = vrot.lane.b32.xlu0 %v4722, 15
      %v4816 = vpop.permute.xlu0 %4815
      %4817 = vrot.lane.b32.xlu0 %v4727, 15
      %v4818 = vpop.permute.xlu0 %4817
      %4819 = vrot.lane.b32.xlu0 %v4730, 15
      %v4820 = vpop.permute.xlu0 %4819
      %v4829 = vsel %vm3572, %v3821, %v4742
      %v4830 = vsel %vm3572, %v3824, %v4744
      %v4831 = vsel %vm3572, %v3829, %v4746
      %v4832 = vsel %vm3572, %v3832, %v4748
      %v4833 = vsel %vm3572, %v3837, %v4750
      %v4834 = vsel %vm3572, %v3840, %v4752
      %v4835 = vsel %vm3572, %v3845, %v4754
      %v4836 = vsel %vm3572, %v3848, %v4756
      %vm4837 = vcmask 80896
      %v4838 = vsel %vm4837, %v4829, %v4774
      %v4839 = vsel %vm4837, %v4830, %v4776
      %v4840 = vsel %vm4837, %v4831, %v4778
      %v4841 = vsel %vm4837, %v4832, %v4780
      %v4842 = vsel %vm4837, %v4833, %v4782
      %v4843 = vsel %vm4837, %v4834, %v4784
      %v4844 = vsel %vm4837, %v4835, %v4786
      %v4845 = vsel %vm4837, %v4836, %v4788
      %vm4846 = vcmask 121856
      %v4847 = vsel %vm4846, %v4838, %v4806
      %v4848 = vsel %vm4846, %v4839, %v4808
      %v4849 = vsel %vm4846, %v4840, %v4810
      %v4850 = vsel %vm4846, %v4841, %v4812
      %v4851 = vsel %vm4846, %v4842, %v4814
      %v4852 = vsel %vm4846, %v4843, %v4816
      %v4853 = vsel %vm4846, %v4844, %v4818
      %v4854 = vsel %vm4846, %v4845, %v4820
      %v4855 = vpack.c.bf16 %v4848, %v4847
      %v4856 = vpack.c.bf16 %v4850, %v4849
      %v4857 = vpack.c.bf16 %v4852, %v4851
      %v4858 = vpack.c.bf16 %v4854, %v4853
      %v4859 = vld [vmem:[%s11] sm:$0xf]
      %v4860 = vld [vmem:[%s11 + $0x4] sm:$0xf]
      %v4861 = vld [vmem:[%s11 + $0x8] sm:$0x3]
      %v4862 = vld [vmem:[%s12] sm:$0x1]
      %v4864 = vlaneseq
      %v4865 = vshrl.u32 %v4864, 7
      %v4866 = vsub.s32 0, %v4865
      %v4867 = vrot.slane %v4862, %v4866
      %v4872 = vunpack.c.l.b16 %v4859
      %v4873 = vunpack.c.l.b16 %v4860
      %v4874 = vunpack.c.l.b16 %v4861
      %v4875 = vpack.c.b16 %v4873, %v4872
      %v4876 = vpack.c.b16 %v4874, %v4874
      %v4879 = vsel %vm2835, %v4855, 0
      %v4882 = vsel %vm2835, %v4856, 0
      %v4885 = vsel %vm2835, %v4857, 0
      %v4888 = vsel %vm2835, %v4858, 0
      %v4891 = vsel %vm2844, %v4876, 0
      %4893 = vmatprep.subr.bf16.mxu0 0
      %4894 = vmatpush1.bf16.msra.mxu0 0
      %4895 = vmatprep.subr.bf16.mxu0 0
      %4896 = vmatpush1.bf16.msra.mxu0 0
      %4897 = vmatprep.subr.bf16.mxu0 0
      %4898 = vmatpush1.bf16.msra.mxu0 0
      %4899 = vmatprep.subr.bf16.mxu0 0
      %4900 = vmatpush1.bf16.msra.mxu0 0
      %4901 = vmatprep.subr.bf16.mxu0 0
      %4902 = vmatpush1.bf16.msra.mxu0 0
      %4903 = vmatprep.subr.bf16.mxu0 0
      %4904 = vmatpush1.bf16.msra.mxu0 0
      %4905 = vmatprep.subr.bf16.mxu0 0
      %4906 = vmatpush1.bf16.msra.mxu0 %v4891
      %4907 = vmatprep.subr.bf16.mxu0 0
      %4908 = vmatpush1.bf16.msra.mxu0 %v4875
      %4909 = vmatprep.subr.bf16.mxu0 0
      %4910 = vmatpush2.bf16.msra.mxu0 0
      %4911 = vmatprep.subr.bf16.mxu0 0
      %4912 = vmatpush2.bf16.msra.mxu0 0
      %4913 = vmatprep.subr.bf16.mxu0 0
      %4914 = vmatpush2.bf16.msra.mxu0 0
      %4915 = vmatprep.subr.bf16.mxu0 0
      %4916 = vmatpush2.bf16.msra.mxu0 0
      %4917 = vmatprep.subr.bf16.mxu0 0
      %4918 = vmatpush2.bf16.msra.mxu0 0
      %4919 = vmatprep.subr.bf16.mxu0 0
      %4920 = vmatpush2.bf16.msra.mxu0 0
      %4921 = vmatprep.subr.bf16.mxu0 0
      %4922 = vmatpush2.bf16.msra.mxu0 0
      %4923 = vmatprep.subr.bf16.mxu0 0
      %4924 = vmatpush2.bf16.msra.mxu0 0
      %4925 = vmatprep.mubr.bf16.mxu0 0
      %4926 = vmatmul.mubr.bf16.gmra.mxu0 %v4879
      %v4927 = vpop.f32.mrf.mxu0
      %v4928 = vadd.f32 %v4867, %v4927
      %v4929 = vpop.f32.mrf.mxu0
      %v4930 = vpop.f32.mrf.mxu0
      %v4931 = vadd.f32 %v4867, %v4930
      %v4932 = vpop.f32.mrf.mxu0
      %4933 = vmatprep.mubr.bf16.mxu0 0
      %4934 = vmatmul.mubr.bf16.gmra.mxu0 %v4882
      %v4935 = vpop.f32.mrf.mxu0
      %v4936 = vadd.f32 %v4867, %v4935
      %v4937 = vpop.f32.mrf.mxu0
      %v4938 = vpop.f32.mrf.mxu0
      %v4939 = vadd.f32 %v4867, %v4938
      %v4940 = vpop.f32.mrf.mxu0
      %4941 = vmatprep.mubr.bf16.mxu0 0
      %4942 = vmatmul.mubr.bf16.gmra.mxu0 %v4885
      %v4943 = vpop.f32.mrf.mxu0
      %v4944 = vadd.f32 %v4867, %v4943
      %v4945 = vpop.f32.mrf.mxu0
      %v4946 = vpop.f32.mrf.mxu0
      %v4947 = vadd.f32 %v4867, %v4946
      %v4948 = vpop.f32.mrf.mxu0
      %4949 = vmatprep.mubr.bf16.mxu0 0
      %4950 = vmatmul.mubr.bf16.gmra.mxu0 %v4888
      %v4951 = vpop.f32.mrf.mxu0
      %v4952 = vadd.f32 %v4867, %v4951
      %v4953 = vpop.f32.mrf.mxu0
      %v4954 = vpop.f32.mrf.mxu0
      %v4955 = vadd.f32 %v4867, %v4954
      %v4956 = vpop.f32.mrf.mxu0
      %4957 = vdwg.mxu0
      %v4958 = vadd.f32 %v3540, %v4928
      %v4959 = vadd.f32 %v3541, %v4931
      %v4960 = vadd.f32 %v3542, %v4936
      %v4961 = vadd.f32 %v3543, %v4939
      %v4962 = vadd.f32 %v3544, %v4944
      %v4963 = vadd.f32 %v3545, %v4947
      %v4964 = vadd.f32 %v3546, %v4952
      %v4965 = vadd.f32 %v3547, %v4955
      %v4966 = vpack.c.bf16 %v4959, %v4958
      %v4967 = vpack.c.bf16 %v4961, %v4960
      %v4968 = vpack.c.bf16 %v4963, %v4962
      %v4969 = vpack.c.bf16 %v4965, %v4964
      %4974 = vrot.lane.b32.xlu0 %v4966, 20
      %v4975 = vpop.permute.xlu0 %4974
      %4976 = vrot.lane.b32.xlu0 %v4967, 20
      %v4977 = vpop.permute.xlu0 %4976
      %4978 = vrot.lane.b32.xlu0 %v4968, 20
      %v4979 = vpop.permute.xlu0 %4978
      %4980 = vrot.lane.b32.xlu0 %v4969, 20
      %v4981 = vpop.permute.xlu0 %4980
      %v4983 = vsel %vm2835, %v2809, %v4975
      %v4985 = vsel %vm2835, %v2811, %v4977
      %v4987 = vsel %vm2835, %v2813, %v4979
      %v4989 = vsel %vm2835, %v2815, %v4981
      %v4990 = vld [vmem:[%s13] sm:$0xf]
      %v4991 = vld [vmem:[%s13 + $0x4] sm:$0xf]
      %v4992 = vld [vmem:[%s13 + $0x8] sm:$0xf]
      %v4993 = vld [vmem:[%s14] sm:$0x1]
      %v4995 = vlaneseq
      %v4996 = vshrl.u32 %v4995, 7
      %v4997 = vsub.s32 0, %v4996
      %v4998 = vrot.slane %v4993, %v4997
      %v5003 = vunpack.c.l.b16 %v4990
      %v5004 = vunpack.c.l.b16 %v4991
      %v5005 = vunpack.c.l.b16 %v4992
      %v5006 = vpack.c.b16 %v5004, %v5003
      %v5007 = vpack.c.b16 %v5005, %v5005
      %vm5009 = vcmask 195584
      %v5010 = vsel %vm5009, %v4983, 0
      %v5012 = vsel %vm5009, %v4985, 0
      %v5014 = vsel %vm5009, %v4987, 0
      %v5016 = vsel %vm5009, %v4989, 0
      %vm5018 = vcmask 1043456
      %v5020 = vsel %vm5018, %v5007, 0
      %5022 = vmatprep.subr.bf16.mxu0 0
      %5023 = vmatpush1.bf16.msra.mxu0 0
      %5024 = vmatprep.subr.bf16.mxu0 0
      %5025 = vmatpush1.bf16.msra.mxu0 0
      %5026 = vmatprep.subr.bf16.mxu0 0
      %5027 = vmatpush1.bf16.msra.mxu0 0
      %5028 = vmatprep.subr.bf16.mxu0 0
      %5029 = vmatpush1.bf16.msra.mxu0 0
      %5030 = vmatprep.subr.bf16.mxu0 0
      %5031 = vmatpush1.bf16.msra.mxu0 0
      %5032 = vmatprep.subr.bf16.mxu0 0
      %5033 = vmatpush1.bf16.msra.mxu0 0
      %5034 = vmatprep.subr.bf16.mxu0 0
      %5035 = vmatpush1.bf16.msra.mxu0 %v5020
      %5036 = vmatprep.subr.bf16.mxu0 0
      %5037 = vmatpush1.bf16.msra.mxu0 %v5006
      %5038 = vmatprep.subr.bf16.mxu0 0
      %5039 = vmatpush2.bf16.msra.mxu0 0
      %5040 = vmatprep.subr.bf16.mxu0 0
      %5041 = vmatpush2.bf16.msra.mxu0 0
      %5042 = vmatprep.subr.bf16.mxu0 0
      %5043 = vmatpush2.bf16.msra.mxu0 0
      %5044 = vmatprep.subr.bf16.mxu0 0
      %5045 = vmatpush2.bf16.msra.mxu0 0
      %5046 = vmatprep.subr.bf16.mxu0 0
      %5047 = vmatpush2.bf16.msra.mxu0 0
      %5048 = vmatprep.subr.bf16.mxu0 0
      %5049 = vmatpush2.bf16.msra.mxu0 0
      %5050 = vmatprep.subr.bf16.mxu0 0
      %5051 = vmatpush2.bf16.msra.mxu0 0
      %5052 = vmatprep.subr.bf16.mxu0 0
      %5053 = vmatpush2.bf16.msra.mxu0 0
      %5054 = vmatprep.mubr.bf16.mxu0 0
      %5055 = vmatmul.mubr.bf16.gmra.mxu0 %v5010
      %v5056 = vpop.f32.mrf.mxu0
      %v5057 = vadd.f32 %v4998, %v5056
      %v5058 = vpop.f32.mrf.mxu0
      %v5059 = vpop.f32.mrf.mxu0
      %v5060 = vadd.f32 %v4998, %v5059
      %v5061 = vpop.f32.mrf.mxu0
      %5062 = vmatprep.mubr.bf16.mxu0 0
      %5063 = vmatmul.mubr.bf16.gmra.mxu0 %v5012
      %v5064 = vpop.f32.mrf.mxu0
      %v5065 = vadd.f32 %v4998, %v5064
      %v5066 = vpop.f32.mrf.mxu0
      %v5067 = vpop.f32.mrf.mxu0
      %v5068 = vadd.f32 %v4998, %v5067
      %v5069 = vpop.f32.mrf.mxu0
      %5070 = vmatprep.mubr.bf16.mxu0 0
      %5071 = vmatmul.mubr.bf16.gmra.mxu0 %v5014
      %v5072 = vpop.f32.mrf.mxu0
      %v5073 = vadd.f32 %v4998, %v5072
      %v5074 = vpop.f32.mrf.mxu0
      %v5075 = vpop.f32.mrf.mxu0
      %v5076 = vadd.f32 %v4998, %v5075
      %v5077 = vpop.f32.mrf.mxu0
      %5078 = vmatprep.mubr.bf16.mxu0 0
      %5079 = vmatmul.mubr.bf16.gmra.mxu0 %v5016
      %v5080 = vpop.f32.mrf.mxu0
      %v5081 = vadd.f32 %v4998, %v5080
      %v5082 = vpop.f32.mrf.mxu0
      %v5083 = vpop.f32.mrf.mxu0
      %v5084 = vadd.f32 %v4998, %v5083
      %v5085 = vpop.f32.mrf.mxu0
      %5086 = vdwg.mxu0
      %5087 = vst.msk [vmem:[%s494] sm:$0xff] %vm628, %v5057
      %5088 = vst.msk [vmem:[%s494 + $0x8] sm:$0xff] %vm628, %v5060
      %5089 = vst.msk [vmem:[%s494 + $0x10] sm:$0xff] %vm628, %v5065
      %5090 = vst.msk [vmem:[%s494 + $0x18] sm:$0xff] %vm628, %v5068
      %5091 = vst.msk [vmem:[%s494 + $0x20] sm:$0xff] %vm628, %v5073
      %5092 = vst.msk [vmem:[%s494 + $0x28] sm:$0xff] %vm628, %v5076
      %5093 = vst.msk [vmem:[%s494 + $0x30] sm:$0xff] %vm628, %v5081
      %5094 = vst.msk [vmem:[%s494 + $0x38] sm:$0xff] %vm628, %v5084
      %p5095 = scmp.lt.s32.totalorder %s26, 1
      %s5096 = scalar_select %p5095, %s26, 1
      %s5097 = smul.addr %s5096, 8
      %s5098 = smul.addr %s5097, 8
      %s5099 = scalar_lea.vmem %s15, %s5098
      // Predicated region
      $region81: #{dense_net_multihead_forward.5} parent=79 // pred_check
        %p5100 = pneg %p364
      $region82: #{dense_net_multihead_forward.5} parent=79 // pred_check_branch
        %5102 = sbr.rel (%p5100) target = $region84
      $region83: #{dense_net_multihead_forward.5} parent=79 // pred_region
        _
      $region84: #{dense_net_multihead_forward.5} parent=79 // pred_fallthru
        _
    $region80: #{dense_net_multihead_forward.5} parent=5 // pred_fallthru
      _
    %p5103 = scmp.le.s32.totalorder 2, %s21
    // Predicated region
    $region85: #{dense_net_multihead_forward.5} parent=5 // pred_check
      %p5104 = pneg %p5103
    $region86: #{dense_net_multihead_forward.5} parent=5 // pred_check_branch
      %5106 = sbr.rel (%p5104) target = $region88
    $region87: #{dense_net_multihead_forward.5} parent=5 // pred_region
      %s5107 = ssub.s32 %s21, 2
      // Predicated region
      $region89: #{dense_net_multihead_forward.5} parent=87 // pred_check
        %p5108 = pneg %p370
      $region90: #{dense_net_multihead_forward.5} parent=87 // pred_check_branch
        %5110 = sbr.rel (%p5108) target = $region92
      $region91: #{dense_net_multihead_forward.5} parent=87 // pred_region
        %p5111 = scmp.lt.s32.totalorder %s27, 1
        %s5112 = scalar_select %p5111, %s27, 1
        %s5113 = smul.addr %s5112, 8
        %s5114 = smul.addr %s5113, 8
        %s5115 = scalar_lea.vmem %s15, %s5114
      $region92: #{dense_net_multihead_forward.5} parent=87 // pred_fallthru
        _
    $region88: #{dense_net_multihead_forward.5} parent=5 // pred_fallthru
      _
  $region6: #{dense_net_multihead_forward.5} parent=0 // loop_footer
    %s25 = sadd.s32 1, %s21
  $region7: #{dense_net_multihead_forward.5} parent=0 // loop_footer_branch
    %20 = sbr.rel target = $region3
  $region8: #{dense_net_multihead_forward.5} parent=0 // loop_exit
    _

</llo_original>
